<compile_context>
chip_gen: v7x
topology: tpu7x:2x2x1
jax: 0.10.0
libtpu: 0.0.40
codegen_flags: <defaults>
</compile_context>

<pallas_src>
import functools

import jax
import jax.numpy as jnp
from jax.experimental import pallas as pl
from jax.experimental.pallas import tpu as pltpu


# Large finite negative: behaves exactly like -inf for partially-masked rows
# (exp underflows to 0) but avoids NaN when an entire key row is padded.
MASK_NEG = -1e30


# --------------------------------------------------------------------------------------
# Kernel
# --------------------------------------------------------------------------------------
def _mab_kernel(qa_ref, ka_ref, mask_ref,
                wq2_ref, wkv_ref, woa_ref, wfo_ref, btab_ref,
                o_ref, *, num_heads, block_b, seq_q, seq_k, ln,
                approx_softmax=True, eps=1e-5):
    f32 = jnp.float32
    E = woa_ref.shape[0]
    H = num_heads
    Dh = E // H
    BB, Sq, Sk = block_b, seq_q, seq_k

    Qa = qa_ref[0]          # (BB*Sq, dQ+1)  ones column carries the projection biases
    Ka = ka_ref[0]          # (BB*Sk, dK+1)
    mask = mask_ref[0]      # (BB, Sk)       additive key-padding mask {0, MASK_NEG}

    # ---- slab projections: each is ONE 2-D MXU matmul over the whole batch block ----
    Qp = jnp.dot(Qa, wq2_ref[0], preferred_element_type=f32)  # fc_q (kept for residual)
    q = jnp.dot(Qa, wq2_ref[1], preferred_element_type=f32)   # fused fc_q->in_proj_q, 1/sqrt(Dh) folded in
    k = jnp.dot(Ka, wkv_ref[0], preferred_element_type=f32)   # fused fc_k->in_proj_k
    v = jnp.dot(Ka, wkv_ref[1], preferred_element_type=f32)   # fused fc_v->in_proj_v

    q3 = q.reshape(BB, Sq, E)
    k3 = k.reshape(BB, Sk, E)
    v3 = v.reshape(BB, Sk, E)

    # ---- attention core: merged (H*BB) batch — no per-head Python loop ----
    qh = jnp.concatenate([q3[:, :, h * Dh:(h + 1) * Dh] for h in range(H)], axis=0)
    kh = jnp.concatenate([k3[:, :, h * Dh:(h + 1) * Dh] for h in range(H)], axis=0)
    vh = jnp.concatenate([v3[:, :, h * Dh:(h + 1) * Dh] for h in range(H)], axis=0)

    # additive mask, broadcast exactly once (not once per head)
    mask_hb = jnp.concatenate([mask] * H, axis=0)[:, None, :]            # (H*BB, 1, Sk)

    s = jnp.einsum('bqd,bkd->bqk', qh, kh, preferred_element_type=f32) + mask_hb
    s = s - jnp.max(s, axis=-1, keepdims=True)
    p = jnp.exp(s)
    denom = jnp.sum(p, axis=-1, keepdims=True)
    if approx_softmax:
        p = p * pl.reciprocal(denom, approx=True)   # EUP slot; ~1e-4-level approximation
    else:
        p = p / denom
    pv = jnp.einsum('bqk,bkd->bqd', p, vh, preferred_element_type=f32)   # (H*BB, Sq, Dh)

    # merge heads back onto lanes -> ONE full-E out-projection (contraction E, not Dh)
    attn_in = jnp.concatenate([pv[h * BB:(h + 1) * BB] for h in range(H)], axis=-1)
    attn = jnp.dot(attn_in.reshape(BB * Sq, E), woa_ref[...],
                   preferred_element_type=f32) + btab_ref[0]             # + boa

    Hh = Qp + attn
    if ln:
        mu = jnp.mean(Hh, axis=-1, keepdims=True)
        var = jnp.mean((Hh - mu) ** 2, axis=-1, keepdims=True)
        Hh = (Hh - mu) * jax.lax.rsqrt(var + eps) * btab_ref[2] + btab_ref[3]

    O = Hh + jnp.maximum(
        jnp.dot(Hh, wfo_ref[...], preferred_element_type=f32) + btab_ref[1], 0.0)
    if ln:
        mu = jnp.mean(O, axis=-1, keepdims=True)
        var = jnp.mean((O - mu) ** 2, axis=-1, keepdims=True)
        O = (O - mu) * jax.lax.rsqrt(var + eps) * btab_ref[4] + btab_ref[5]

    # TODO(synk): a lane-dense (multiple-of-128 last dim) output slab would avoid E=32
    # masked partial stores, but requires a (BB*Sq, E) -> (., 128k) relayout that is not
    # guaranteed to lower on all Mosaic versions; left as-is (output here is tiny).
    o_ref[0] = O.astype(o_ref.dtype)


# --------------------------------------------------------------------------------------
# Host-side parameter fusion / block sizing
# --------------------------------------------------------------------------------------
def _fuse_params(params, num_heads, dtype=jnp.float32):
    """Static weight fusion & stacking (zero runtime cost inside the kernel)."""
    E = params['wq'].shape[1]
    Dh = E // num_heads
    scale = 1.0 / (Dh ** 0.5)

    def aug(w, b):
        # fold the bias into an extra weight row; the slabs carry a matching ones column
        return jnp.concatenate([w, b], axis=0)

    wq_res = aug(params['wq'], params['bq'])                                    # (dQ+1, E)
    wq_att = aug(params['wq'] @ params['wiq'],
                 params['bq'] @ params['wiq'] + params['biq']) * scale          # fc_q->in_proj_q (scaled)
    wk_att = aug(params['wk'] @ params['wik'],
                 params['bk'] @ params['wik'] + params['bik'])                  # fc_k->in_proj_k
    wv_att = aug(params['wv'] @ params['wiv'],
                 params['bv'] @ params['wiv'] + params['biv'])                  # fc_v->in_proj_v

    wq2 = jnp.stack([wq_res, wq_att], axis=0).astype(dtype)                     # (2, dQ+1, E)
    wkv = jnp.stack([wk_att, wv_att], axis=0).astype(dtype)                     # (2, dK+1, E)
    btab = jnp.stack([params['boa'], params['bfo'], params['g0'],
                      params['beta0'], params['g1'], params['beta1']],
                     axis=0).astype(jnp.float32)                                # (6, 1, E)
    return wq2, wkv, params['woa'].astype(dtype), params['wfo'].astype(dtype), btab


def _est_block_vmem_bytes(block_b, Sq, Sk, dQa, dKa, E, H):
    """Rough VMEM working-set estimate for one batch block (f32, incl. tile padding)."""
    slabs = 2 * (Sq * dQa + Sk * dKa + Sq * E + Sk)        # double-buffered in/out slabs
    inter = 2 * Sq * E + 2 * Sk * E + 3 * H * Sq * Sk + 4 * Sq * E
    return 4 * 4 * block_b * (slabs + inter)               # 4 B/elem, ~4x (8,128) padding


def _pick_block_b(B, Sq, Sk, dQa, dKa, E, H, vmem_budget_bytes=24 << 20):
    """Largest divisor of B whose working set fits the VMEM budget.

    No ">= 2 grid steps" heuristic: v5e/v6e have one TensorCore (the grid is a serial
    loop) and each extra grid step costs ~0.35us of fixed overhead, which dominates at
    these sizes.  The default budget stays comfortably inside v7x's smaller VMEM.
    """
    best = 1
    for d in range(1, B + 1):
        if B % d == 0 and _est_block_vmem_bytes(d, Sq, Sk, dQa, dKa, E, H) <= vmem_budget_bytes:
            best = d
    return best


# --------------------------------------------------------------------------------------
# Wrapper
# --------------------------------------------------------------------------------------
def mab_forward(Q, K, params, num_heads, ln=False, block_b=None,
                slab_dtype=jnp.float32, approx_softmax=True):
    B, Sq, dQ = Q.shape
    Bk, Sk, dK = K.shape
    assert Bk == B
    E = params['wq'].shape[1]
    assert E % num_heads == 0

    if block_b is None:
        block_b = _pick_block_b(B, Sq, Sk, dQ + 1, dK + 1, E, num_heads)
    assert B % block_b == 0
    grid_b = B // block_b

    wq2, wkv, woa, wfo, btab = _fuse_params(params, num_heads, dtype=slab_dtype)

    # Key-padding additive mask from the RAW K (== torch.where(K[i]==0,...)[:, 0]).
    # Large finite negative instead of -inf so fully-padded rows cannot produce NaN.
    mask = jnp.where(K[:, :, 0] == 0.0, MASK_NEG, 0.0).astype(jnp.float32)
    mask = mask.reshape(grid_b, block_b, Sk)

    # Pre-flattened, ones-augmented slabs (the ones column carries the projection biases).
    # slab_dtype=bfloat16 halves HBM->VMEM bytes on v6e/v7x; accumulation stays f32.
    Qa = jnp.concatenate([Q.reshape(B * Sq, dQ), jnp.ones((B * Sq, 1), Q.dtype)], axis=1)
    Qa = Qa.astype(slab_dtype).reshape(grid_b, block_b * Sq, dQ + 1)
    Ka = jnp.concatenate([K.reshape(B * Sk, dK), jnp.ones((B * Sk, 1), K.dtype)], axis=1)
    Ka = Ka.astype(slab_dtype).reshape(grid_b, block_b * Sk, dK + 1)

    in_specs = [
        pl.BlockSpec((1, block_b * Sq, dQ + 1), lambda b: (b, 0, 0)),
        pl.BlockSpec((1, block_b * Sk, dK + 1), lambda b: (b, 0, 0)),
        pl.BlockSpec((1, block_b, Sk), lambda b: (b, 0, 0)),
        pl.BlockSpec(wq2.shape, lambda b: (0, 0, 0)),
        pl.BlockSpec(wkv.shape, lambda b: (0, 0, 0)),
        pl.BlockSpec(woa.shape, lambda b: (0, 0)),
        pl.BlockSpec(wfo.shape, lambda b: (0, 0)),
        pl.BlockSpec(btab.shape, lambda b: (0, 0, 0)),
    ]

    # Advisory cost estimate so XLA schedules the custom call sensibly.
    flops = 2 * B * (2 * Sq * (dQ + 1) * E + 2 * Sk * (dK + 1) * E
                     + 2 * Sq * Sk * E + 2 * Sq * E * E)
    transcendentals = B * num_heads * Sq * (Sk + 1) + (2 * B * Sq if ln else 0)
    bytes_accessed = (Qa.size * Qa.dtype.itemsize + Ka.size * Ka.dtype.itemsize
                      + mask.size * 4 + wq2.size * wq2.dtype.itemsize
                      + wkv.size * wkv.dtype.itemsize + woa.size * woa.dtype.itemsize
                      + wfo.size * wfo.dtype.itemsize + btab.size * 4 + B * Sq * E * 4)
    cost = pl.CostEstimate(flops=int(flops), transcendentals=int(transcendentals),
                           bytes_accessed=int(bytes_accessed))

    # Only raise the scoped-VMEM limit when the chosen block actually needs it.
    cp_kwargs = dict(dimension_semantics=("parallel",))
    est_vmem = _est_block_vmem_bytes(block_b, Sq, Sk, dQ + 1, dK + 1, E, num_heads)
    if est_vmem > (12 << 20):
        cp_kwargs["vmem_limit_bytes"] = int(min(64 << 20, 2 * est_vmem))

    kernel = functools.partial(_mab_kernel, num_heads=num_heads, block_b=block_b,
                               seq_q=Sq, seq_k=Sk, ln=ln, approx_softmax=approx_softmax)

    out = pl.pallas_call(
        kernel,
        out_shape=jax.ShapeDtypeStruct((grid_b, block_b * Sq, E), jnp.float32),
        grid=(grid_b,),
        in_specs=in_specs,
        out_specs=pl.BlockSpec((1, block_b * Sq, E), lambda b: (b, 0, 0)),
        compiler_params=pltpu.CompilerParams(**cp_kwargs),
        cost_estimate=cost,
    )(Qa, Ka, mask, wq2, wkv, woa, wfo, btab)
    return out.reshape(B, Sq, E)


# --------------------------------------------------------------------------------------
# Pure-JAX reference (mirrors PyTorch MAB.forward, unfused) + params
# --------------------------------------------------------------------------------------
def mab_reference(Q, K, params, num_heads, ln=False, eps=1e-5):
    Qp = Q @ params['wq'] + params['bq']
    pad = (K[..., 0] == 0.0)                                   # (B, Sk), from raw K
    Kp = K @ params['wk'] + params['bk']
    Vp = K @ params['wv'] + params['bv']
    q = Qp @ params['wiq'] + params['biq']
    k = Kp @ params['wik'] + params['bik']
    v = Vp @ params['wiv'] + params['biv']
    B, Sq, E = q.shape
    H = num_heads
    Dh = E // H
    qh = q.reshape(B, Sq, H, Dh).transpose(0, 2, 1, 3)
    kh = k.reshape(B, -1, H, Dh).transpose(0, 2, 1, 3)
    vh = v.reshape(B, -1, H, Dh).transpose(0, 2, 1, 3)
    s = jnp.einsum('bhqd,bhkd->bhqk', qh, kh) / jnp.sqrt(Dh)
    s = s + jnp.where(pad, -jnp.inf, 0.0)[:, None, None, :]
    p = jax.nn.softmax(s, axis=-1)
    a = jnp.einsum('bhqk,bhkd->bhqd', p, vh).transpose(0, 2, 1, 3).reshape(B, Sq, E)
    a = a @ params['woa'] + params['boa']
    Hh = Qp + a
    if ln:
        mu = Hh.mean(-1, keepdims=True)
        var = ((Hh - mu) ** 2).mean(-1, keepdims=True)
        Hh = (Hh - mu) * jax.lax.rsqrt(var + eps) * params['g0'] + params['beta0']
    O = Hh + jax.nn.relu(Hh @ params['wfo'] + params['bfo'])
    if ln:
        mu = O.mean(-1, keepdims=True)
        var = ((O - mu) ** 2).mean(-1, keepdims=True)
        O = (O - mu) * jax.lax.rsqrt(var + eps) * params['g1'] + params['beta1']
    return O


def init_params(key, dim_Q, dim_K, dim_V):
    ks = jax.random.split(key, 16)
    scl = 0.1

    def w(k, shape):
        return (scl * jax.random.normal(k, shape)).astype(jnp.float32)

    return {
        'wq': w(ks[0], (dim_Q, dim_V)), 'bq': w(ks[1], (1, dim_V)),
        'wk': w(ks[2], (dim_K, dim_V)), 'bk': w(ks[3], (1, dim_V)),
        'wv': w(ks[4], (dim_K, dim_V)), 'bv': w(ks[5], (1, dim_V)),
        'wiq': w(ks[6], (dim_V, dim_V)), 'biq': w(ks[7], (1, dim_V)),
        'wik': w(ks[8], (dim_V, dim_V)), 'bik': w(ks[9], (1, dim_V)),
        'wiv': w(ks[10], (dim_V, dim_V)), 'biv': w(ks[11], (1, dim_V)),
        'woa': w(ks[12], (dim_V, dim_V)), 'boa': w(ks[13], (1, dim_V)),
        'wfo': w(ks[14], (dim_V, dim_V)), 'bfo': w(ks[15], (1, dim_V)),
        'g0': jnp.ones((1, dim_V), jnp.float32), 'beta0': jnp.zeros((1, dim_V), jnp.float32),
        'g1': jnp.ones((1, dim_V), jnp.float32), 'beta1': jnp.zeros((1, dim_V), jnp.float32),
    }


if __name__ == "__main__":
    B, Sq, Sk = 8, 8, 8
    dim_Q, dim_K, dim_V, num_heads = 16, 16, 32, 4

    key = jax.random.PRNGKey(0)
    kq, kk, kp = jax.random.split(key, 3)
    Q = jax.random.normal(kq, (B, Sq, dim_Q), jnp.float32)
    K = jax.random.normal(kk, (B, Sk, dim_K), jnp.float32)
    # mark a couple of key positions as "padded" (first feature == 0) to exercise the mask
    K = K.at[0, 3, 0].set(0.0)
    K = K.at[5, 1, 0].set(0.0)

    params = init_params(kp, dim_Q, dim_K, dim_V)

    for ln in (False, True):   # module default is ln=False; also validate the LN path
        out = jax.block_until_ready(mab_forward(Q, K, params, num_heads, ln=ln))
        ref = mab_reference(Q, K, params, num_heads, ln=ln)
        assert out.shape == (B, Sq, dim_V)
        err = float(jnp.max(jnp.abs(out - ref)))
        assert jnp.allclose(out, ref, atol=2e-3, rtol=2e-3), f"ln={ln} max err {err}"

    print("KERNEL_OK")
</pallas_src>

<mosaic_0001>
module attributes {stable_mosaic.version = 11 : i64} {
  func.func @_mab_kernel(%arg0: i32, %arg1: memref<1x64x17xf32, #tpu.memory_space<vmem>>, %arg2: memref<1x64x17xf32, #tpu.memory_space<vmem>>, %arg3: memref<1x8x8xf32, #tpu.memory_space<vmem>>, %arg4: memref<2x17x32xf32, #tpu.memory_space<vmem>>, %arg5: memref<2x17x32xf32, #tpu.memory_space<vmem>>, %arg6: memref<32x32xf32, #tpu.memory_space<vmem>>, %arg7: memref<32x32xf32, #tpu.memory_space<vmem>>, %arg8: memref<6x1x32xf32, #tpu.memory_space<vmem>>, %arg9: memref<1x64x32xf32, #tpu.memory_space<vmem>>) attributes {dimension_semantics = [#tpu.dimension_semantics<parallel>], iteration_bounds = array<i64: 1>, scalar_prefetch = 0 : i64, scratch_operands = 0 : i64, tpu.core_type = #tpu.core_type<tc>, window_params = [{transform_indices = @transform_0, window_bounds = array<i64: 1, 64, 17>}, {transform_indices = @transform_1, window_bounds = array<i64: 1, 64, 17>}, {transform_indices = @transform_2, window_bounds = array<i64: 1, 8, 8>}, {pipeline_mode = #tpu.pipeline_mode<synchronous>, transform_indices = @transform_3, window_bounds = array<i64: 2, 17, 32>}, {pipeline_mode = #tpu.pipeline_mode<synchronous>, transform_indices = @transform_4, window_bounds = array<i64: 2, 17, 32>}, {pipeline_mode = #tpu.pipeline_mode<synchronous>, transform_indices = @transform_5, window_bounds = array<i64: 32, 32>}, {pipeline_mode = #tpu.pipeline_mode<synchronous>, transform_indices = @transform_6, window_bounds = array<i64: 32, 32>}, {pipeline_mode = #tpu.pipeline_mode<synchronous>, transform_indices = @transform_7, window_bounds = array<i64: 6, 1, 32>}, {transform_indices = @transform_8, window_bounds = array<i64: 1, 64, 32>}]} {
    %c0 = arith.constant 0 : index
    %c0_0 = arith.constant 0 : index
    %c0_1 = arith.constant 0 : index
    %0 = vector.load %arg1[%c0, %c0_0, %c0_1] : memref<1x64x17xf32, #tpu.memory_space<vmem>>, vector<1x64x17xf32>
    %1 = vector.shape_cast %0 : vector<1x64x17xf32> to vector<64x17xf32>
    %c0_2 = arith.constant 0 : index
    %c0_3 = arith.constant 0 : index
    %c0_4 = arith.constant 0 : index
    %2 = vector.load %arg2[%c0_2, %c0_3, %c0_4] : memref<1x64x17xf32, #tpu.memory_space<vmem>>, vector<1x64x17xf32>
    %3 = vector.shape_cast %2 : vector<1x64x17xf32> to vector<64x17xf32>
    %c0_5 = arith.constant 0 : index
    %c0_6 = arith.constant 0 : index
    %c0_7 = arith.constant 0 : index
    %4 = vector.load %arg3[%c0_5, %c0_6, %c0_7] : memref<1x8x8xf32, #tpu.memory_space<vmem>>, vector<1x8x8xf32>
    %5 = vector.shape_cast %4 : vector<1x8x8xf32> to vector<8x8xf32>
    %c0_8 = arith.constant 0 : index
    %c0_9 = arith.constant 0 : index
    %c0_10 = arith.constant 0 : index
    %6 = vector.load %arg4[%c0_8, %c0_9, %c0_10] : memref<2x17x32xf32, #tpu.memory_space<vmem>>, vector<1x17x32xf32>
    %7 = vector.shape_cast %6 : vector<1x17x32xf32> to vector<17x32xf32>
    %cst = arith.constant dense<0.000000e+00> : vector<64x32xf32>
    %8 = tpu.matmul %1, %7, %cst {dimension_numbers = #tpu.dot_dimension_numbers<[1], [0], [0], [1], [0, 0, 1, 1], [], []>} : vector<64x17xf32>, vector<17x32xf32>, vector<64x32xf32> -> vector<64x32xf32>
    %c1 = arith.constant 1 : index
    %c0_11 = arith.constant 0 : index
    %c0_12 = arith.constant 0 : index
    %9 = vector.load %arg4[%c1, %c0_11, %c0_12] : memref<2x17x32xf32, #tpu.memory_space<vmem>>, vector<1x17x32xf32>
    %10 = vector.shape_cast %9 : vector<1x17x32xf32> to vector<17x32xf32>
    %cst_13 = arith.constant dense<0.000000e+00> : vector<64x32xf32>
    %11 = tpu.matmul %1, %10, %cst_13 {dimension_numbers = #tpu.dot_dimension_numbers<[1], [0], [0], [1], [0, 0, 1, 1], [], []>} : vector<64x17xf32>, vector<17x32xf32>, vector<64x32xf32> -> vector<64x32xf32>
    %c0_14 = arith.constant 0 : index
    %c0_15 = arith.constant 0 : index
    %c0_16 = arith.constant 0 : index
    %12 = vector.load %arg5[%c0_14, %c0_15, %c0_16] : memref<2x17x32xf32, #tpu.memory_space<vmem>>, vector<1x17x32xf32>
    %13 = vector.shape_cast %12 : vector<1x17x32xf32> to vector<17x32xf32>
    %cst_17 = arith.constant dense<0.000000e+00> : vector<64x32xf32>
    %14 = tpu.matmul %3, %13, %cst_17 {dimension_numbers = #tpu.dot_dimension_numbers<[1], [0], [0], [1], [0, 0, 1, 1], [], []>} : vector<64x17xf32>, vector<17x32xf32>, vector<64x32xf32> -> vector<64x32xf32>
    %c1_18 = arith.constant 1 : index
    %c0_19 = arith.constant 0 : index
    %c0_20 = arith.constant 0 : index
    %15 = vector.load %arg5[%c1_18, %c0_19, %c0_20] : memref<2x17x32xf32, #tpu.memory_space<vmem>>, vector<1x17x32xf32>
    %16 = vector.shape_cast %15 : vector<1x17x32xf32> to vector<17x32xf32>
    %cst_21 = arith.constant dense<0.000000e+00> : vector<64x32xf32>
    %17 = tpu.matmul %3, %16, %cst_21 {dimension_numbers = #tpu.dot_dimension_numbers<[1], [0], [0], [1], [0, 0, 1, 1], [], []>} : vector<64x17xf32>, vector<17x32xf32>, vector<64x32xf32> -> vector<64x32xf32>
    %18 = vector.shape_cast %11 : vector<64x32xf32> to vector<8x8x32xf32>
    %19 = vector.shape_cast %14 : vector<64x32xf32> to vector<8x8x32xf32>
    %20 = vector.shape_cast %17 : vector<64x32xf32> to vector<8x8x32xf32>
    %21 = vector.extract_strided_slice %18 {offsets = [0, 0, 0], sizes = [8, 8, 8], strides = [1, 1, 1]} : vector<8x8x32xf32> to vector<8x8x8xf32>
    %22 = vector.extract_strided_slice %18 {offsets = [0, 0, 8], sizes = [8, 8, 8], strides = [1, 1, 1]} : vector<8x8x32xf32> to vector<8x8x8xf32>
    %23 = vector.extract_strided_slice %18 {offsets = [0, 0, 16], sizes = [8, 8, 8], strides = [1, 1, 1]} : vector<8x8x32xf32> to vector<8x8x8xf32>
    %24 = vector.extract_strided_slice %18 {offsets = [0, 0, 24], sizes = [8, 8, 8], strides = [1, 1, 1]} : vector<8x8x32xf32> to vector<8x8x8xf32>
    %25 = tpu.concatenate %21, %22, %23, %24 in 0 : vector<8x8x8xf32>, vector<8x8x8xf32>, vector<8x8x8xf32>, vector<8x8x8xf32> -> vector<32x8x8xf32>
    %26 = vector.extract_strided_slice %19 {offsets = [0, 0, 0], sizes = [8, 8, 8], strides = [1, 1, 1]} : vector<8x8x32xf32> to vector<8x8x8xf32>
    %27 = vector.extract_strided_slice %19 {offsets = [0, 0, 8], sizes = [8, 8, 8], strides = [1, 1, 1]} : vector<8x8x32xf32> to vector<8x8x8xf32>
    %28 = vector.extract_strided_slice %19 {offsets = [0, 0, 16], sizes = [8, 8, 8], strides = [1, 1, 1]} : vector<8x8x32xf32> to vector<8x8x8xf32>
    %29 = vector.extract_strided_slice %19 {offsets = [0, 0, 24], sizes = [8, 8, 8], strides = [1, 1, 1]} : vector<8x8x32xf32> to vector<8x8x8xf32>
    %30 = tpu.concatenate %26, %27, %28, %29 in 0 : vector<8x8x8xf32>, vector<8x8x8xf32>, vector<8x8x8xf32>, vector<8x8x8xf32> -> vector<32x8x8xf32>
    %31 = vector.extract_strided_slice %20 {offsets = [0, 0, 0], sizes = [8, 8, 8], strides = [1, 1, 1]} : vector<8x8x32xf32> to vector<8x8x8xf32>
    %32 = vector.extract_strided_slice %20 {offsets = [0, 0, 8], sizes = [8, 8, 8], strides = [1, 1, 1]} : vector<8x8x32xf32> to vector<8x8x8xf32>
    %33 = vector.extract_strided_slice %20 {offsets = [0, 0, 16], sizes = [8, 8, 8], strides = [1, 1, 1]} : vector<8x8x32xf32> to vector<8x8x8xf32>
    %34 = vector.extract_strided_slice %20 {offsets = [0, 0, 24], sizes = [8, 8, 8], strides = [1, 1, 1]} : vector<8x8x32xf32> to vector<8x8x8xf32>
    %35 = tpu.concatenate %31, %32, %33, %34 in 0 : vector<8x8x8xf32>, vector<8x8x8xf32>, vector<8x8x8xf32>, vector<8x8x8xf32> -> vector<32x8x8xf32>
    %36 = tpu.concatenate %5, %5, %5, %5 in 0 : vector<8x8xf32>, vector<8x8xf32>, vector<8x8xf32>, vector<8x8xf32> -> vector<32x8xf32>
    %37 = vector.shape_cast %36 : vector<32x8xf32> to vector<32x1x8xf32>
    "tpu.trace_start"() <{level = 10 : i32, message = "bqd,bkd->bqk"}> : () -> ()
    %cst_22 = arith.constant dense<0.000000e+00> : vector<32x8x8xf32>
    %38 = tpu.matmul %25, %30, %cst_22 {dimension_numbers = #tpu.dot_dimension_numbers<[2], [2], [1], [1], [0, 0, 0, 1, 1, 1], [0], [0]>} : vector<32x8x8xf32>, vector<32x8x8xf32>, vector<32x8x8xf32> -> vector<32x8x8xf32>
    "tpu.trace_stop"() : () -> ()
    %39 = vector.broadcast %37 : vector<32x1x8xf32> to vector<32x8x8xf32>
    %40 = arith.addf %38, %39 : vector<32x8x8xf32>
    %cst_23 = arith.constant dense<0xFF800000> : vector<32x8xf32>
    %41 = vector.multi_reduction <maximumf>, %40, %cst_23 [2] : vector<32x8x8xf32> to vector<32x8xf32>
    %42 = vector.shape_cast %41 : vector<32x8xf32> to vector<32x8x1xf32>
    %43 = vector.broadcast %42 : vector<32x8x1xf32> to vector<32x8x8xf32>
    %44 = arith.subf %40, %43 : vector<32x8x8xf32>
    %45 = math.exp %44 : vector<32x8x8xf32>
    %cst_24 = arith.constant dense<0.000000e+00> : vector<32x8xf32>
    %46 = vector.multi_reduction <add>, %45, %cst_24 [2] : vector<32x8x8xf32> to vector<32x8xf32>
    %47 = vector.shape_cast %46 : vector<32x8xf32> to vector<32x8x1xf32>
    %48 = tpu.reciprocal %47 {approx = true} : vector<32x8x1xf32> -> vector<32x8x1xf32>
    %49 = vector.broadcast %48 : vector<32x8x1xf32> to vector<32x8x8xf32>
    %50 = arith.mulf %45, %49 : vector<32x8x8xf32>
    "tpu.trace_start"() <{level = 10 : i32, message = "bqk,bkd->bqd"}> : () -> ()
    %cst_25 = arith.constant dense<0.000000e+00> : vector<32x8x8xf32>
    %51 = tpu.matmul %50, %35, %cst_25 {dimension_numbers = #tpu.dot_dimension_numbers<[2], [1], [1], [2], [0, 0, 0, 1, 1, 2], [0], [0]>} : vector<32x8x8xf32>, vector<32x8x8xf32>, vector<32x8x8xf32> -> vector<32x8x8xf32>
    "tpu.trace_stop"() : () -> ()
    %52 = vector.extract_strided_slice %51 {offsets = [0, 0, 0], sizes = [8, 8, 8], strides = [1, 1, 1]} : vector<32x8x8xf32> to vector<8x8x8xf32>
    %53 = vector.extract_strided_slice %51 {offsets = [8, 0, 0], sizes = [8, 8, 8], strides = [1, 1, 1]} : vector<32x8x8xf32> to vector<8x8x8xf32>
    %54 = vector.extract_strided_slice %51 {offsets = [16, 0, 0], sizes = [8, 8, 8], strides = [1, 1, 1]} : vector<32x8x8xf32> to vector<8x8x8xf32>
    %55 = vector.extract_strided_slice %51 {offsets = [24, 0, 0], sizes = [8, 8, 8], strides = [1, 1, 1]} : vector<32x8x8xf32> to vector<8x8x8xf32>
    %56 = tpu.concatenate %52, %53, %54, %55 in 2 : vector<8x8x8xf32>, vector<8x8x8xf32>, vector<8x8x8xf32>, vector<8x8x8xf32> -> vector<8x8x32xf32>
    %57 = vector.shape_cast %56 : vector<8x8x32xf32> to vector<64x32xf32>
    %c0_26 = arith.constant 0 : index
    %c0_27 = arith.constant 0 : index
    %58 = vector.load %arg6[%c0_26, %c0_27] : memref<32x32xf32, #tpu.memory_space<vmem>>, vector<32x32xf32>
    %cst_28 = arith.constant dense<0.000000e+00> : vector<64x32xf32>
    %59 = tpu.matmul %57, %58, %cst_28 {dimension_numbers = #tpu.dot_dimension_numbers<[1], [0], [0], [1], [0, 0, 1, 1], [], []>} : vector<64x32xf32>, vector<32x32xf32>, vector<64x32xf32> -> vector<64x32xf32>
    %c0_29 = arith.constant 0 : index
    %c0_30 = arith.constant 0 : index
    %c0_31 = arith.constant 0 : index
    %60 = vector.load %arg8[%c0_29, %c0_30, %c0_31] : memref<6x1x32xf32, #tpu.memory_space<vmem>>, vector<1x1x32xf32>
    %61 = vector.shape_cast %60 : vector<1x1x32xf32> to vector<1x32xf32>
    %62 = vector.broadcast %61 : vector<1x32xf32> to vector<64x32xf32>
    %63 = arith.addf %59, %62 : vector<64x32xf32>
    %64 = arith.addf %8, %63 : vector<64x32xf32>
    %c0_32 = arith.constant 0 : index
    %c0_33 = arith.constant 0 : index
    %65 = vector.load %arg7[%c0_32, %c0_33] : memref<32x32xf32, #tpu.memory_space<vmem>>, vector<32x32xf32>
    %cst_34 = arith.constant dense<0.000000e+00> : vector<64x32xf32>
    %66 = tpu.matmul %64, %65, %cst_34 {dimension_numbers = #tpu.dot_dimension_numbers<[1], [0], [0], [1], [0, 0, 1, 1], [], []>} : vector<64x32xf32>, vector<32x32xf32>, vector<64x32xf32> -> vector<64x32xf32>
    %c1_35 = arith.constant 1 : index
    %c0_36 = arith.constant 0 : index
    %c0_37 = arith.constant 0 : index
    %67 = vector.load %arg8[%c1_35, %c0_36, %c0_37] : memref<6x1x32xf32, #tpu.memory_space<vmem>>, vector<1x1x32xf32>
    %68 = vector.shape_cast %67 : vector<1x1x32xf32> to vector<1x32xf32>
    %69 = vector.broadcast %68 : vector<1x32xf32> to vector<64x32xf32>
    %70 = arith.addf %66, %69 : vector<64x32xf32>
    %cst_38 = arith.constant 0.000000e+00 : f32
    %71 = vector.broadcast %cst_38 : f32 to vector<64x32xf32>
    %72 = arith.maximumf %70, %71 : vector<64x32xf32>
    %73 = arith.addf %64, %72 : vector<64x32xf32>
    %c0_39 = arith.constant 0 : index
    %c0_40 = arith.constant 0 : index
    %c0_41 = arith.constant 0 : index
    %74 = vector.load %arg9[%c0_39, %c0_40, %c0_41] : memref<1x64x32xf32, #tpu.memory_space<vmem>>, vector<1x64x32xf32>
    %75 = vector.shape_cast %74 : vector<1x64x32xf32> to vector<64x32xf32>
    %76 = vector.shape_cast %73 : vector<64x32xf32> to vector<1x64x32xf32>
    tpu.vector_store %arg9[%c0_39, %c0_40, %c0_41], %76 {strides = array<i32>} : memref<1x64x32xf32, #tpu.memory_space<vmem>>, vector<1x64x32xf32>,
    return
  }
  func.func @transform_0(%arg0: i32) -> (i32, i32, i32) {
    %c0_i32 = arith.constant 0 : i32
    %c0_i32_0 = arith.constant 0 : i32
    %c0_i32_1 = arith.constant 0 : i32
    return %arg0, %c0_i32, %c0_i32_0 : i32, i32, i32
  }
  func.func @transform_1(%arg0: i32) -> (i32, i32, i32) {
    %c0_i32 = arith.constant 0 : i32
    %c0_i32_0 = arith.constant 0 : i32
    %c0_i32_1 = arith.constant 0 : i32
    return %arg0, %c0_i32, %c0_i32_0 : i32, i32, i32
  }
  func.func @transform_2(%arg0: i32) -> (i32, i32, i32) {
    %c0_i32 = arith.constant 0 : i32
    %c0_i32_0 = arith.constant 0 : i32
    %c0_i32_1 = arith.constant 0 : i32
    return %arg0, %c0_i32, %c0_i32_0 : i32, i32, i32
  }
  func.func @transform_3(%arg0: i32) -> (i32, i32, i32) {
    %c0_i32 = arith.constant 0 : i32
    %c0_i32_0 = arith.constant 0 : i32
    %c0_i32_1 = arith.constant 0 : i32
    %c0_i32_2 = arith.constant 0 : i32
    return %c0_i32, %c0_i32_0, %c0_i32_1 : i32, i32, i32
  }
  func.func @transform_4(%arg0: i32) -> (i32, i32, i32) {
    %c0_i32 = arith.constant 0 : i32
    %c0_i32_0 = arith.constant 0 : i32
    %c0_i32_1 = arith.constant 0 : i32
    %c0_i32_2 = arith.constant 0 : i32
    return %c0_i32, %c0_i32_0, %c0_i32_1 : i32, i32, i32
  }
  func.func @transform_5(%arg0: i32) -> (i32, i32) {
    %c0_i32 = arith.constant 0 : i32
    %c0_i32_0 = arith.constant 0 : i32
    %c0_i32_1 = arith.constant 0 : i32
    return %c0_i32, %c0_i32_0 : i32, i32
  }
  func.func @transform_6(%arg0: i32) -> (i32, i32) {
    %c0_i32 = arith.constant 0 : i32
    %c0_i32_0 = arith.constant 0 : i32
    %c0_i32_1 = arith.constant 0 : i32
    return %c0_i32, %c0_i32_0 : i32, i32
  }
  func.func @transform_7(%arg0: i32) -> (i32, i32, i32) {
    %c0_i32 = arith.constant 0 : i32
    %c0_i32_0 = arith.constant 0 : i32
    %c0_i32_1 = arith.constant 0 : i32
    %c0_i32_2 = arith.constant 0 : i32
    return %c0_i32, %c0_i32_0, %c0_i32_1 : i32, i32, i32
  }
  func.func @transform_8(%arg0: i32) -> (i32, i32, i32) {
    %c0_i32 = arith.constant 0 : i32
    %c0_i32_0 = arith.constant 0 : i32
    %c0_i32_1 = arith.constant 0 : i32
    return %arg0, %c0_i32, %c0_i32_0 : i32, i32, i32
  }
}

</mosaic_0001>

<llo_original>
// kernel: tpu_custom_call.1
$region0: #{tpu_custom_call.1}
  #allocation0 [shape = 'u32[]', space=smem, size = 0x4, offset = 0x4, fixed_abs, tag = 'smem constant byte address 0x4 - core index']
  #allocation1 [shape = 'u32[144,128]{1,0:T(1,128)}', space=vmem, size = 0x12000, scoped, tag = 'internal scratch']
  %s0 = inlined_call_operand.vmem [shape: f32[1,64,17], index: 0, kind: input, shape index: {}]
  %s1 = inlined_call_operand.vmem [shape: f32[1,64,17], index: 1, kind: input, shape index: {}]
  %s2 = inlined_call_operand.vmem [shape: f32[1,8,8], index: 2, kind: input, shape index: {}]
  %s3 = inlined_call_operand.vmem [shape: f32[2,17,32], index: 3, kind: input, shape index: {}]
  %s4 = inlined_call_operand.vmem [shape: f32[2,17,32], index: 4, kind: input, shape index: {}]
  %s5 = inlined_call_operand.vmem [shape: f32[32,32], index: 5, kind: input, shape index: {}]
  %s6 = inlined_call_operand.vmem [shape: f32[32,32], index: 6, kind: input, shape index: {}]
  %s7 = inlined_call_operand.vmem [shape: f32[6,1,32], index: 7, kind: input, shape index: {}]
  %s8 = inlined_call_operand.vmem [shape: f32[1,64,32], index: 8, kind: output, shape index: {}]
  %s9 = sld [smem:[#allocation0]]
  $region42: #{tpu_custom_call.1} parent=0
    _
  %s11 = ssub.s32 1, %s9
  %s12 = scalar_select 0, %s11, %s9
  // Predicated region
  $region2: #{tpu_custom_call.1} parent=0 // pred_check
    _
  $region3: #{tpu_custom_call.1} parent=0 // pred_check_branch
    %14 = sbr.rel (0) target = $region5
  $region4: #{tpu_custom_call.1} parent=0 // pred_region
    _
  $region5: #{tpu_custom_call.1} parent=0 // pred_fallthru
    _
  // Predicated region
  $region6: #{tpu_custom_call.1} parent=0 // pred_check
    _
  $region7: #{tpu_custom_call.1} parent=0 // pred_check_branch
    %16 = sbr.rel (0) target = $region9
  $region8: #{tpu_custom_call.1} parent=0 // pred_region
    _
  $region9: #{tpu_custom_call.1} parent=0 // pred_fallthru
    _
  // Predicated region
  $region10: #{tpu_custom_call.1} parent=0 // pred_check
    _
  $region11: #{tpu_custom_call.1} parent=0 // pred_check_branch
    %18 = sbr.rel (0) target = $region13
  $region12: #{tpu_custom_call.1} parent=0 // pred_region
    _
  $region13: #{tpu_custom_call.1} parent=0 // pred_fallthru
    _
  // Predicated region
  $region14: #{tpu_custom_call.1} parent=0 // pred_check
    _
  $region15: #{tpu_custom_call.1} parent=0 // pred_check_branch
    %20 = sbr.rel (0) target = $region17
  $region16: #{tpu_custom_call.1} parent=0 // pred_region
    _
  $region17: #{tpu_custom_call.1} parent=0 // pred_fallthru
    _
  // Predicated region
  $region18: #{tpu_custom_call.1} parent=0 // pred_check
    _
  $region19: #{tpu_custom_call.1} parent=0 // pred_check_branch
    %22 = sbr.rel (0) target = $region21
  $region20: #{tpu_custom_call.1} parent=0 // pred_region
    _
  $region21: #{tpu_custom_call.1} parent=0 // pred_fallthru
    _
  // Predicated region
  $region22: #{tpu_custom_call.1} parent=0 // pred_check
    _
  $region23: #{tpu_custom_call.1} parent=0 // pred_check_branch
    %24 = sbr.rel (0) target = $region25
  $region24: #{tpu_custom_call.1} parent=0 // pred_region
    _
  $region25: #{tpu_custom_call.1} parent=0 // pred_fallthru
    _
  // Predicated region
  $region26: #{tpu_custom_call.1} parent=0 // pred_check
    _
  $region27: #{tpu_custom_call.1} parent=0 // pred_check_branch
    %26 = sbr.rel (0) target = $region29
  $region28: #{tpu_custom_call.1} parent=0 // pred_region
    _
  $region29: #{tpu_custom_call.1} parent=0 // pred_fallthru
    _
  // Predicated region
  $region30: #{tpu_custom_call.1} parent=0 // pred_check
    _
  $region31: #{tpu_custom_call.1} parent=0 // pred_check_branch
    %28 = sbr.rel (0) target = $region33
  $region32: #{tpu_custom_call.1} parent=0 // pred_region
    _
  $region33: #{tpu_custom_call.1} parent=0 // pred_fallthru
    _
  %v29 = vld [vmem:[%s0] sm:$0xff]
  %v30 = vld [vmem:[%s0 + $0x8] sm:$0xff]
  %v31 = vld [vmem:[%s0 + $0x10] sm:$0xff]
  %v32 = vld [vmem:[%s0 + $0x18] sm:$0xff]
  %v33 = vld [vmem:[%s0 + $0x20] sm:$0xff]
  %v34 = vld [vmem:[%s0 + $0x28] sm:$0xff]
  %v35 = vld [vmem:[%s0 + $0x30] sm:$0xff]
  %v36 = vld [vmem:[%s0 + $0x38] sm:$0xff]
  %v37 = vld [vmem:[%s1] sm:$0xff]
  %v38 = vld [vmem:[%s1 + $0x8] sm:$0xff]
  %v39 = vld [vmem:[%s1 + $0x10] sm:$0xff]
  %v40 = vld [vmem:[%s1 + $0x18] sm:$0xff]
  %v41 = vld [vmem:[%s1 + $0x20] sm:$0xff]
  %v42 = vld [vmem:[%s1 + $0x28] sm:$0xff]
  %v43 = vld [vmem:[%s1 + $0x30] sm:$0xff]
  %v44 = vld [vmem:[%s1 + $0x38] sm:$0xff]
  %v45 = vld [vmem:[%s2] sm:$0xff]
  %v46 = vld [vmem:[%s3] sm:$0xff]
  %v47 = vld [vmem:[%s3 + $0x8] sm:$0xff]
  %v48 = vld [vmem:[%s3 + $0x10] sm:$0x1]
  %s49 = scalar_lea.vmem %s3, 24
  %v50 = vld [vmem:[%s49] sm:$0xff]
  %v51 = vld [vmem:[%s49 + $0x8] sm:$0xff]
  %v52 = vld [vmem:[%s49 + $0x10] sm:$0x1]
  %vm53 = vcmask 138240
  %v55 = vsel %vm53, %v29, 0
  %v58 = vsel %vm53, %v30, 0
  %v61 = vsel %vm53, %v31, 0
  %v64 = vsel %vm53, %v32, 0
  %v67 = vsel %vm53, %v33, 0
  %v70 = vsel %vm53, %v34, 0
  %v73 = vsel %vm53, %v35, 0
  %v76 = vsel %vm53, %v36, 0
  %vm78 = vcmask 1040384
  %v80 = vsel %vm78, %v52, 0
  %82 = vmatprep.subr.mxu0 0.0
  %83 = vmatpush1.msra.mxu0 %v50
  %84 = vmatprep.subr.mxu0 0.0
  %85 = vmatpush1.msra.mxu0 %v51
  %86 = vmatprep.subr.mxu0 0.0
  %87 = vmatpush1.msra.mxu0 %v80
  %88 = vmatprep.subr.mxu0 0.0
  %89 = vmatpush1.msra.mxu0 0.0
  %90 = vmatprep.subr.mxu0 0.0
  %91 = vmatpush1.msra.mxu0 0.0
  %92 = vmatprep.subr.mxu0 0.0
  %93 = vmatpush1.msra.mxu0 0.0
  %94 = vmatprep.subr.mxu0 0.0
  %95 = vmatpush1.msra.mxu0 0.0
  %96 = vmatprep.subr.mxu0 0.0
  %97 = vmatpush1.msra.mxu0 0.0
  %98 = vmatprep.subr.mxu0 0.0
  %99 = vmatpush1.msra.mxu0 0.0
  %100 = vmatprep.subr.mxu0 0.0
  %101 = vmatpush1.msra.mxu0 0.0
  %102 = vmatprep.subr.mxu0 0.0
  %103 = vmatpush1.msra.mxu0 0.0
  %104 = vmatprep.subr.mxu0 0.0
  %105 = vmatpush1.msra.mxu0 0.0
  %106 = vmatprep.subr.mxu0 0.0
  %107 = vmatpush1.msra.mxu0 0.0
  %108 = vmatprep.subr.mxu0 0.0
  %109 = vmatpush1.msra.mxu0 0.0
  %110 = vmatprep.subr.mxu0 0.0
  %111 = vmatpush1.msra.mxu0 0.0
  %112 = vmatprep.subr.mxu0 0.0
  %113 = vmatpush1.msra.mxu0 0.0
  %114 = vmatprep.subr.mxu0 0.0
  %115 = vmatpush1.msra.mxu0 0.0
  %116 = vmatprep.subr.mxu0 0.0
  %117 = vmatpush1.msra.mxu0 0.0
  %118 = vmatprep.subr.mxu0 0.0
  %119 = vmatpush1.msra.mxu0 0.0
  %120 = vmatprep.subr.mxu0 0.0
  %121 = vmatpush1.msra.mxu0 0.0
  %122 = vmatprep.subr.mxu0 0.0
  %123 = vmatpush1.msra.mxu0 0.0
  %124 = vmatprep.subr.mxu0 0.0
  %125 = vmatpush1.msra.mxu0 0.0
  %126 = vmatprep.subr.mxu0 0.0
  %127 = vmatpush1.msra.mxu0 0.0
  %128 = vmatprep.subr.mxu0 0.0
  %129 = vmatpush1.msra.mxu0 0.0
  %130 = vmatprep.subr.mxu0 0.0
  %131 = vmatpush1.msra.mxu0 0.0
  %132 = vmatprep.subr.mxu0 0.0
  %133 = vmatpush1.msra.mxu0 0.0
  %134 = vmatprep.subr.mxu0 0.0
  %135 = vmatpush1.msra.mxu0 0.0
  %136 = vmatprep.subr.mxu0 0.0
  %137 = vmatpush1.msra.mxu0 0.0
  %138 = vmatprep.subr.mxu0 0.0
  %139 = vmatpush1.msra.mxu0 0.0
  %140 = vmatprep.subr.mxu0 0.0
  %141 = vmatpush1.msra.mxu0 0.0
  %142 = vmatprep.subr.mxu0 0.0
  %143 = vmatpush1.msra.mxu0 0.0
  %144 = vmatprep.subr.mxu0 0.0
  %145 = vmatpush1.msra.mxu0 0.0
  %146 = vmatprep.mubr.f32.mxu0 0.0
  %147 = vmatmul.mubr.f32.gmra.mrb[0].mxu0 %v55
  %v148 = vpop.f32.mrb[0].mxu0
  %v149 = vadd.f32 0.0, %v148
  %v150 = vpop.f32.mrb[0].mxu0
  %151 = vmatprep.mubr.f32.mxu0 0.0
  %152 = vmatmul.mubr.f32.gmra.mrb[0].mxu0 %v58
  %v153 = vpop.f32.mrb[0].mxu0
  %v154 = vadd.f32 0.0, %v153
  %v155 = vpop.f32.mrb[0].mxu0
  %156 = vmatprep.mubr.f32.mxu0 0.0
  %157 = vmatmul.mubr.f32.gmra.mrb[0].mxu0 %v61
  %v158 = vpop.f32.mrb[0].mxu0
  %v159 = vadd.f32 0.0, %v158
  %v160 = vpop.f32.mrb[0].mxu0
  %161 = vmatprep.mubr.f32.mxu0 0.0
  %162 = vmatmul.mubr.f32.gmra.mrb[0].mxu0 %v64
  %v163 = vpop.f32.mrb[0].mxu0
  %v164 = vadd.f32 0.0, %v163
  %v165 = vpop.f32.mrb[0].mxu0
  %166 = vmatprep.mubr.f32.mxu0 0.0
  %167 = vmatmul.mubr.f32.gmra.mrb[0].mxu0 %v67
  %v168 = vpop.f32.mrb[0].mxu0
  %v169 = vadd.f32 0.0, %v168
  %v170 = vpop.f32.mrb[0].mxu0
  %171 = vmatprep.mubr.f32.mxu0 0.0
  %172 = vmatmul.mubr.f32.gmra.mrb[0].mxu0 %v70
  %v173 = vpop.f32.mrb[0].mxu0
  %v174 = vadd.f32 0.0, %v173
  %v175 = vpop.f32.mrb[0].mxu0
  %176 = vmatprep.mubr.f32.mxu0 0.0
  %177 = vmatmul.mubr.f32.gmra.mrb[0].mxu0 %v73
  %v178 = vpop.f32.mrb[0].mxu0
  %v179 = vadd.f32 0.0, %v178
  %v180 = vpop.f32.mrb[0].mxu0
  %181 = vmatprep.mubr.f32.mxu0 0.0
  %182 = vmatmul.mubr.f32.gmra.mrb[0].mxu0 %v76
  %v183 = vpop.f32.mrb[0].mxu0
  %v184 = vadd.f32 0.0, %v183
  %v185 = vpop.f32.mrb[0].mxu0
  %186 = vdwg.mxu0
  %v187 = vld [vmem:[%s4] sm:$0xff]
  %v188 = vld [vmem:[%s4 + $0x8] sm:$0xff]
  %v189 = vld [vmem:[%s4 + $0x10] sm:$0x1]
  %v191 = vsel %vm53, %v37, 0
  %v194 = vsel %vm53, %v38, 0
  %v197 = vsel %vm53, %v39, 0
  %v200 = vsel %vm53, %v40, 0
  %v203 = vsel %vm53, %v41, 0
  %v206 = vsel %vm53, %v42, 0
  %v209 = vsel %vm53, %v43, 0
  %v212 = vsel %vm53, %v44, 0
  %v215 = vsel %vm78, %v189, 0
  %217 = vmatprep.subr.mxu0 0.0
  %218 = vmatpush1.msra.mxu0 %v187
  %219 = vmatprep.subr.mxu0 0.0
  %220 = vmatpush1.msra.mxu0 %v188
  %221 = vmatprep.subr.mxu0 0.0
  %222 = vmatpush1.msra.mxu0 %v215
  %223 = vmatprep.subr.mxu0 0.0
  %224 = vmatpush1.msra.mxu0 0.0
  %225 = vmatprep.subr.mxu0 0.0
  %226 = vmatpush1.msra.mxu0 0.0
  %227 = vmatprep.subr.mxu0 0.0
  %228 = vmatpush1.msra.mxu0 0.0
  %229 = vmatprep.subr.mxu0 0.0
  %230 = vmatpush1.msra.mxu0 0.0
  %231 = vmatprep.subr.mxu0 0.0
  %232 = vmatpush1.msra.mxu0 0.0
  %233 = vmatprep.subr.mxu0 0.0
  %234 = vmatpush1.msra.mxu0 0.0
  %235 = vmatprep.subr.mxu0 0.0
  %236 = vmatpush1.msra.mxu0 0.0
  %237 = vmatprep.subr.mxu0 0.0
  %238 = vmatpush1.msra.mxu0 0.0
  %239 = vmatprep.subr.mxu0 0.0
  %240 = vmatpush1.msra.mxu0 0.0
  %241 = vmatprep.subr.mxu0 0.0
  %242 = vmatpush1.msra.mxu0 0.0
  %243 = vmatprep.subr.mxu0 0.0
  %244 = vmatpush1.msra.mxu0 0.0
  %245 = vmatprep.subr.mxu0 0.0
  %246 = vmatpush1.msra.mxu0 0.0
  %247 = vmatprep.subr.mxu0 0.0
  %248 = vmatpush1.msra.mxu0 0.0
  %249 = vmatprep.subr.mxu0 0.0
  %250 = vmatpush1.msra.mxu0 0.0
  %251 = vmatprep.subr.mxu0 0.0
  %252 = vmatpush1.msra.mxu0 0.0
  %253 = vmatprep.subr.mxu0 0.0
  %254 = vmatpush1.msra.mxu0 0.0
  %255 = vmatprep.subr.mxu0 0.0
  %256 = vmatpush1.msra.mxu0 0.0
  %257 = vmatprep.subr.mxu0 0.0
  %258 = vmatpush1.msra.mxu0 0.0
  %259 = vmatprep.subr.mxu0 0.0
  %260 = vmatpush1.msra.mxu0 0.0
  %261 = vmatprep.subr.mxu0 0.0
  %262 = vmatpush1.msra.mxu0 0.0
  %263 = vmatprep.subr.mxu0 0.0
  %264 = vmatpush1.msra.mxu0 0.0
  %265 = vmatprep.subr.mxu0 0.0
  %266 = vmatpush1.msra.mxu0 0.0
  %267 = vmatprep.subr.mxu0 0.0
  %268 = vmatpush1.msra.mxu0 0.0
  %269 = vmatprep.subr.mxu0 0.0
  %270 = vmatpush1.msra.mxu0 0.0
  %271 = vmatprep.subr.mxu0 0.0
  %272 = vmatpush1.msra.mxu0 0.0
  %273 = vmatprep.subr.mxu0 0.0
  %274 = vmatpush1.msra.mxu0 0.0
  %275 = vmatprep.subr.mxu0 0.0
  %276 = vmatpush1.msra.mxu0 0.0
  %277 = vmatprep.subr.mxu0 0.0
  %278 = vmatpush1.msra.mxu0 0.0
  %279 = vmatprep.subr.mxu0 0.0
  %280 = vmatpush1.msra.mxu0 0.0
  %281 = vmatprep.mubr.f32.mxu0 0.0
  %282 = vmatmul.mubr.f32.gmra.mrb[0].mxu0 %v191
  %v283 = vpop.f32.mrb[0].mxu0
  %v284 = vadd.f32 0.0, %v283
  %v285 = vpop.f32.mrb[0].mxu0
  %286 = vmatprep.mubr.f32.mxu0 0.0
  %287 = vmatmul.mubr.f32.gmra.mrb[0].mxu0 %v194
  %v288 = vpop.f32.mrb[0].mxu0
  %v289 = vadd.f32 0.0, %v288
  %v290 = vpop.f32.mrb[0].mxu0
  %291 = vmatprep.mubr.f32.mxu0 0.0
  %292 = vmatmul.mubr.f32.gmra.mrb[0].mxu0 %v197
  %v293 = vpop.f32.mrb[0].mxu0
  %v294 = vadd.f32 0.0, %v293
  %v295 = vpop.f32.mrb[0].mxu0
  %296 = vmatprep.mubr.f32.mxu0 0.0
  %297 = vmatmul.mubr.f32.gmra.mrb[0].mxu0 %v200
  %v298 = vpop.f32.mrb[0].mxu0
  %v299 = vadd.f32 0.0, %v298
  %v300 = vpop.f32.mrb[0].mxu0
  %301 = vmatprep.mubr.f32.mxu0 0.0
  %302 = vmatmul.mubr.f32.gmra.mrb[0].mxu0 %v203
  %v303 = vpop.f32.mrb[0].mxu0
  %v304 = vadd.f32 0.0, %v303
  %v305 = vpop.f32.mrb[0].mxu0
  %306 = vmatprep.mubr.f32.mxu0 0.0
  %307 = vmatmul.mubr.f32.gmra.mrb[0].mxu0 %v206
  %v308 = vpop.f32.mrb[0].mxu0
  %v309 = vadd.f32 0.0, %v308
  %v310 = vpop.f32.mrb[0].mxu0
  %311 = vmatprep.mubr.f32.mxu0 0.0
  %312 = vmatmul.mubr.f32.gmra.mrb[0].mxu0 %v209
  %v313 = vpop.f32.mrb[0].mxu0
  %v314 = vadd.f32 0.0, %v313
  %v315 = vpop.f32.mrb[0].mxu0
  %316 = vmatprep.mubr.f32.mxu0 0.0
  %317 = vmatmul.mubr.f32.gmra.mrb[0].mxu0 %v212
  %v318 = vpop.f32.mrb[0].mxu0
  %v319 = vadd.f32 0.0, %v318
  %v320 = vpop.f32.mrb[0].mxu0
  %321 = vdwg.mxu0
  %s322 = scalar_lea.vmem %s4, 24
  %v323 = vld [vmem:[%s322] sm:$0xff]
  %v324 = vld [vmem:[%s322 + $0x8] sm:$0xff]
  %v325 = vld [vmem:[%s322 + $0x10] sm:$0x1]
  %v327 = vsel %vm78, %v325, 0
  %329 = vmatprep.subr.mxu0 0.0
  %330 = vmatpush1.msra.mxu0 %v323
  %331 = vmatprep.subr.mxu0 0.0
  %332 = vmatpush1.msra.mxu0 %v324
  %333 = vmatprep.subr.mxu0 0.0
  %334 = vmatpush1.msra.mxu0 %v327
  %335 = vmatprep.subr.mxu0 0.0
  %336 = vmatpush1.msra.mxu0 0.0
  %337 = vmatprep.subr.mxu0 0.0
  %338 = vmatpush1.msra.mxu0 0.0
  %339 = vmatprep.subr.mxu0 0.0
  %340 = vmatpush1.msra.mxu0 0.0
  %341 = vmatprep.subr.mxu0 0.0
  %342 = vmatpush1.msra.mxu0 0.0
  %343 = vmatprep.subr.mxu0 0.0
  %344 = vmatpush1.msra.mxu0 0.0
  %345 = vmatprep.subr.mxu0 0.0
  %346 = vmatpush1.msra.mxu0 0.0
  %347 = vmatprep.subr.mxu0 0.0
  %348 = vmatpush1.msra.mxu0 0.0
  %349 = vmatprep.subr.mxu0 0.0
  %350 = vmatpush1.msra.mxu0 0.0
  %351 = vmatprep.subr.mxu0 0.0
  %352 = vmatpush1.msra.mxu0 0.0
  %353 = vmatprep.subr.mxu0 0.0
  %354 = vmatpush1.msra.mxu0 0.0
  %355 = vmatprep.subr.mxu0 0.0
  %356 = vmatpush1.msra.mxu0 0.0
  %357 = vmatprep.subr.mxu0 0.0
  %358 = vmatpush1.msra.mxu0 0.0
  %359 = vmatprep.subr.mxu0 0.0
  %360 = vmatpush1.msra.mxu0 0.0
  %361 = vmatprep.subr.mxu0 0.0
  %362 = vmatpush1.msra.mxu0 0.0
  %363 = vmatprep.subr.mxu0 0.0
  %364 = vmatpush1.msra.mxu0 0.0
  %365 = vmatprep.subr.mxu0 0.0
  %366 = vmatpush1.msra.mxu0 0.0
  %367 = vmatprep.subr.mxu0 0.0
  %368 = vmatpush1.msra.mxu0 0.0
  %369 = vmatprep.subr.mxu0 0.0
  %370 = vmatpush1.msra.mxu0 0.0
  %371 = vmatprep.subr.mxu0 0.0
  %372 = vmatpush1.msra.mxu0 0.0
  %373 = vmatprep.subr.mxu0 0.0
  %374 = vmatpush1.msra.mxu0 0.0
  %375 = vmatprep.subr.mxu0 0.0
  %376 = vmatpush1.msra.mxu0 0.0
  %377 = vmatprep.subr.mxu0 0.0
  %378 = vmatpush1.msra.mxu0 0.0
  %379 = vmatprep.subr.mxu0 0.0
  %380 = vmatpush1.msra.mxu0 0.0
  %381 = vmatprep.subr.mxu0 0.0
  %382 = vmatpush1.msra.mxu0 0.0
  %383 = vmatprep.subr.mxu0 0.0
  %384 = vmatpush1.msra.mxu0 0.0
  %385 = vmatprep.subr.mxu0 0.0
  %386 = vmatpush1.msra.mxu0 0.0
  %387 = vmatprep.subr.mxu0 0.0
  %388 = vmatpush1.msra.mxu0 0.0
  %389 = vmatprep.subr.mxu0 0.0
  %390 = vmatpush1.msra.mxu0 0.0
  %391 = vmatprep.subr.mxu0 0.0
  %392 = vmatpush1.msra.mxu0 0.0
  %393 = vmatprep.mubr.f32.mxu0 0.0
  %394 = vmatmul.mubr.f32.gmra.mrb[0].mxu0 %v191
  %v395 = vpop.f32.mrb[0].mxu0
  %v396 = vadd.f32 0.0, %v395
  %v397 = vpop.f32.mrb[0].mxu0
  %398 = vmatprep.mubr.f32.mxu0 0.0
  %399 = vmatmul.mubr.f32.gmra.mrb[0].mxu0 %v194
  %v400 = vpop.f32.mrb[0].mxu0
  %v401 = vadd.f32 0.0, %v400
  %v402 = vpop.f32.mrb[0].mxu0
  %403 = vmatprep.mubr.f32.mxu0 0.0
  %404 = vmatmul.mubr.f32.gmra.mrb[0].mxu0 %v197
  %v405 = vpop.f32.mrb[0].mxu0
  %v406 = vadd.f32 0.0, %v405
  %v407 = vpop.f32.mrb[0].mxu0
  %408 = vmatprep.mubr.f32.mxu0 0.0
  %409 = vmatmul.mubr.f32.gmra.mrb[0].mxu0 %v200
  %v410 = vpop.f32.mrb[0].mxu0
  %v411 = vadd.f32 0.0, %v410
  %v412 = vpop.f32.mrb[0].mxu0
  %413 = vmatprep.mubr.f32.mxu0 0.0
  %414 = vmatmul.mubr.f32.gmra.mrb[0].mxu0 %v203
  %v415 = vpop.f32.mrb[0].mxu0
  %v416 = vadd.f32 0.0, %v415
  %v417 = vpop.f32.mrb[0].mxu0
  %418 = vmatprep.mubr.f32.mxu0 0.0
  %419 = vmatmul.mubr.f32.gmra.mrb[0].mxu0 %v206
  %v420 = vpop.f32.mrb[0].mxu0
  %v421 = vadd.f32 0.0, %v420
  %v422 = vpop.f32.mrb[0].mxu0
  %423 = vmatprep.mubr.f32.mxu0 0.0
  %424 = vmatmul.mubr.f32.gmra.mrb[0].mxu0 %v209
  %v425 = vpop.f32.mrb[0].mxu0
  %v426 = vadd.f32 0.0, %v425
  %v427 = vpop.f32.mrb[0].mxu0
  %428 = vmatprep.mubr.f32.mxu0 0.0
  %429 = vmatmul.mubr.f32.gmra.mrb[0].mxu0 %v212
  %v430 = vpop.f32.mrb[0].mxu0
  %v431 = vadd.f32 0.0, %v430
  %v432 = vpop.f32.mrb[0].mxu0
  %433 = vdwg.mxu0
  %442 = vrot.lane.b32.xlu0 %v149, 120
  %v443 = vpop.permute.xlu0 %442
  %444 = vrot.lane.b32.xlu0 %v154, 120
  %v445 = vpop.permute.xlu0 %444
  %446 = vrot.lane.b32.xlu0 %v159, 120
  %v447 = vpop.permute.xlu0 %446
  %448 = vrot.lane.b32.xlu0 %v164, 120
  %v449 = vpop.permute.xlu0 %448
  %450 = vrot.lane.b32.xlu0 %v169, 120
  %v451 = vpop.permute.xlu0 %450
  %452 = vrot.lane.b32.xlu0 %v174, 120
  %v453 = vpop.permute.xlu0 %452
  %454 = vrot.lane.b32.xlu0 %v179, 120
  %v455 = vpop.permute.xlu0 %454
  %456 = vrot.lane.b32.xlu0 %v184, 120
  %v457 = vpop.permute.xlu0 %456
  %458 = vrot.lane.b32.xlu0 %v149, 112
  %v459 = vpop.permute.xlu0 %458
  %460 = vrot.lane.b32.xlu0 %v154, 112
  %v461 = vpop.permute.xlu0 %460
  %462 = vrot.lane.b32.xlu0 %v159, 112
  %v463 = vpop.permute.xlu0 %462
  %464 = vrot.lane.b32.xlu0 %v164, 112
  %v465 = vpop.permute.xlu0 %464
  %466 = vrot.lane.b32.xlu0 %v169, 112
  %v467 = vpop.permute.xlu0 %466
  %468 = vrot.lane.b32.xlu0 %v174, 112
  %v469 = vpop.permute.xlu0 %468
  %470 = vrot.lane.b32.xlu0 %v179, 112
  %v471 = vpop.permute.xlu0 %470
  %472 = vrot.lane.b32.xlu0 %v184, 112
  %v473 = vpop.permute.xlu0 %472
  %474 = vrot.lane.b32.xlu0 %v149, 104
  %v475 = vpop.permute.xlu0 %474
  %476 = vrot.lane.b32.xlu0 %v154, 104
  %v477 = vpop.permute.xlu0 %476
  %478 = vrot.lane.b32.xlu0 %v159, 104
  %v479 = vpop.permute.xlu0 %478
  %480 = vrot.lane.b32.xlu0 %v164, 104
  %v481 = vpop.permute.xlu0 %480
  %482 = vrot.lane.b32.xlu0 %v169, 104
  %v483 = vpop.permute.xlu0 %482
  %484 = vrot.lane.b32.xlu0 %v174, 104
  %v485 = vpop.permute.xlu0 %484
  %486 = vrot.lane.b32.xlu0 %v179, 104
  %v487 = vpop.permute.xlu0 %486
  %488 = vrot.lane.b32.xlu0 %v184, 104
  %v489 = vpop.permute.xlu0 %488
  %498 = vrot.lane.b32.xlu0 %v284, 120
  %v499 = vpop.permute.xlu0 %498
  %500 = vrot.lane.b32.xlu0 %v289, 120
  %v501 = vpop.permute.xlu0 %500
  %502 = vrot.lane.b32.xlu0 %v294, 120
  %v503 = vpop.permute.xlu0 %502
  %504 = vrot.lane.b32.xlu0 %v299, 120
  %v505 = vpop.permute.xlu0 %504
  %506 = vrot.lane.b32.xlu0 %v304, 120
  %v507 = vpop.permute.xlu0 %506
  %508 = vrot.lane.b32.xlu0 %v309, 120
  %v509 = vpop.permute.xlu0 %508
  %510 = vrot.lane.b32.xlu0 %v314, 120
  %v511 = vpop.permute.xlu0 %510
  %512 = vrot.lane.b32.xlu0 %v319, 120
  %v513 = vpop.permute.xlu0 %512
  %514 = vrot.lane.b32.xlu0 %v284, 112
  %v515 = vpop.permute.xlu0 %514
  %516 = vrot.lane.b32.xlu0 %v289, 112
  %v517 = vpop.permute.xlu0 %516
  %518 = vrot.lane.b32.xlu0 %v294, 112
  %v519 = vpop.permute.xlu0 %518
  %520 = vrot.lane.b32.xlu0 %v299, 112
  %v521 = vpop.permute.xlu0 %520
  %522 = vrot.lane.b32.xlu0 %v304, 112
  %v523 = vpop.permute.xlu0 %522
  %524 = vrot.lane.b32.xlu0 %v309, 112
  %v525 = vpop.permute.xlu0 %524
  %526 = vrot.lane.b32.xlu0 %v314, 112
  %v527 = vpop.permute.xlu0 %526
  %528 = vrot.lane.b32.xlu0 %v319, 112
  %v529 = vpop.permute.xlu0 %528
  %530 = vrot.lane.b32.xlu0 %v284, 104
  %v531 = vpop.permute.xlu0 %530
  %532 = vrot.lane.b32.xlu0 %v289, 104
  %v533 = vpop.permute.xlu0 %532
  %534 = vrot.lane.b32.xlu0 %v294, 104
  %v535 = vpop.permute.xlu0 %534
  %536 = vrot.lane.b32.xlu0 %v299, 104
  %v537 = vpop.permute.xlu0 %536
  %538 = vrot.lane.b32.xlu0 %v304, 104
  %v539 = vpop.permute.xlu0 %538
  %540 = vrot.lane.b32.xlu0 %v309, 104
  %v541 = vpop.permute.xlu0 %540
  %542 = vrot.lane.b32.xlu0 %v314, 104
  %v543 = vpop.permute.xlu0 %542
  %544 = vrot.lane.b32.xlu0 %v319, 104
  %v545 = vpop.permute.xlu0 %544
  %554 = vrot.lane.b32.xlu0 %v396, 120
  %v555 = vpop.permute.xlu0 %554
  %556 = vrot.lane.b32.xlu0 %v401, 120
  %v557 = vpop.permute.xlu0 %556
  %558 = vrot.lane.b32.xlu0 %v406, 120
  %v559 = vpop.permute.xlu0 %558
  %560 = vrot.lane.b32.xlu0 %v411, 120
  %v561 = vpop.permute.xlu0 %560
  %562 = vrot.lane.b32.xlu0 %v416, 120
  %v563 = vpop.permute.xlu0 %562
  %564 = vrot.lane.b32.xlu0 %v421, 120
  %v565 = vpop.permute.xlu0 %564
  %566 = vrot.lane.b32.xlu0 %v426, 120
  %v567 = vpop.permute.xlu0 %566
  %568 = vrot.lane.b32.xlu0 %v431, 120
  %v569 = vpop.permute.xlu0 %568
  %578 = vrot.lane.b32.xlu0 %v396, 112
  %v579 = vpop.permute.xlu0 %578
  %580 = vrot.lane.b32.xlu0 %v401, 112
  %v581 = vpop.permute.xlu0 %580
  %582 = vrot.lane.b32.xlu0 %v406, 112
  %v583 = vpop.permute.xlu0 %582
  %584 = vrot.lane.b32.xlu0 %v411, 112
  %v585 = vpop.permute.xlu0 %584
  %586 = vrot.lane.b32.xlu0 %v416, 112
  %v587 = vpop.permute.xlu0 %586
  %588 = vrot.lane.b32.xlu0 %v421, 112
  %v589 = vpop.permute.xlu0 %588
  %590 = vrot.lane.b32.xlu0 %v426, 112
  %v591 = vpop.permute.xlu0 %590
  %592 = vrot.lane.b32.xlu0 %v431, 112
  %v593 = vpop.permute.xlu0 %592
  %602 = vrot.lane.b32.xlu0 %v396, 104
  %v603 = vpop.permute.xlu0 %602
  %604 = vrot.lane.b32.xlu0 %v401, 104
  %v605 = vpop.permute.xlu0 %604
  %606 = vrot.lane.b32.xlu0 %v406, 104
  %v607 = vpop.permute.xlu0 %606
  %608 = vrot.lane.b32.xlu0 %v411, 104
  %v609 = vpop.permute.xlu0 %608
  %610 = vrot.lane.b32.xlu0 %v416, 104
  %v611 = vpop.permute.xlu0 %610
  %612 = vrot.lane.b32.xlu0 %v421, 104
  %v613 = vpop.permute.xlu0 %612
  %614 = vrot.lane.b32.xlu0 %v426, 104
  %v615 = vpop.permute.xlu0 %614
  %616 = vrot.lane.b32.xlu0 %v431, 104
  %v617 = vpop.permute.xlu0 %616
  %v627 = vcombine.high %v45, %v45
  %v629 = vunpack.c.l.s4 1966171168
  %v630 = vunpack.c.0.s8 %v629
  %v631 = vlaneseq
  %v632 = vshrl.u32 %v631, 7
  %v633 = vsub.s32 %v630, %v632
  %v634 = vrot.slane %v45, %v633
  %v636 = vunpack.c.l.s4 1966171168
  %v637 = vunpack.c.0.s8 %v636
  %v638 = vlaneseq
  %v639 = vshrl.u32 %v638, 7
  %v640 = vsub.s32 %v637, %v639
  %v641 = vrot.slane %v627, %v640
  %v642 = vcombine.high %v634, %v634
  %v643 = vcombine.high %v641, %v641
  %v645 = vunpack.c.l.s4 1966171168
  %v646 = vunpack.c.0.s8 %v645
  %v647 = vlaneseq
  %v648 = vshrl.u32 %v647, 7
  %v649 = vsub.s32 %v646, %v648
  %v650 = vrot.slane %v634, %v649
  %v652 = vunpack.c.l.s4 1966171168
  %v653 = vunpack.c.0.s8 %v652
  %v654 = vlaneseq
  %v655 = vshrl.u32 %v654, 7
  %v656 = vsub.s32 %v653, %v655
  %v657 = vrot.slane %v641, %v656
  %v659 = vunpack.c.l.s4 1966171168
  %v660 = vunpack.c.0.s8 %v659
  %v661 = vlaneseq
  %v662 = vshrl.u32 %v661, 7
  %v663 = vsub.s32 %v660, %v662
  %v664 = vrot.slane %v642, %v663
  %v666 = vunpack.c.l.s4 1966171168
  %v667 = vunpack.c.0.s8 %v666
  %v668 = vlaneseq
  %v669 = vshrl.u32 %v668, 7
  %v670 = vsub.s32 %v667, %v669
  %v671 = vrot.slane %v643, %v670
  %v672 = vcombine.high %v650, %v650
  %v673 = vcombine.high %v657, %v657
  %v674 = vcombine.high %v664, %v664
  %v675 = vcombine.high %v671, %v671
  %v676 = vlaneseq
  %v677 = vshrl.u32 %v676, 7
  %v678 = vsub.s32 0, %v677
  %v679 = vrot.slane %v650, %v678
  %v680 = vlaneseq
  %v681 = vshrl.u32 %v680, 7
  %v682 = vsub.s32 0, %v681
  %v683 = vrot.slane %v664, %v682
  %v684 = vlaneseq
  %v685 = vshrl.u32 %v684, 7
  %v686 = vsub.s32 0, %v685
  %v687 = vrot.slane %v672, %v686
  %v688 = vlaneseq
  %v689 = vshrl.u32 %v688, 7
  %v690 = vsub.s32 0, %v689
  %v691 = vrot.slane %v674, %v690
  %v692 = vlaneseq
  %v693 = vshrl.u32 %v692, 7
  %v694 = vsub.s32 0, %v693
  %v695 = vrot.slane %v657, %v694
  %v696 = vlaneseq
  %v697 = vshrl.u32 %v696, 7
  %v698 = vsub.s32 0, %v697
  %v699 = vrot.slane %v671, %v698
  %v700 = vlaneseq
  %v701 = vshrl.u32 %v700, 7
  %v702 = vsub.s32 0, %v701
  %v703 = vrot.slane %v673, %v702
  %v704 = vlaneseq
  %v705 = vshrl.u32 %v704, 7
  %v706 = vsub.s32 0, %v705
  %v707 = vrot.slane %v675, %v706
  %vm716 = vcmask 64512
  %v717 = vsel %vm716, %v149, 0
  %v719 = vsel %vm716, %v284, 0
  %721 = vmatprep.subr.mxu0 0.0
  %722 = vmatpush1.xpose.msra.mxu0 %v719
  %723 = vmatprep.subr.mxu0 0.0
  %724 = vmatpush1.xpose.msra.mxu0 0.0
  %725 = vmatprep.subr.mxu0 0.0
  %726 = vmatpush1.xpose.msra.mxu0 0.0
  %727 = vmatprep.subr.mxu0 0.0
  %728 = vmatpush1.xpose.msra.mxu0 0.0
  %729 = vmatprep.subr.mxu0 0.0
  %730 = vmatpush1.xpose.msra.mxu0 0.0
  %731 = vmatprep.subr.mxu0 0.0
  %732 = vmatpush1.xpose.msra.mxu0 0.0
  %733 = vmatprep.subr.mxu0 0.0
  %734 = vmatpush1.xpose.msra.mxu0 0.0
  %735 = vmatprep.subr.mxu0 0.0
  %736 = vmatpush1.xpose.msra.mxu0 0.0
  %737 = vmatprep.subr.mxu0 0.0
  %738 = vmatpush1.xpose.msra.mxu0 0.0
  %739 = vmatprep.subr.mxu0 0.0
  %740 = vmatpush1.xpose.msra.mxu0 0.0
  %741 = vmatprep.subr.mxu0 0.0
  %742 = vmatpush1.xpose.msra.mxu0 0.0
  %743 = vmatprep.subr.mxu0 0.0
  %744 = vmatpush1.xpose.msra.mxu0 0.0
  %745 = vmatprep.subr.mxu0 0.0
  %746 = vmatpush1.xpose.msra.mxu0 0.0
  %747 = vmatprep.subr.mxu0 0.0
  %748 = vmatpush1.xpose.msra.mxu0 0.0
  %749 = vmatprep.subr.mxu0 0.0
  %750 = vmatpush1.xpose.msra.mxu0 0.0
  %751 = vmatprep.subr.mxu0 0.0
  %752 = vmatpush1.xpose.msra.mxu0 0.0
  %753 = vmatprep.subr.mxu0 0.0
  %754 = vmatpush1.xpose.msra.mxu0 0.0
  %755 = vmatprep.subr.mxu0 0.0
  %756 = vmatpush1.xpose.msra.mxu0 0.0
  %757 = vmatprep.subr.mxu0 0.0
  %758 = vmatpush1.xpose.msra.mxu0 0.0
  %759 = vmatprep.subr.mxu0 0.0
  %760 = vmatpush1.xpose.msra.mxu0 0.0
  %761 = vmatprep.subr.mxu0 0.0
  %762 = vmatpush1.xpose.msra.mxu0 0.0
  %763 = vmatprep.subr.mxu0 0.0
  %764 = vmatpush1.xpose.msra.mxu0 0.0
  %765 = vmatprep.subr.mxu0 0.0
  %766 = vmatpush1.xpose.msra.mxu0 0.0
  %767 = vmatprep.subr.mxu0 0.0
  %768 = vmatpush1.xpose.msra.mxu0 0.0
  %769 = vmatprep.subr.mxu0 0.0
  %770 = vmatpush1.xpose.msra.mxu0 0.0
  %771 = vmatprep.subr.mxu0 0.0
  %772 = vmatpush1.xpose.msra.mxu0 0.0
  %773 = vmatprep.subr.mxu0 0.0
  %774 = vmatpush1.xpose.msra.mxu0 0.0
  %775 = vmatprep.subr.mxu0 0.0
  %776 = vmatpush1.xpose.msra.mxu0 0.0
  %777 = vmatprep.subr.mxu0 0.0
  %778 = vmatpush1.xpose.msra.mxu0 0.0
  %779 = vmatprep.subr.mxu0 0.0
  %780 = vmatpush1.xpose.msra.mxu0 0.0
  %781 = vmatprep.subr.mxu0 0.0
  %782 = vmatpush1.xpose.msra.mxu0 0.0
  %783 = vmatprep.subr.mxu0 0.0
  %784 = vmatpush1.xpose.msra.mxu0 0.0
  %785 = vmatprep.mubr.f32.mxu0 0.0
  %786 = vmatmul.mubr.f32.gmra.mrb[0].mxu0 %v717
  %v787 = vpop.f32.mrb[0].mxu0
  %v788 = vadd.f32 %v679, %v787
  %v789 = vpop.f32.mrb[0].mxu0
  %790 = vdwg.mxu0
  %v791 = vsel %vm716, %v154, 0
  %v793 = vsel %vm716, %v289, 0
  %795 = vmatprep.subr.mxu0 0.0
  %796 = vmatpush1.xpose.msra.mxu0 %v793
  %797 = vmatprep.subr.mxu0 0.0
  %798 = vmatpush1.xpose.msra.mxu0 0.0
  %799 = vmatprep.subr.mxu0 0.0
  %800 = vmatpush1.xpose.msra.mxu0 0.0
  %801 = vmatprep.subr.mxu0 0.0
  %802 = vmatpush1.xpose.msra.mxu0 0.0
  %803 = vmatprep.subr.mxu0 0.0
  %804 = vmatpush1.xpose.msra.mxu0 0.0
  %805 = vmatprep.subr.mxu0 0.0
  %806 = vmatpush1.xpose.msra.mxu0 0.0
  %807 = vmatprep.subr.mxu0 0.0
  %808 = vmatpush1.xpose.msra.mxu0 0.0
  %809 = vmatprep.subr.mxu0 0.0
  %810 = vmatpush1.xpose.msra.mxu0 0.0
  %811 = vmatprep.subr.mxu0 0.0
  %812 = vmatpush1.xpose.msra.mxu0 0.0
  %813 = vmatprep.subr.mxu0 0.0
  %814 = vmatpush1.xpose.msra.mxu0 0.0
  %815 = vmatprep.subr.mxu0 0.0
  %816 = vmatpush1.xpose.msra.mxu0 0.0
  %817 = vmatprep.subr.mxu0 0.0
  %818 = vmatpush1.xpose.msra.mxu0 0.0
  %819 = vmatprep.subr.mxu0 0.0
  %820 = vmatpush1.xpose.msra.mxu0 0.0
  %821 = vmatprep.subr.mxu0 0.0
  %822 = vmatpush1.xpose.msra.mxu0 0.0
  %823 = vmatprep.subr.mxu0 0.0
  %824 = vmatpush1.xpose.msra.mxu0 0.0
  %825 = vmatprep.subr.mxu0 0.0
  %826 = vmatpush1.xpose.msra.mxu0 0.0
  %827 = vmatprep.subr.mxu0 0.0
  %828 = vmatpush1.xpose.msra.mxu0 0.0
  %829 = vmatprep.subr.mxu0 0.0
  %830 = vmatpush1.xpose.msra.mxu0 0.0
  %831 = vmatprep.subr.mxu0 0.0
  %832 = vmatpush1.xpose.msra.mxu0 0.0
  %833 = vmatprep.subr.mxu0 0.0
  %834 = vmatpush1.xpose.msra.mxu0 0.0
  %835 = vmatprep.subr.mxu0 0.0
  %836 = vmatpush1.xpose.msra.mxu0 0.0
  %837 = vmatprep.subr.mxu0 0.0
  %838 = vmatpush1.xpose.msra.mxu0 0.0
  %839 = vmatprep.subr.mxu0 0.0
  %840 = vmatpush1.xpose.msra.mxu0 0.0
  %841 = vmatprep.subr.mxu0 0.0
  %842 = vmatpush1.xpose.msra.mxu0 0.0
  %843 = vmatprep.subr.mxu0 0.0
  %844 = vmatpush1.xpose.msra.mxu0 0.0
  %845 = vmatprep.subr.mxu0 0.0
  %846 = vmatpush1.xpose.msra.mxu0 0.0
  %847 = vmatprep.subr.mxu0 0.0
  %848 = vmatpush1.xpose.msra.mxu0 0.0
  %849 = vmatprep.subr.mxu0 0.0
  %850 = vmatpush1.xpose.msra.mxu0 0.0
  %851 = vmatprep.subr.mxu0 0.0
  %852 = vmatpush1.xpose.msra.mxu0 0.0
  %853 = vmatprep.subr.mxu0 0.0
  %854 = vmatpush1.xpose.msra.mxu0 0.0
  %855 = vmatprep.subr.mxu0 0.0
  %856 = vmatpush1.xpose.msra.mxu0 0.0
  %857 = vmatprep.subr.mxu0 0.0
  %858 = vmatpush1.xpose.msra.mxu0 0.0
  %859 = vmatprep.mubr.f32.mxu0 0.0
  %860 = vmatmul.mubr.f32.gmra.mrb[0].mxu0 %v791
  %v861 = vpop.f32.mrb[0].mxu0
  %v862 = vadd.f32 %v683, %v861
  %v863 = vpop.f32.mrb[0].mxu0
  %864 = vdwg.mxu0
  %v865 = vsel %vm716, %v159, 0
  %v867 = vsel %vm716, %v294, 0
  %869 = vmatprep.subr.mxu0 0.0
  %870 = vmatpush1.xpose.msra.mxu0 %v867
  %871 = vmatprep.subr.mxu0 0.0
  %872 = vmatpush1.xpose.msra.mxu0 0.0
  %873 = vmatprep.subr.mxu0 0.0
  %874 = vmatpush1.xpose.msra.mxu0 0.0
  %875 = vmatprep.subr.mxu0 0.0
  %876 = vmatpush1.xpose.msra.mxu0 0.0
  %877 = vmatprep.subr.mxu0 0.0
  %878 = vmatpush1.xpose.msra.mxu0 0.0
  %879 = vmatprep.subr.mxu0 0.0
  %880 = vmatpush1.xpose.msra.mxu0 0.0
  %881 = vmatprep.subr.mxu0 0.0
  %882 = vmatpush1.xpose.msra.mxu0 0.0
  %883 = vmatprep.subr.mxu0 0.0
  %884 = vmatpush1.xpose.msra.mxu0 0.0
  %885 = vmatprep.subr.mxu0 0.0
  %886 = vmatpush1.xpose.msra.mxu0 0.0
  %887 = vmatprep.subr.mxu0 0.0
  %888 = vmatpush1.xpose.msra.mxu0 0.0
  %889 = vmatprep.subr.mxu0 0.0
  %890 = vmatpush1.xpose.msra.mxu0 0.0
  %891 = vmatprep.subr.mxu0 0.0
  %892 = vmatpush1.xpose.msra.mxu0 0.0
  %893 = vmatprep.subr.mxu0 0.0
  %894 = vmatpush1.xpose.msra.mxu0 0.0
  %895 = vmatprep.subr.mxu0 0.0
  %896 = vmatpush1.xpose.msra.mxu0 0.0
  %897 = vmatprep.subr.mxu0 0.0
  %898 = vmatpush1.xpose.msra.mxu0 0.0
  %899 = vmatprep.subr.mxu0 0.0
  %900 = vmatpush1.xpose.msra.mxu0 0.0
  %901 = vmatprep.subr.mxu0 0.0
  %902 = vmatpush1.xpose.msra.mxu0 0.0
  %903 = vmatprep.subr.mxu0 0.0
  %904 = vmatpush1.xpose.msra.mxu0 0.0
  %905 = vmatprep.subr.mxu0 0.0
  %906 = vmatpush1.xpose.msra.mxu0 0.0
  %907 = vmatprep.subr.mxu0 0.0
  %908 = vmatpush1.xpose.msra.mxu0 0.0
  %909 = vmatprep.subr.mxu0 0.0
  %910 = vmatpush1.xpose.msra.mxu0 0.0
  %911 = vmatprep.subr.mxu0 0.0
  %912 = vmatpush1.xpose.msra.mxu0 0.0
  %913 = vmatprep.subr.mxu0 0.0
  %914 = vmatpush1.xpose.msra.mxu0 0.0
  %915 = vmatprep.subr.mxu0 0.0
  %916 = vmatpush1.xpose.msra.mxu0 0.0
  %917 = vmatprep.subr.mxu0 0.0
  %918 = vmatpush1.xpose.msra.mxu0 0.0
  %919 = vmatprep.subr.mxu0 0.0
  %920 = vmatpush1.xpose.msra.mxu0 0.0
  %921 = vmatprep.subr.mxu0 0.0
  %922 = vmatpush1.xpose.msra.mxu0 0.0
  %923 = vmatprep.subr.mxu0 0.0
  %924 = vmatpush1.xpose.msra.mxu0 0.0
  %925 = vmatprep.subr.mxu0 0.0
  %926 = vmatpush1.xpose.msra.mxu0 0.0
  %927 = vmatprep.subr.mxu0 0.0
  %928 = vmatpush1.xpose.msra.mxu0 0.0
  %929 = vmatprep.subr.mxu0 0.0
  %930 = vmatpush1.xpose.msra.mxu0 0.0
  %931 = vmatprep.subr.mxu0 0.0
  %932 = vmatpush1.xpose.msra.mxu0 0.0
  %933 = vmatprep.mubr.f32.mxu0 0.0
  %934 = vmatmul.mubr.f32.gmra.mrb[0].mxu0 %v865
  %v935 = vpop.f32.mrb[0].mxu0
  %v936 = vadd.f32 %v687, %v935
  %v937 = vpop.f32.mrb[0].mxu0
  %938 = vdwg.mxu0
  %v939 = vsel %vm716, %v164, 0
  %v941 = vsel %vm716, %v299, 0
  %943 = vmatprep.subr.mxu0 0.0
  %944 = vmatpush1.xpose.msra.mxu0 %v941
  %945 = vmatprep.subr.mxu0 0.0
  %946 = vmatpush1.xpose.msra.mxu0 0.0
  %947 = vmatprep.subr.mxu0 0.0
  %948 = vmatpush1.xpose.msra.mxu0 0.0
  %949 = vmatprep.subr.mxu0 0.0
  %950 = vmatpush1.xpose.msra.mxu0 0.0
  %951 = vmatprep.subr.mxu0 0.0
  %952 = vmatpush1.xpose.msra.mxu0 0.0
  %953 = vmatprep.subr.mxu0 0.0
  %954 = vmatpush1.xpose.msra.mxu0 0.0
  %955 = vmatprep.subr.mxu0 0.0
  %956 = vmatpush1.xpose.msra.mxu0 0.0
  %957 = vmatprep.subr.mxu0 0.0
  %958 = vmatpush1.xpose.msra.mxu0 0.0
  %959 = vmatprep.subr.mxu0 0.0
  %960 = vmatpush1.xpose.msra.mxu0 0.0
  %961 = vmatprep.subr.mxu0 0.0
  %962 = vmatpush1.xpose.msra.mxu0 0.0
  %963 = vmatprep.subr.mxu0 0.0
  %964 = vmatpush1.xpose.msra.mxu0 0.0
  %965 = vmatprep.subr.mxu0 0.0
  %966 = vmatpush1.xpose.msra.mxu0 0.0
  %967 = vmatprep.subr.mxu0 0.0
  %968 = vmatpush1.xpose.msra.mxu0 0.0
  %969 = vmatprep.subr.mxu0 0.0
  %970 = vmatpush1.xpose.msra.mxu0 0.0
  %971 = vmatprep.subr.mxu0 0.0
  %972 = vmatpush1.xpose.msra.mxu0 0.0
  %973 = vmatprep.subr.mxu0 0.0
  %974 = vmatpush1.xpose.msra.mxu0 0.0
  %975 = vmatprep.subr.mxu0 0.0
  %976 = vmatpush1.xpose.msra.mxu0 0.0
  %977 = vmatprep.subr.mxu0 0.0
  %978 = vmatpush1.xpose.msra.mxu0 0.0
  %979 = vmatprep.subr.mxu0 0.0
  %980 = vmatpush1.xpose.msra.mxu0 0.0
  %981 = vmatprep.subr.mxu0 0.0
  %982 = vmatpush1.xpose.msra.mxu0 0.0
  %983 = vmatprep.subr.mxu0 0.0
  %984 = vmatpush1.xpose.msra.mxu0 0.0
  %985 = vmatprep.subr.mxu0 0.0
  %986 = vmatpush1.xpose.msra.mxu0 0.0
  %987 = vmatprep.subr.mxu0 0.0
  %988 = vmatpush1.xpose.msra.mxu0 0.0
  %989 = vmatprep.subr.mxu0 0.0
  %990 = vmatpush1.xpose.msra.mxu0 0.0
  %991 = vmatprep.subr.mxu0 0.0
  %992 = vmatpush1.xpose.msra.mxu0 0.0
  %993 = vmatprep.subr.mxu0 0.0
  %994 = vmatpush1.xpose.msra.mxu0 0.0
  %995 = vmatprep.subr.mxu0 0.0
  %996 = vmatpush1.xpose.msra.mxu0 0.0
  %997 = vmatprep.subr.mxu0 0.0
  %998 = vmatpush1.xpose.msra.mxu0 0.0
  %999 = vmatprep.subr.mxu0 0.0
  %1000 = vmatpush1.xpose.msra.mxu0 0.0
  %1001 = vmatprep.subr.mxu0 0.0
  %1002 = vmatpush1.xpose.msra.mxu0 0.0
  %1003 = vmatprep.subr.mxu0 0.0
  %1004 = vmatpush1.xpose.msra.mxu0 0.0
  %1005 = vmatprep.subr.mxu0 0.0
  %1006 = vmatpush1.xpose.msra.mxu0 0.0
  %1007 = vmatprep.mubr.f32.mxu0 0.0
  %1008 = vmatmul.mubr.f32.gmra.mrb[0].mxu0 %v939
  %v1009 = vpop.f32.mrb[0].mxu0
  %v1010 = vadd.f32 %v691, %v1009
  %v1011 = vpop.f32.mrb[0].mxu0
  %1012 = vdwg.mxu0
  %v1013 = vsel %vm716, %v169, 0
  %v1015 = vsel %vm716, %v304, 0
  %1017 = vmatprep.subr.mxu0 0.0
  %1018 = vmatpush1.xpose.msra.mxu0 %v1015
  %1019 = vmatprep.subr.mxu0 0.0
  %1020 = vmatpush1.xpose.msra.mxu0 0.0
  %1021 = vmatprep.subr.mxu0 0.0
  %1022 = vmatpush1.xpose.msra.mxu0 0.0
  %1023 = vmatprep.subr.mxu0 0.0
  %1024 = vmatpush1.xpose.msra.mxu0 0.0
  %1025 = vmatprep.subr.mxu0 0.0
  %1026 = vmatpush1.xpose.msra.mxu0 0.0
  %1027 = vmatprep.subr.mxu0 0.0
  %1028 = vmatpush1.xpose.msra.mxu0 0.0
  %1029 = vmatprep.subr.mxu0 0.0
  %1030 = vmatpush1.xpose.msra.mxu0 0.0
  %1031 = vmatprep.subr.mxu0 0.0
  %1032 = vmatpush1.xpose.msra.mxu0 0.0
  %1033 = vmatprep.subr.mxu0 0.0
  %1034 = vmatpush1.xpose.msra.mxu0 0.0
  %1035 = vmatprep.subr.mxu0 0.0
  %1036 = vmatpush1.xpose.msra.mxu0 0.0
  %1037 = vmatprep.subr.mxu0 0.0
  %1038 = vmatpush1.xpose.msra.mxu0 0.0
  %1039 = vmatprep.subr.mxu0 0.0
  %1040 = vmatpush1.xpose.msra.mxu0 0.0
  %1041 = vmatprep.subr.mxu0 0.0
  %1042 = vmatpush1.xpose.msra.mxu0 0.0
  %1043 = vmatprep.subr.mxu0 0.0
  %1044 = vmatpush1.xpose.msra.mxu0 0.0
  %1045 = vmatprep.subr.mxu0 0.0
  %1046 = vmatpush1.xpose.msra.mxu0 0.0
  %1047 = vmatprep.subr.mxu0 0.0
  %1048 = vmatpush1.xpose.msra.mxu0 0.0
  %1049 = vmatprep.subr.mxu0 0.0
  %1050 = vmatpush1.xpose.msra.mxu0 0.0
  %1051 = vmatprep.subr.mxu0 0.0
  %1052 = vmatpush1.xpose.msra.mxu0 0.0
  %1053 = vmatprep.subr.mxu0 0.0
  %1054 = vmatpush1.xpose.msra.mxu0 0.0
  %1055 = vmatprep.subr.mxu0 0.0
  %1056 = vmatpush1.xpose.msra.mxu0 0.0
  %1057 = vmatprep.subr.mxu0 0.0
  %1058 = vmatpush1.xpose.msra.mxu0 0.0
  %1059 = vmatprep.subr.mxu0 0.0
  %1060 = vmatpush1.xpose.msra.mxu0 0.0
  %1061 = vmatprep.subr.mxu0 0.0
  %1062 = vmatpush1.xpose.msra.mxu0 0.0
  %1063 = vmatprep.subr.mxu0 0.0
  %1064 = vmatpush1.xpose.msra.mxu0 0.0
  %1065 = vmatprep.subr.mxu0 0.0
  %1066 = vmatpush1.xpose.msra.mxu0 0.0
  %1067 = vmatprep.subr.mxu0 0.0
  %1068 = vmatpush1.xpose.msra.mxu0 0.0
  %1069 = vmatprep.subr.mxu0 0.0
  %1070 = vmatpush1.xpose.msra.mxu0 0.0
  %1071 = vmatprep.subr.mxu0 0.0
  %1072 = vmatpush1.xpose.msra.mxu0 0.0
  %1073 = vmatprep.subr.mxu0 0.0
  %1074 = vmatpush1.xpose.msra.mxu0 0.0
  %1075 = vmatprep.subr.mxu0 0.0
  %1076 = vmatpush1.xpose.msra.mxu0 0.0
  %1077 = vmatprep.subr.mxu0 0.0
  %1078 = vmatpush1.xpose.msra.mxu0 0.0
  %1079 = vmatprep.subr.mxu0 0.0
  %1080 = vmatpush1.xpose.msra.mxu0 0.0
  %1081 = vmatprep.mubr.f32.mxu0 0.0
  %1082 = vmatmul.mubr.f32.gmra.mrb[0].mxu0 %v1013
  %v1083 = vpop.f32.mrb[0].mxu0
  %v1084 = vadd.f32 %v695, %v1083
  %v1085 = vpop.f32.mrb[0].mxu0
  %1086 = vdwg.mxu0
  %v1087 = vsel %vm716, %v174, 0
  %v1089 = vsel %vm716, %v309, 0
  %1091 = vmatprep.subr.mxu0 0.0
  %1092 = vmatpush1.xpose.msra.mxu0 %v1089
  %1093 = vmatprep.subr.mxu0 0.0
  %1094 = vmatpush1.xpose.msra.mxu0 0.0
  %1095 = vmatprep.subr.mxu0 0.0
  %1096 = vmatpush1.xpose.msra.mxu0 0.0
  %1097 = vmatprep.subr.mxu0 0.0
  %1098 = vmatpush1.xpose.msra.mxu0 0.0
  %1099 = vmatprep.subr.mxu0 0.0
  %1100 = vmatpush1.xpose.msra.mxu0 0.0
  %1101 = vmatprep.subr.mxu0 0.0
  %1102 = vmatpush1.xpose.msra.mxu0 0.0
  %1103 = vmatprep.subr.mxu0 0.0
  %1104 = vmatpush1.xpose.msra.mxu0 0.0
  %1105 = vmatprep.subr.mxu0 0.0
  %1106 = vmatpush1.xpose.msra.mxu0 0.0
  %1107 = vmatprep.subr.mxu0 0.0
  %1108 = vmatpush1.xpose.msra.mxu0 0.0
  %1109 = vmatprep.subr.mxu0 0.0
  %1110 = vmatpush1.xpose.msra.mxu0 0.0
  %1111 = vmatprep.subr.mxu0 0.0
  %1112 = vmatpush1.xpose.msra.mxu0 0.0
  %1113 = vmatprep.subr.mxu0 0.0
  %1114 = vmatpush1.xpose.msra.mxu0 0.0
  %1115 = vmatprep.subr.mxu0 0.0
  %1116 = vmatpush1.xpose.msra.mxu0 0.0
  %1117 = vmatprep.subr.mxu0 0.0
  %1118 = vmatpush1.xpose.msra.mxu0 0.0
  %1119 = vmatprep.subr.mxu0 0.0
  %1120 = vmatpush1.xpose.msra.mxu0 0.0
  %1121 = vmatprep.subr.mxu0 0.0
  %1122 = vmatpush1.xpose.msra.mxu0 0.0
  %1123 = vmatprep.subr.mxu0 0.0
  %1124 = vmatpush1.xpose.msra.mxu0 0.0
  %1125 = vmatprep.subr.mxu0 0.0
  %1126 = vmatpush1.xpose.msra.mxu0 0.0
  %1127 = vmatprep.subr.mxu0 0.0
  %1128 = vmatpush1.xpose.msra.mxu0 0.0
  %1129 = vmatprep.subr.mxu0 0.0
  %1130 = vmatpush1.xpose.msra.mxu0 0.0
  %1131 = vmatprep.subr.mxu0 0.0
  %1132 = vmatpush1.xpose.msra.mxu0 0.0
  %1133 = vmatprep.subr.mxu0 0.0
  %1134 = vmatpush1.xpose.msra.mxu0 0.0
  %1135 = vmatprep.subr.mxu0 0.0
  %1136 = vmatpush1.xpose.msra.mxu0 0.0
  %1137 = vmatprep.subr.mxu0 0.0
  %1138 = vmatpush1.xpose.msra.mxu0 0.0
  %1139 = vmatprep.subr.mxu0 0.0
  %1140 = vmatpush1.xpose.msra.mxu0 0.0
  %1141 = vmatprep.subr.mxu0 0.0
  %1142 = vmatpush1.xpose.msra.mxu0 0.0
  %1143 = vmatprep.subr.mxu0 0.0
  %1144 = vmatpush1.xpose.msra.mxu0 0.0
  %1145 = vmatprep.subr.mxu0 0.0
  %1146 = vmatpush1.xpose.msra.mxu0 0.0
  %1147 = vmatprep.subr.mxu0 0.0
  %1148 = vmatpush1.xpose.msra.mxu0 0.0
  %1149 = vmatprep.subr.mxu0 0.0
  %1150 = vmatpush1.xpose.msra.mxu0 0.0
  %1151 = vmatprep.subr.mxu0 0.0
  %1152 = vmatpush1.xpose.msra.mxu0 0.0
  %1153 = vmatprep.subr.mxu0 0.0
  %1154 = vmatpush1.xpose.msra.mxu0 0.0
  %1155 = vmatprep.mubr.f32.mxu0 0.0
  %1156 = vmatmul.mubr.f32.gmra.mrb[0].mxu0 %v1087
  %v1157 = vpop.f32.mrb[0].mxu0
  %v1158 = vadd.f32 %v699, %v1157
  %v1159 = vpop.f32.mrb[0].mxu0
  %1160 = vdwg.mxu0
  %v1161 = vsel %vm716, %v179, 0
  %v1163 = vsel %vm716, %v314, 0
  %1165 = vmatprep.subr.mxu0 0.0
  %1166 = vmatpush1.xpose.msra.mxu0 %v1163
  %1167 = vmatprep.subr.mxu0 0.0
  %1168 = vmatpush1.xpose.msra.mxu0 0.0
  %1169 = vmatprep.subr.mxu0 0.0
  %1170 = vmatpush1.xpose.msra.mxu0 0.0
  %1171 = vmatprep.subr.mxu0 0.0
  %1172 = vmatpush1.xpose.msra.mxu0 0.0
  %1173 = vmatprep.subr.mxu0 0.0
  %1174 = vmatpush1.xpose.msra.mxu0 0.0
  %1175 = vmatprep.subr.mxu0 0.0
  %1176 = vmatpush1.xpose.msra.mxu0 0.0
  %1177 = vmatprep.subr.mxu0 0.0
  %1178 = vmatpush1.xpose.msra.mxu0 0.0
  %1179 = vmatprep.subr.mxu0 0.0
  %1180 = vmatpush1.xpose.msra.mxu0 0.0
  %1181 = vmatprep.subr.mxu0 0.0
  %1182 = vmatpush1.xpose.msra.mxu0 0.0
  %1183 = vmatprep.subr.mxu0 0.0
  %1184 = vmatpush1.xpose.msra.mxu0 0.0
  %1185 = vmatprep.subr.mxu0 0.0
  %1186 = vmatpush1.xpose.msra.mxu0 0.0
  %1187 = vmatprep.subr.mxu0 0.0
  %1188 = vmatpush1.xpose.msra.mxu0 0.0
  %1189 = vmatprep.subr.mxu0 0.0
  %1190 = vmatpush1.xpose.msra.mxu0 0.0
  %1191 = vmatprep.subr.mxu0 0.0
  %1192 = vmatpush1.xpose.msra.mxu0 0.0
  %1193 = vmatprep.subr.mxu0 0.0
  %1194 = vmatpush1.xpose.msra.mxu0 0.0
  %1195 = vmatprep.subr.mxu0 0.0
  %1196 = vmatpush1.xpose.msra.mxu0 0.0
  %1197 = vmatprep.subr.mxu0 0.0
  %1198 = vmatpush1.xpose.msra.mxu0 0.0
  %1199 = vmatprep.subr.mxu0 0.0
  %1200 = vmatpush1.xpose.msra.mxu0 0.0
  %1201 = vmatprep.subr.mxu0 0.0
  %1202 = vmatpush1.xpose.msra.mxu0 0.0
  %1203 = vmatprep.subr.mxu0 0.0
  %1204 = vmatpush1.xpose.msra.mxu0 0.0
  %1205 = vmatprep.subr.mxu0 0.0
  %1206 = vmatpush1.xpose.msra.mxu0 0.0
  %1207 = vmatprep.subr.mxu0 0.0
  %1208 = vmatpush1.xpose.msra.mxu0 0.0
  %1209 = vmatprep.subr.mxu0 0.0
  %1210 = vmatpush1.xpose.msra.mxu0 0.0
  %1211 = vmatprep.subr.mxu0 0.0
  %1212 = vmatpush1.xpose.msra.mxu0 0.0
  %1213 = vmatprep.subr.mxu0 0.0
  %1214 = vmatpush1.xpose.msra.mxu0 0.0
  %1215 = vmatprep.subr.mxu0 0.0
  %1216 = vmatpush1.xpose.msra.mxu0 0.0
  %1217 = vmatprep.subr.mxu0 0.0
  %1218 = vmatpush1.xpose.msra.mxu0 0.0
  %1219 = vmatprep.subr.mxu0 0.0
  %1220 = vmatpush1.xpose.msra.mxu0 0.0
  %1221 = vmatprep.subr.mxu0 0.0
  %1222 = vmatpush1.xpose.msra.mxu0 0.0
  %1223 = vmatprep.subr.mxu0 0.0
  %1224 = vmatpush1.xpose.msra.mxu0 0.0
  %1225 = vmatprep.subr.mxu0 0.0
  %1226 = vmatpush1.xpose.msra.mxu0 0.0
  %1227 = vmatprep.subr.mxu0 0.0
  %1228 = vmatpush1.xpose.msra.mxu0 0.0
  %1229 = vmatprep.mubr.f32.mxu0 0.0
  %1230 = vmatmul.mubr.f32.gmra.mrb[0].mxu0 %v1161
  %v1231 = vpop.f32.mrb[0].mxu0
  %v1232 = vadd.f32 %v703, %v1231
  %v1233 = vpop.f32.mrb[0].mxu0
  %1234 = vdwg.mxu0
  %v1235 = vsel %vm716, %v184, 0
  %v1237 = vsel %vm716, %v319, 0
  %1239 = vmatprep.subr.mxu0 0.0
  %1240 = vmatpush1.xpose.msra.mxu0 %v1237
  %1241 = vmatprep.subr.mxu0 0.0
  %1242 = vmatpush1.xpose.msra.mxu0 0.0
  %1243 = vmatprep.subr.mxu0 0.0
  %1244 = vmatpush1.xpose.msra.mxu0 0.0
  %1245 = vmatprep.subr.mxu0 0.0
  %1246 = vmatpush1.xpose.msra.mxu0 0.0
  %1247 = vmatprep.subr.mxu0 0.0
  %1248 = vmatpush1.xpose.msra.mxu0 0.0
  %1249 = vmatprep.subr.mxu0 0.0
  %1250 = vmatpush1.xpose.msra.mxu0 0.0
  %1251 = vmatprep.subr.mxu0 0.0
  %1252 = vmatpush1.xpose.msra.mxu0 0.0
  %1253 = vmatprep.subr.mxu0 0.0
  %1254 = vmatpush1.xpose.msra.mxu0 0.0
  %1255 = vmatprep.subr.mxu0 0.0
  %1256 = vmatpush1.xpose.msra.mxu0 0.0
  %1257 = vmatprep.subr.mxu0 0.0
  %1258 = vmatpush1.xpose.msra.mxu0 0.0
  %1259 = vmatprep.subr.mxu0 0.0
  %1260 = vmatpush1.xpose.msra.mxu0 0.0
  %1261 = vmatprep.subr.mxu0 0.0
  %1262 = vmatpush1.xpose.msra.mxu0 0.0
  %1263 = vmatprep.subr.mxu0 0.0
  %1264 = vmatpush1.xpose.msra.mxu0 0.0
  %1265 = vmatprep.subr.mxu0 0.0
  %1266 = vmatpush1.xpose.msra.mxu0 0.0
  %1267 = vmatprep.subr.mxu0 0.0
  %1268 = vmatpush1.xpose.msra.mxu0 0.0
  %1269 = vmatprep.subr.mxu0 0.0
  %1270 = vmatpush1.xpose.msra.mxu0 0.0
  %1271 = vmatprep.subr.mxu0 0.0
  %1272 = vmatpush1.xpose.msra.mxu0 0.0
  %1273 = vmatprep.subr.mxu0 0.0
  %1274 = vmatpush1.xpose.msra.mxu0 0.0
  %1275 = vmatprep.subr.mxu0 0.0
  %1276 = vmatpush1.xpose.msra.mxu0 0.0
  %1277 = vmatprep.subr.mxu0 0.0
  %1278 = vmatpush1.xpose.msra.mxu0 0.0
  %1279 = vmatprep.subr.mxu0 0.0
  %1280 = vmatpush1.xpose.msra.mxu0 0.0
  %1281 = vmatprep.subr.mxu0 0.0
  %1282 = vmatpush1.xpose.msra.mxu0 0.0
  %1283 = vmatprep.subr.mxu0 0.0
  %1284 = vmatpush1.xpose.msra.mxu0 0.0
  %1285 = vmatprep.subr.mxu0 0.0
  %1286 = vmatpush1.xpose.msra.mxu0 0.0
  %1287 = vmatprep.subr.mxu0 0.0
  %1288 = vmatpush1.xpose.msra.mxu0 0.0
  %1289 = vmatprep.subr.mxu0 0.0
  %1290 = vmatpush1.xpose.msra.mxu0 0.0
  %1291 = vmatprep.subr.mxu0 0.0
  %1292 = vmatpush1.xpose.msra.mxu0 0.0
  %1293 = vmatprep.subr.mxu0 0.0
  %1294 = vmatpush1.xpose.msra.mxu0 0.0
  %1295 = vmatprep.subr.mxu0 0.0
  %1296 = vmatpush1.xpose.msra.mxu0 0.0
  %1297 = vmatprep.subr.mxu0 0.0
  %1298 = vmatpush1.xpose.msra.mxu0 0.0
  %1299 = vmatprep.subr.mxu0 0.0
  %1300 = vmatpush1.xpose.msra.mxu0 0.0
  %1301 = vmatprep.subr.mxu0 0.0
  %1302 = vmatpush1.xpose.msra.mxu0 0.0
  %1303 = vmatprep.mubr.f32.mxu0 0.0
  %1304 = vmatmul.mubr.f32.gmra.mrb[0].mxu0 %v1235
  %v1305 = vpop.f32.mrb[0].mxu0
  %v1306 = vadd.f32 %v707, %v1305
  %v1307 = vpop.f32.mrb[0].mxu0
  %1308 = vdwg.mxu0
  %v1309 = vsel %vm716, %v443, 0
  %v1311 = vsel %vm716, %v499, 0
  %1313 = vmatprep.subr.mxu0 0.0
  %1314 = vmatpush1.xpose.msra.mxu0 %v1311
  %1315 = vmatprep.subr.mxu0 0.0
  %1316 = vmatpush1.xpose.msra.mxu0 0.0
  %1317 = vmatprep.subr.mxu0 0.0
  %1318 = vmatpush1.xpose.msra.mxu0 0.0
  %1319 = vmatprep.subr.mxu0 0.0
  %1320 = vmatpush1.xpose.msra.mxu0 0.0
  %1321 = vmatprep.subr.mxu0 0.0
  %1322 = vmatpush1.xpose.msra.mxu0 0.0
  %1323 = vmatprep.subr.mxu0 0.0
  %1324 = vmatpush1.xpose.msra.mxu0 0.0
  %1325 = vmatprep.subr.mxu0 0.0
  %1326 = vmatpush1.xpose.msra.mxu0 0.0
  %1327 = vmatprep.subr.mxu0 0.0
  %1328 = vmatpush1.xpose.msra.mxu0 0.0
  %1329 = vmatprep.subr.mxu0 0.0
  %1330 = vmatpush1.xpose.msra.mxu0 0.0
  %1331 = vmatprep.subr.mxu0 0.0
  %1332 = vmatpush1.xpose.msra.mxu0 0.0
  %1333 = vmatprep.subr.mxu0 0.0
  %1334 = vmatpush1.xpose.msra.mxu0 0.0
  %1335 = vmatprep.subr.mxu0 0.0
  %1336 = vmatpush1.xpose.msra.mxu0 0.0
  %1337 = vmatprep.subr.mxu0 0.0
  %1338 = vmatpush1.xpose.msra.mxu0 0.0
  %1339 = vmatprep.subr.mxu0 0.0
  %1340 = vmatpush1.xpose.msra.mxu0 0.0
  %1341 = vmatprep.subr.mxu0 0.0
  %1342 = vmatpush1.xpose.msra.mxu0 0.0
  %1343 = vmatprep.subr.mxu0 0.0
  %1344 = vmatpush1.xpose.msra.mxu0 0.0
  %1345 = vmatprep.subr.mxu0 0.0
  %1346 = vmatpush1.xpose.msra.mxu0 0.0
  %1347 = vmatprep.subr.mxu0 0.0
  %1348 = vmatpush1.xpose.msra.mxu0 0.0
  %1349 = vmatprep.subr.mxu0 0.0
  %1350 = vmatpush1.xpose.msra.mxu0 0.0
  %1351 = vmatprep.subr.mxu0 0.0
  %1352 = vmatpush1.xpose.msra.mxu0 0.0
  %1353 = vmatprep.subr.mxu0 0.0
  %1354 = vmatpush1.xpose.msra.mxu0 0.0
  %1355 = vmatprep.subr.mxu0 0.0
  %1356 = vmatpush1.xpose.msra.mxu0 0.0
  %1357 = vmatprep.subr.mxu0 0.0
  %1358 = vmatpush1.xpose.msra.mxu0 0.0
  %1359 = vmatprep.subr.mxu0 0.0
  %1360 = vmatpush1.xpose.msra.mxu0 0.0
  %1361 = vmatprep.subr.mxu0 0.0
  %1362 = vmatpush1.xpose.msra.mxu0 0.0
  %1363 = vmatprep.subr.mxu0 0.0
  %1364 = vmatpush1.xpose.msra.mxu0 0.0
  %1365 = vmatprep.subr.mxu0 0.0
  %1366 = vmatpush1.xpose.msra.mxu0 0.0
  %1367 = vmatprep.subr.mxu0 0.0
  %1368 = vmatpush1.xpose.msra.mxu0 0.0
  %1369 = vmatprep.subr.mxu0 0.0
  %1370 = vmatpush1.xpose.msra.mxu0 0.0
  %1371 = vmatprep.subr.mxu0 0.0
  %1372 = vmatpush1.xpose.msra.mxu0 0.0
  %1373 = vmatprep.subr.mxu0 0.0
  %1374 = vmatpush1.xpose.msra.mxu0 0.0
  %1375 = vmatprep.subr.mxu0 0.0
  %1376 = vmatpush1.xpose.msra.mxu0 0.0
  %1377 = vmatprep.mubr.f32.mxu0 0.0
  %1378 = vmatmul.mubr.f32.gmra.mrb[0].mxu0 %v1309
  %v1379 = vpop.f32.mrb[0].mxu0
  %v1380 = vadd.f32 %v679, %v1379
  %v1381 = vpop.f32.mrb[0].mxu0
  %1382 = vdwg.mxu0
  %v1383 = vsel %vm716, %v445, 0
  %v1385 = vsel %vm716, %v501, 0
  %1387 = vmatprep.subr.mxu0 0.0
  %1388 = vmatpush1.xpose.msra.mxu0 %v1385
  %1389 = vmatprep.subr.mxu0 0.0
  %1390 = vmatpush1.xpose.msra.mxu0 0.0
  %1391 = vmatprep.subr.mxu0 0.0
  %1392 = vmatpush1.xpose.msra.mxu0 0.0
  %1393 = vmatprep.subr.mxu0 0.0
  %1394 = vmatpush1.xpose.msra.mxu0 0.0
  %1395 = vmatprep.subr.mxu0 0.0
  %1396 = vmatpush1.xpose.msra.mxu0 0.0
  %1397 = vmatprep.subr.mxu0 0.0
  %1398 = vmatpush1.xpose.msra.mxu0 0.0
  %1399 = vmatprep.subr.mxu0 0.0
  %1400 = vmatpush1.xpose.msra.mxu0 0.0
  %1401 = vmatprep.subr.mxu0 0.0
  %1402 = vmatpush1.xpose.msra.mxu0 0.0
  %1403 = vmatprep.subr.mxu0 0.0
  %1404 = vmatpush1.xpose.msra.mxu0 0.0
  %1405 = vmatprep.subr.mxu0 0.0
  %1406 = vmatpush1.xpose.msra.mxu0 0.0
  %1407 = vmatprep.subr.mxu0 0.0
  %1408 = vmatpush1.xpose.msra.mxu0 0.0
  %1409 = vmatprep.subr.mxu0 0.0
  %1410 = vmatpush1.xpose.msra.mxu0 0.0
  %1411 = vmatprep.subr.mxu0 0.0
  %1412 = vmatpush1.xpose.msra.mxu0 0.0
  %1413 = vmatprep.subr.mxu0 0.0
  %1414 = vmatpush1.xpose.msra.mxu0 0.0
  %1415 = vmatprep.subr.mxu0 0.0
  %1416 = vmatpush1.xpose.msra.mxu0 0.0
  %1417 = vmatprep.subr.mxu0 0.0
  %1418 = vmatpush1.xpose.msra.mxu0 0.0
  %1419 = vmatprep.subr.mxu0 0.0
  %1420 = vmatpush1.xpose.msra.mxu0 0.0
  %1421 = vmatprep.subr.mxu0 0.0
  %1422 = vmatpush1.xpose.msra.mxu0 0.0
  %1423 = vmatprep.subr.mxu0 0.0
  %1424 = vmatpush1.xpose.msra.mxu0 0.0
  %1425 = vmatprep.subr.mxu0 0.0
  %1426 = vmatpush1.xpose.msra.mxu0 0.0
  %1427 = vmatprep.subr.mxu0 0.0
  %1428 = vmatpush1.xpose.msra.mxu0 0.0
  %1429 = vmatprep.subr.mxu0 0.0
  %1430 = vmatpush1.xpose.msra.mxu0 0.0
  %1431 = vmatprep.subr.mxu0 0.0
  %1432 = vmatpush1.xpose.msra.mxu0 0.0
  %1433 = vmatprep.subr.mxu0 0.0
  %1434 = vmatpush1.xpose.msra.mxu0 0.0
  %1435 = vmatprep.subr.mxu0 0.0
  %1436 = vmatpush1.xpose.msra.mxu0 0.0
  %1437 = vmatprep.subr.mxu0 0.0
  %1438 = vmatpush1.xpose.msra.mxu0 0.0
  %1439 = vmatprep.subr.mxu0 0.0
  %1440 = vmatpush1.xpose.msra.mxu0 0.0
  %1441 = vmatprep.subr.mxu0 0.0
  %1442 = vmatpush1.xpose.msra.mxu0 0.0
  %1443 = vmatprep.subr.mxu0 0.0
  %1444 = vmatpush1.xpose.msra.mxu0 0.0
  %1445 = vmatprep.subr.mxu0 0.0
  %1446 = vmatpush1.xpose.msra.mxu0 0.0
  %1447 = vmatprep.subr.mxu0 0.0
  %1448 = vmatpush1.xpose.msra.mxu0 0.0
  %1449 = vmatprep.subr.mxu0 0.0
  %1450 = vmatpush1.xpose.msra.mxu0 0.0
  %1451 = vmatprep.mubr.f32.mxu0 0.0
  %1452 = vmatmul.mubr.f32.gmra.mrb[0].mxu0 %v1383
  %v1453 = vpop.f32.mrb[0].mxu0
  %v1454 = vadd.f32 %v683, %v1453
  %v1455 = vpop.f32.mrb[0].mxu0
  %1456 = vdwg.mxu0
  %v1457 = vsel %vm716, %v447, 0
  %v1459 = vsel %vm716, %v503, 0
  %1461 = vmatprep.subr.mxu0 0.0
  %1462 = vmatpush1.xpose.msra.mxu0 %v1459
  %1463 = vmatprep.subr.mxu0 0.0
  %1464 = vmatpush1.xpose.msra.mxu0 0.0
  %1465 = vmatprep.subr.mxu0 0.0
  %1466 = vmatpush1.xpose.msra.mxu0 0.0
  %1467 = vmatprep.subr.mxu0 0.0
  %1468 = vmatpush1.xpose.msra.mxu0 0.0
  %1469 = vmatprep.subr.mxu0 0.0
  %1470 = vmatpush1.xpose.msra.mxu0 0.0
  %1471 = vmatprep.subr.mxu0 0.0
  %1472 = vmatpush1.xpose.msra.mxu0 0.0
  %1473 = vmatprep.subr.mxu0 0.0
  %1474 = vmatpush1.xpose.msra.mxu0 0.0
  %1475 = vmatprep.subr.mxu0 0.0
  %1476 = vmatpush1.xpose.msra.mxu0 0.0
  %1477 = vmatprep.subr.mxu0 0.0
  %1478 = vmatpush1.xpose.msra.mxu0 0.0
  %1479 = vmatprep.subr.mxu0 0.0
  %1480 = vmatpush1.xpose.msra.mxu0 0.0
  %1481 = vmatprep.subr.mxu0 0.0
  %1482 = vmatpush1.xpose.msra.mxu0 0.0
  %1483 = vmatprep.subr.mxu0 0.0
  %1484 = vmatpush1.xpose.msra.mxu0 0.0
  %1485 = vmatprep.subr.mxu0 0.0
  %1486 = vmatpush1.xpose.msra.mxu0 0.0
  %1487 = vmatprep.subr.mxu0 0.0
  %1488 = vmatpush1.xpose.msra.mxu0 0.0
  %1489 = vmatprep.subr.mxu0 0.0
  %1490 = vmatpush1.xpose.msra.mxu0 0.0
  %1491 = vmatprep.subr.mxu0 0.0
  %1492 = vmatpush1.xpose.msra.mxu0 0.0
  %1493 = vmatprep.subr.mxu0 0.0
  %1494 = vmatpush1.xpose.msra.mxu0 0.0
  %1495 = vmatprep.subr.mxu0 0.0
  %1496 = vmatpush1.xpose.msra.mxu0 0.0
  %1497 = vmatprep.subr.mxu0 0.0
  %1498 = vmatpush1.xpose.msra.mxu0 0.0
  %1499 = vmatprep.subr.mxu0 0.0
  %1500 = vmatpush1.xpose.msra.mxu0 0.0
  %1501 = vmatprep.subr.mxu0 0.0
  %1502 = vmatpush1.xpose.msra.mxu0 0.0
  %1503 = vmatprep.subr.mxu0 0.0
  %1504 = vmatpush1.xpose.msra.mxu0 0.0
  %1505 = vmatprep.subr.mxu0 0.0
  %1506 = vmatpush1.xpose.msra.mxu0 0.0
  %1507 = vmatprep.subr.mxu0 0.0
  %1508 = vmatpush1.xpose.msra.mxu0 0.0
  %1509 = vmatprep.subr.mxu0 0.0
  %1510 = vmatpush1.xpose.msra.mxu0 0.0
  %1511 = vmatprep.subr.mxu0 0.0
  %1512 = vmatpush1.xpose.msra.mxu0 0.0
  %1513 = vmatprep.subr.mxu0 0.0
  %1514 = vmatpush1.xpose.msra.mxu0 0.0
  %1515 = vmatprep.subr.mxu0 0.0
  %1516 = vmatpush1.xpose.msra.mxu0 0.0
  %1517 = vmatprep.subr.mxu0 0.0
  %1518 = vmatpush1.xpose.msra.mxu0 0.0
  %1519 = vmatprep.subr.mxu0 0.0
  %1520 = vmatpush1.xpose.msra.mxu0 0.0
  %1521 = vmatprep.subr.mxu0 0.0
  %1522 = vmatpush1.xpose.msra.mxu0 0.0
  %1523 = vmatprep.subr.mxu0 0.0
  %1524 = vmatpush1.xpose.msra.mxu0 0.0
  %1525 = vmatprep.mubr.f32.mxu0 0.0
  %1526 = vmatmul.mubr.f32.gmra.mrb[0].mxu0 %v1457
  %v1527 = vpop.f32.mrb[0].mxu0
  %v1528 = vadd.f32 %v687, %v1527
  %v1529 = vpop.f32.mrb[0].mxu0
  %1530 = vdwg.mxu0
  %v1531 = vsel %vm716, %v449, 0
  %v1533 = vsel %vm716, %v505, 0
  %1535 = vmatprep.subr.mxu0 0.0
  %1536 = vmatpush1.xpose.msra.mxu0 %v1533
  %1537 = vmatprep.subr.mxu0 0.0
  %1538 = vmatpush1.xpose.msra.mxu0 0.0
  %1539 = vmatprep.subr.mxu0 0.0
  %1540 = vmatpush1.xpose.msra.mxu0 0.0
  %1541 = vmatprep.subr.mxu0 0.0
  %1542 = vmatpush1.xpose.msra.mxu0 0.0
  %1543 = vmatprep.subr.mxu0 0.0
  %1544 = vmatpush1.xpose.msra.mxu0 0.0
  %1545 = vmatprep.subr.mxu0 0.0
  %1546 = vmatpush1.xpose.msra.mxu0 0.0
  %1547 = vmatprep.subr.mxu0 0.0
  %1548 = vmatpush1.xpose.msra.mxu0 0.0
  %1549 = vmatprep.subr.mxu0 0.0
  %1550 = vmatpush1.xpose.msra.mxu0 0.0
  %1551 = vmatprep.subr.mxu0 0.0
  %1552 = vmatpush1.xpose.msra.mxu0 0.0
  %1553 = vmatprep.subr.mxu0 0.0
  %1554 = vmatpush1.xpose.msra.mxu0 0.0
  %1555 = vmatprep.subr.mxu0 0.0
  %1556 = vmatpush1.xpose.msra.mxu0 0.0
  %1557 = vmatprep.subr.mxu0 0.0
  %1558 = vmatpush1.xpose.msra.mxu0 0.0
  %1559 = vmatprep.subr.mxu0 0.0
  %1560 = vmatpush1.xpose.msra.mxu0 0.0
  %1561 = vmatprep.subr.mxu0 0.0
  %1562 = vmatpush1.xpose.msra.mxu0 0.0
  %1563 = vmatprep.subr.mxu0 0.0
  %1564 = vmatpush1.xpose.msra.mxu0 0.0
  %1565 = vmatprep.subr.mxu0 0.0
  %1566 = vmatpush1.xpose.msra.mxu0 0.0
  %1567 = vmatprep.subr.mxu0 0.0
  %1568 = vmatpush1.xpose.msra.mxu0 0.0
  %1569 = vmatprep.subr.mxu0 0.0
  %1570 = vmatpush1.xpose.msra.mxu0 0.0
  %1571 = vmatprep.subr.mxu0 0.0
  %1572 = vmatpush1.xpose.msra.mxu0 0.0
  %1573 = vmatprep.subr.mxu0 0.0
  %1574 = vmatpush1.xpose.msra.mxu0 0.0
  %1575 = vmatprep.subr.mxu0 0.0
  %1576 = vmatpush1.xpose.msra.mxu0 0.0
  %1577 = vmatprep.subr.mxu0 0.0
  %1578 = vmatpush1.xpose.msra.mxu0 0.0
  %1579 = vmatprep.subr.mxu0 0.0
  %1580 = vmatpush1.xpose.msra.mxu0 0.0
  %1581 = vmatprep.subr.mxu0 0.0
  %1582 = vmatpush1.xpose.msra.mxu0 0.0
  %1583 = vmatprep.subr.mxu0 0.0
  %1584 = vmatpush1.xpose.msra.mxu0 0.0
  %1585 = vmatprep.subr.mxu0 0.0
  %1586 = vmatpush1.xpose.msra.mxu0 0.0
  %1587 = vmatprep.subr.mxu0 0.0
  %1588 = vmatpush1.xpose.msra.mxu0 0.0
  %1589 = vmatprep.subr.mxu0 0.0
  %1590 = vmatpush1.xpose.msra.mxu0 0.0
  %1591 = vmatprep.subr.mxu0 0.0
  %1592 = vmatpush1.xpose.msra.mxu0 0.0
  %1593 = vmatprep.subr.mxu0 0.0
  %1594 = vmatpush1.xpose.msra.mxu0 0.0
  %1595 = vmatprep.subr.mxu0 0.0
  %1596 = vmatpush1.xpose.msra.mxu0 0.0
  %1597 = vmatprep.subr.mxu0 0.0
  %1598 = vmatpush1.xpose.msra.mxu0 0.0
  %1599 = vmatprep.mubr.f32.mxu0 0.0
  %1600 = vmatmul.mubr.f32.gmra.mrb[0].mxu0 %v1531
  %v1601 = vpop.f32.mrb[0].mxu0
  %v1602 = vadd.f32 %v691, %v1601
  %v1603 = vpop.f32.mrb[0].mxu0
  %1604 = vdwg.mxu0
  %v1605 = vsel %vm716, %v451, 0
  %v1607 = vsel %vm716, %v507, 0
  %1609 = vmatprep.subr.mxu0 0.0
  %1610 = vmatpush1.xpose.msra.mxu0 %v1607
  %1611 = vmatprep.subr.mxu0 0.0
  %1612 = vmatpush1.xpose.msra.mxu0 0.0
  %1613 = vmatprep.subr.mxu0 0.0
  %1614 = vmatpush1.xpose.msra.mxu0 0.0
  %1615 = vmatprep.subr.mxu0 0.0
  %1616 = vmatpush1.xpose.msra.mxu0 0.0
  %1617 = vmatprep.subr.mxu0 0.0
  %1618 = vmatpush1.xpose.msra.mxu0 0.0
  %1619 = vmatprep.subr.mxu0 0.0
  %1620 = vmatpush1.xpose.msra.mxu0 0.0
  %1621 = vmatprep.subr.mxu0 0.0
  %1622 = vmatpush1.xpose.msra.mxu0 0.0
  %1623 = vmatprep.subr.mxu0 0.0
  %1624 = vmatpush1.xpose.msra.mxu0 0.0
  %1625 = vmatprep.subr.mxu0 0.0
  %1626 = vmatpush1.xpose.msra.mxu0 0.0
  %1627 = vmatprep.subr.mxu0 0.0
  %1628 = vmatpush1.xpose.msra.mxu0 0.0
  %1629 = vmatprep.subr.mxu0 0.0
  %1630 = vmatpush1.xpose.msra.mxu0 0.0
  %1631 = vmatprep.subr.mxu0 0.0
  %1632 = vmatpush1.xpose.msra.mxu0 0.0
  %1633 = vmatprep.subr.mxu0 0.0
  %1634 = vmatpush1.xpose.msra.mxu0 0.0
  %1635 = vmatprep.subr.mxu0 0.0
  %1636 = vmatpush1.xpose.msra.mxu0 0.0
  %1637 = vmatprep.subr.mxu0 0.0
  %1638 = vmatpush1.xpose.msra.mxu0 0.0
  %1639 = vmatprep.subr.mxu0 0.0
  %1640 = vmatpush1.xpose.msra.mxu0 0.0
  %1641 = vmatprep.subr.mxu0 0.0
  %1642 = vmatpush1.xpose.msra.mxu0 0.0
  %1643 = vmatprep.subr.mxu0 0.0
  %1644 = vmatpush1.xpose.msra.mxu0 0.0
  %1645 = vmatprep.subr.mxu0 0.0
  %1646 = vmatpush1.xpose.msra.mxu0 0.0
  %1647 = vmatprep.subr.mxu0 0.0
  %1648 = vmatpush1.xpose.msra.mxu0 0.0
  %1649 = vmatprep.subr.mxu0 0.0
  %1650 = vmatpush1.xpose.msra.mxu0 0.0
  %1651 = vmatprep.subr.mxu0 0.0
  %1652 = vmatpush1.xpose.msra.mxu0 0.0
  %1653 = vmatprep.subr.mxu0 0.0
  %1654 = vmatpush1.xpose.msra.mxu0 0.0
  %1655 = vmatprep.subr.mxu0 0.0
  %1656 = vmatpush1.xpose.msra.mxu0 0.0
  %1657 = vmatprep.subr.mxu0 0.0
  %1658 = vmatpush1.xpose.msra.mxu0 0.0
  %1659 = vmatprep.subr.mxu0 0.0
  %1660 = vmatpush1.xpose.msra.mxu0 0.0
  %1661 = vmatprep.subr.mxu0 0.0
  %1662 = vmatpush1.xpose.msra.mxu0 0.0
  %1663 = vmatprep.subr.mxu0 0.0
  %1664 = vmatpush1.xpose.msra.mxu0 0.0
  %1665 = vmatprep.subr.mxu0 0.0
  %1666 = vmatpush1.xpose.msra.mxu0 0.0
  %1667 = vmatprep.subr.mxu0 0.0
  %1668 = vmatpush1.xpose.msra.mxu0 0.0
  %1669 = vmatprep.subr.mxu0 0.0
  %1670 = vmatpush1.xpose.msra.mxu0 0.0
  %1671 = vmatprep.subr.mxu0 0.0
  %1672 = vmatpush1.xpose.msra.mxu0 0.0
  %1673 = vmatprep.mubr.f32.mxu0 0.0
  %1674 = vmatmul.mubr.f32.gmra.mrb[0].mxu0 %v1605
  %v1675 = vpop.f32.mrb[0].mxu0
  %v1676 = vadd.f32 %v695, %v1675
  %v1677 = vpop.f32.mrb[0].mxu0
  %1678 = vdwg.mxu0
  %v1679 = vsel %vm716, %v453, 0
  %v1681 = vsel %vm716, %v509, 0
  %1683 = vmatprep.subr.mxu0 0.0
  %1684 = vmatpush1.xpose.msra.mxu0 %v1681
  %1685 = vmatprep.subr.mxu0 0.0
  %1686 = vmatpush1.xpose.msra.mxu0 0.0
  %1687 = vmatprep.subr.mxu0 0.0
  %1688 = vmatpush1.xpose.msra.mxu0 0.0
  %1689 = vmatprep.subr.mxu0 0.0
  %1690 = vmatpush1.xpose.msra.mxu0 0.0
  %1691 = vmatprep.subr.mxu0 0.0
  %1692 = vmatpush1.xpose.msra.mxu0 0.0
  %1693 = vmatprep.subr.mxu0 0.0
  %1694 = vmatpush1.xpose.msra.mxu0 0.0
  %1695 = vmatprep.subr.mxu0 0.0
  %1696 = vmatpush1.xpose.msra.mxu0 0.0
  %1697 = vmatprep.subr.mxu0 0.0
  %1698 = vmatpush1.xpose.msra.mxu0 0.0
  %1699 = vmatprep.subr.mxu0 0.0
  %1700 = vmatpush1.xpose.msra.mxu0 0.0
  %1701 = vmatprep.subr.mxu0 0.0
  %1702 = vmatpush1.xpose.msra.mxu0 0.0
  %1703 = vmatprep.subr.mxu0 0.0
  %1704 = vmatpush1.xpose.msra.mxu0 0.0
  %1705 = vmatprep.subr.mxu0 0.0
  %1706 = vmatpush1.xpose.msra.mxu0 0.0
  %1707 = vmatprep.subr.mxu0 0.0
  %1708 = vmatpush1.xpose.msra.mxu0 0.0
  %1709 = vmatprep.subr.mxu0 0.0
  %1710 = vmatpush1.xpose.msra.mxu0 0.0
  %1711 = vmatprep.subr.mxu0 0.0
  %1712 = vmatpush1.xpose.msra.mxu0 0.0
  %1713 = vmatprep.subr.mxu0 0.0
  %1714 = vmatpush1.xpose.msra.mxu0 0.0
  %1715 = vmatprep.subr.mxu0 0.0
  %1716 = vmatpush1.xpose.msra.mxu0 0.0
  %1717 = vmatprep.subr.mxu0 0.0
  %1718 = vmatpush1.xpose.msra.mxu0 0.0
  %1719 = vmatprep.subr.mxu0 0.0
  %1720 = vmatpush1.xpose.msra.mxu0 0.0
  %1721 = vmatprep.subr.mxu0 0.0
  %1722 = vmatpush1.xpose.msra.mxu0 0.0
  %1723 = vmatprep.subr.mxu0 0.0
  %1724 = vmatpush1.xpose.msra.mxu0 0.0
  %1725 = vmatprep.subr.mxu0 0.0
  %1726 = vmatpush1.xpose.msra.mxu0 0.0
  %1727 = vmatprep.subr.mxu0 0.0
  %1728 = vmatpush1.xpose.msra.mxu0 0.0
  %1729 = vmatprep.subr.mxu0 0.0
  %1730 = vmatpush1.xpose.msra.mxu0 0.0
  %1731 = vmatprep.subr.mxu0 0.0
  %1732 = vmatpush1.xpose.msra.mxu0 0.0
  %1733 = vmatprep.subr.mxu0 0.0
  %1734 = vmatpush1.xpose.msra.mxu0 0.0
  %1735 = vmatprep.subr.mxu0 0.0
  %1736 = vmatpush1.xpose.msra.mxu0 0.0
  %1737 = vmatprep.subr.mxu0 0.0
  %1738 = vmatpush1.xpose.msra.mxu0 0.0
  %1739 = vmatprep.subr.mxu0 0.0
  %1740 = vmatpush1.xpose.msra.mxu0 0.0
  %1741 = vmatprep.subr.mxu0 0.0
  %1742 = vmatpush1.xpose.msra.mxu0 0.0
  %1743 = vmatprep.subr.mxu0 0.0
  %1744 = vmatpush1.xpose.msra.mxu0 0.0
  %1745 = vmatprep.subr.mxu0 0.0
  %1746 = vmatpush1.xpose.msra.mxu0 0.0
  %1747 = vmatprep.mubr.f32.mxu0 0.0
  %1748 = vmatmul.mubr.f32.gmra.mrb[0].mxu0 %v1679
  %v1749 = vpop.f32.mrb[0].mxu0
  %v1750 = vadd.f32 %v699, %v1749
  %v1751 = vpop.f32.mrb[0].mxu0
  %1752 = vdwg.mxu0
  %v1753 = vsel %vm716, %v455, 0
  %v1755 = vsel %vm716, %v511, 0
  %1757 = vmatprep.subr.mxu0 0.0
  %1758 = vmatpush1.xpose.msra.mxu0 %v1755
  %1759 = vmatprep.subr.mxu0 0.0
  %1760 = vmatpush1.xpose.msra.mxu0 0.0
  %1761 = vmatprep.subr.mxu0 0.0
  %1762 = vmatpush1.xpose.msra.mxu0 0.0
  %1763 = vmatprep.subr.mxu0 0.0
  %1764 = vmatpush1.xpose.msra.mxu0 0.0
  %1765 = vmatprep.subr.mxu0 0.0
  %1766 = vmatpush1.xpose.msra.mxu0 0.0
  %1767 = vmatprep.subr.mxu0 0.0
  %1768 = vmatpush1.xpose.msra.mxu0 0.0
  %1769 = vmatprep.subr.mxu0 0.0
  %1770 = vmatpush1.xpose.msra.mxu0 0.0
  %1771 = vmatprep.subr.mxu0 0.0
  %1772 = vmatpush1.xpose.msra.mxu0 0.0
  %1773 = vmatprep.subr.mxu0 0.0
  %1774 = vmatpush1.xpose.msra.mxu0 0.0
  %1775 = vmatprep.subr.mxu0 0.0
  %1776 = vmatpush1.xpose.msra.mxu0 0.0
  %1777 = vmatprep.subr.mxu0 0.0
  %1778 = vmatpush1.xpose.msra.mxu0 0.0
  %1779 = vmatprep.subr.mxu0 0.0
  %1780 = vmatpush1.xpose.msra.mxu0 0.0
  %1781 = vmatprep.subr.mxu0 0.0
  %1782 = vmatpush1.xpose.msra.mxu0 0.0
  %1783 = vmatprep.subr.mxu0 0.0
  %1784 = vmatpush1.xpose.msra.mxu0 0.0
  %1785 = vmatprep.subr.mxu0 0.0
  %1786 = vmatpush1.xpose.msra.mxu0 0.0
  %1787 = vmatprep.subr.mxu0 0.0
  %1788 = vmatpush1.xpose.msra.mxu0 0.0
  %1789 = vmatprep.subr.mxu0 0.0
  %1790 = vmatpush1.xpose.msra.mxu0 0.0
  %1791 = vmatprep.subr.mxu0 0.0
  %1792 = vmatpush1.xpose.msra.mxu0 0.0
  %1793 = vmatprep.subr.mxu0 0.0
  %1794 = vmatpush1.xpose.msra.mxu0 0.0
  %1795 = vmatprep.subr.mxu0 0.0
  %1796 = vmatpush1.xpose.msra.mxu0 0.0
  %1797 = vmatprep.subr.mxu0 0.0
  %1798 = vmatpush1.xpose.msra.mxu0 0.0
  %1799 = vmatprep.subr.mxu0 0.0
  %1800 = vmatpush1.xpose.msra.mxu0 0.0
  %1801 = vmatprep.subr.mxu0 0.0
  %1802 = vmatpush1.xpose.msra.mxu0 0.0
  %1803 = vmatprep.subr.mxu0 0.0
  %1804 = vmatpush1.xpose.msra.mxu0 0.0
  %1805 = vmatprep.subr.mxu0 0.0
  %1806 = vmatpush1.xpose.msra.mxu0 0.0
  %1807 = vmatprep.subr.mxu0 0.0
  %1808 = vmatpush1.xpose.msra.mxu0 0.0
  %1809 = vmatprep.subr.mxu0 0.0
  %1810 = vmatpush1.xpose.msra.mxu0 0.0
  %1811 = vmatprep.subr.mxu0 0.0
  %1812 = vmatpush1.xpose.msra.mxu0 0.0
  %1813 = vmatprep.subr.mxu0 0.0
  %1814 = vmatpush1.xpose.msra.mxu0 0.0
  %1815 = vmatprep.subr.mxu0 0.0
  %1816 = vmatpush1.xpose.msra.mxu0 0.0
  %1817 = vmatprep.subr.mxu0 0.0
  %1818 = vmatpush1.xpose.msra.mxu0 0.0
  %1819 = vmatprep.subr.mxu0 0.0
  %1820 = vmatpush1.xpose.msra.mxu0 0.0
  %1821 = vmatprep.mubr.f32.mxu0 0.0
  %1822 = vmatmul.mubr.f32.gmra.mrb[0].mxu0 %v1753
  %v1823 = vpop.f32.mrb[0].mxu0
  %v1824 = vadd.f32 %v703, %v1823
  %v1825 = vpop.f32.mrb[0].mxu0
  %1826 = vdwg.mxu0
  %v1827 = vsel %vm716, %v457, 0
  %v1829 = vsel %vm716, %v513, 0
  %1831 = vmatprep.subr.mxu0 0.0
  %1832 = vmatpush1.xpose.msra.mxu0 %v1829
  %1833 = vmatprep.subr.mxu0 0.0
  %1834 = vmatpush1.xpose.msra.mxu0 0.0
  %1835 = vmatprep.subr.mxu0 0.0
  %1836 = vmatpush1.xpose.msra.mxu0 0.0
  %1837 = vmatprep.subr.mxu0 0.0
  %1838 = vmatpush1.xpose.msra.mxu0 0.0
  %1839 = vmatprep.subr.mxu0 0.0
  %1840 = vmatpush1.xpose.msra.mxu0 0.0
  %1841 = vmatprep.subr.mxu0 0.0
  %1842 = vmatpush1.xpose.msra.mxu0 0.0
  %1843 = vmatprep.subr.mxu0 0.0
  %1844 = vmatpush1.xpose.msra.mxu0 0.0
  %1845 = vmatprep.subr.mxu0 0.0
  %1846 = vmatpush1.xpose.msra.mxu0 0.0
  %1847 = vmatprep.subr.mxu0 0.0
  %1848 = vmatpush1.xpose.msra.mxu0 0.0
  %1849 = vmatprep.subr.mxu0 0.0
  %1850 = vmatpush1.xpose.msra.mxu0 0.0
  %1851 = vmatprep.subr.mxu0 0.0
  %1852 = vmatpush1.xpose.msra.mxu0 0.0
  %1853 = vmatprep.subr.mxu0 0.0
  %1854 = vmatpush1.xpose.msra.mxu0 0.0
  %1855 = vmatprep.subr.mxu0 0.0
  %1856 = vmatpush1.xpose.msra.mxu0 0.0
  %1857 = vmatprep.subr.mxu0 0.0
  %1858 = vmatpush1.xpose.msra.mxu0 0.0
  %1859 = vmatprep.subr.mxu0 0.0
  %1860 = vmatpush1.xpose.msra.mxu0 0.0
  %1861 = vmatprep.subr.mxu0 0.0
  %1862 = vmatpush1.xpose.msra.mxu0 0.0
  %1863 = vmatprep.subr.mxu0 0.0
  %1864 = vmatpush1.xpose.msra.mxu0 0.0
  %1865 = vmatprep.subr.mxu0 0.0
  %1866 = vmatpush1.xpose.msra.mxu0 0.0
  %1867 = vmatprep.subr.mxu0 0.0
  %1868 = vmatpush1.xpose.msra.mxu0 0.0
  %1869 = vmatprep.subr.mxu0 0.0
  %1870 = vmatpush1.xpose.msra.mxu0 0.0
  %1871 = vmatprep.subr.mxu0 0.0
  %1872 = vmatpush1.xpose.msra.mxu0 0.0
  %1873 = vmatprep.subr.mxu0 0.0
  %1874 = vmatpush1.xpose.msra.mxu0 0.0
  %1875 = vmatprep.subr.mxu0 0.0
  %1876 = vmatpush1.xpose.msra.mxu0 0.0
  %1877 = vmatprep.subr.mxu0 0.0
  %1878 = vmatpush1.xpose.msra.mxu0 0.0
  %1879 = vmatprep.subr.mxu0 0.0
  %1880 = vmatpush1.xpose.msra.mxu0 0.0
  %1881 = vmatprep.subr.mxu0 0.0
  %1882 = vmatpush1.xpose.msra.mxu0 0.0
  %1883 = vmatprep.subr.mxu0 0.0
  %1884 = vmatpush1.xpose.msra.mxu0 0.0
  %1885 = vmatprep.subr.mxu0 0.0
  %1886 = vmatpush1.xpose.msra.mxu0 0.0
  %1887 = vmatprep.subr.mxu0 0.0
  %1888 = vmatpush1.xpose.msra.mxu0 0.0
  %1889 = vmatprep.subr.mxu0 0.0
  %1890 = vmatpush1.xpose.msra.mxu0 0.0
  %1891 = vmatprep.subr.mxu0 0.0
  %1892 = vmatpush1.xpose.msra.mxu0 0.0
  %1893 = vmatprep.subr.mxu0 0.0
  %1894 = vmatpush1.xpose.msra.mxu0 0.0
  %1895 = vmatprep.mubr.f32.mxu0 0.0
  %1896 = vmatmul.mubr.f32.gmra.mrb[0].mxu0 %v1827
  %v1897 = vpop.f32.mrb[0].mxu0
  %v1898 = vadd.f32 %v707, %v1897
  %v1899 = vpop.f32.mrb[0].mxu0
  %1900 = vdwg.mxu0
  %v1901 = vsel %vm716, %v459, 0
  %v1903 = vsel %vm716, %v515, 0
  %1905 = vmatprep.subr.mxu0 0.0
  %1906 = vmatpush1.xpose.msra.mxu0 %v1903
  %1907 = vmatprep.subr.mxu0 0.0
  %1908 = vmatpush1.xpose.msra.mxu0 0.0
  %1909 = vmatprep.subr.mxu0 0.0
  %1910 = vmatpush1.xpose.msra.mxu0 0.0
  %1911 = vmatprep.subr.mxu0 0.0
  %1912 = vmatpush1.xpose.msra.mxu0 0.0
  %1913 = vmatprep.subr.mxu0 0.0
  %1914 = vmatpush1.xpose.msra.mxu0 0.0
  %1915 = vmatprep.subr.mxu0 0.0
  %1916 = vmatpush1.xpose.msra.mxu0 0.0
  %1917 = vmatprep.subr.mxu0 0.0
  %1918 = vmatpush1.xpose.msra.mxu0 0.0
  %1919 = vmatprep.subr.mxu0 0.0
  %1920 = vmatpush1.xpose.msra.mxu0 0.0
  %1921 = vmatprep.subr.mxu0 0.0
  %1922 = vmatpush1.xpose.msra.mxu0 0.0
  %1923 = vmatprep.subr.mxu0 0.0
  %1924 = vmatpush1.xpose.msra.mxu0 0.0
  %1925 = vmatprep.subr.mxu0 0.0
  %1926 = vmatpush1.xpose.msra.mxu0 0.0
  %1927 = vmatprep.subr.mxu0 0.0
  %1928 = vmatpush1.xpose.msra.mxu0 0.0
  %1929 = vmatprep.subr.mxu0 0.0
  %1930 = vmatpush1.xpose.msra.mxu0 0.0
  %1931 = vmatprep.subr.mxu0 0.0
  %1932 = vmatpush1.xpose.msra.mxu0 0.0
  %1933 = vmatprep.subr.mxu0 0.0
  %1934 = vmatpush1.xpose.msra.mxu0 0.0
  %1935 = vmatprep.subr.mxu0 0.0
  %1936 = vmatpush1.xpose.msra.mxu0 0.0
  %1937 = vmatprep.subr.mxu0 0.0
  %1938 = vmatpush1.xpose.msra.mxu0 0.0
  %1939 = vmatprep.subr.mxu0 0.0
  %1940 = vmatpush1.xpose.msra.mxu0 0.0
  %1941 = vmatprep.subr.mxu0 0.0
  %1942 = vmatpush1.xpose.msra.mxu0 0.0
  %1943 = vmatprep.subr.mxu0 0.0
  %1944 = vmatpush1.xpose.msra.mxu0 0.0
  %1945 = vmatprep.subr.mxu0 0.0
  %1946 = vmatpush1.xpose.msra.mxu0 0.0
  %1947 = vmatprep.subr.mxu0 0.0
  %1948 = vmatpush1.xpose.msra.mxu0 0.0
  %1949 = vmatprep.subr.mxu0 0.0
  %1950 = vmatpush1.xpose.msra.mxu0 0.0
  %1951 = vmatprep.subr.mxu0 0.0
  %1952 = vmatpush1.xpose.msra.mxu0 0.0
  %1953 = vmatprep.subr.mxu0 0.0
  %1954 = vmatpush1.xpose.msra.mxu0 0.0
  %1955 = vmatprep.subr.mxu0 0.0
  %1956 = vmatpush1.xpose.msra.mxu0 0.0
  %1957 = vmatprep.subr.mxu0 0.0
  %1958 = vmatpush1.xpose.msra.mxu0 0.0
  %1959 = vmatprep.subr.mxu0 0.0
  %1960 = vmatpush1.xpose.msra.mxu0 0.0
  %1961 = vmatprep.subr.mxu0 0.0
  %1962 = vmatpush1.xpose.msra.mxu0 0.0
  %1963 = vmatprep.subr.mxu0 0.0
  %1964 = vmatpush1.xpose.msra.mxu0 0.0
  %1965 = vmatprep.subr.mxu0 0.0
  %1966 = vmatpush1.xpose.msra.mxu0 0.0
  %1967 = vmatprep.subr.mxu0 0.0
  %1968 = vmatpush1.xpose.msra.mxu0 0.0
  %1969 = vmatprep.mubr.f32.mxu0 0.0
  %1970 = vmatmul.mubr.f32.gmra.mrb[0].mxu0 %v1901
  %v1971 = vpop.f32.mrb[0].mxu0
  %v1972 = vadd.f32 %v679, %v1971
  %v1973 = vpop.f32.mrb[0].mxu0
  %1974 = vdwg.mxu0
  %v1975 = vsel %vm716, %v461, 0
  %v1977 = vsel %vm716, %v517, 0
  %1979 = vmatprep.subr.mxu0 0.0
  %1980 = vmatpush1.xpose.msra.mxu0 %v1977
  %1981 = vmatprep.subr.mxu0 0.0
  %1982 = vmatpush1.xpose.msra.mxu0 0.0
  %1983 = vmatprep.subr.mxu0 0.0
  %1984 = vmatpush1.xpose.msra.mxu0 0.0
  %1985 = vmatprep.subr.mxu0 0.0
  %1986 = vmatpush1.xpose.msra.mxu0 0.0
  %1987 = vmatprep.subr.mxu0 0.0
  %1988 = vmatpush1.xpose.msra.mxu0 0.0
  %1989 = vmatprep.subr.mxu0 0.0
  %1990 = vmatpush1.xpose.msra.mxu0 0.0
  %1991 = vmatprep.subr.mxu0 0.0
  %1992 = vmatpush1.xpose.msra.mxu0 0.0
  %1993 = vmatprep.subr.mxu0 0.0
  %1994 = vmatpush1.xpose.msra.mxu0 0.0
  %1995 = vmatprep.subr.mxu0 0.0
  %1996 = vmatpush1.xpose.msra.mxu0 0.0
  %1997 = vmatprep.subr.mxu0 0.0
  %1998 = vmatpush1.xpose.msra.mxu0 0.0
  %1999 = vmatprep.subr.mxu0 0.0
  %2000 = vmatpush1.xpose.msra.mxu0 0.0
  %2001 = vmatprep.subr.mxu0 0.0
  %2002 = vmatpush1.xpose.msra.mxu0 0.0
  %2003 = vmatprep.subr.mxu0 0.0
  %2004 = vmatpush1.xpose.msra.mxu0 0.0
  %2005 = vmatprep.subr.mxu0 0.0
  %2006 = vmatpush1.xpose.msra.mxu0 0.0
  %2007 = vmatprep.subr.mxu0 0.0
  %2008 = vmatpush1.xpose.msra.mxu0 0.0
  %2009 = vmatprep.subr.mxu0 0.0
  %2010 = vmatpush1.xpose.msra.mxu0 0.0
  %2011 = vmatprep.subr.mxu0 0.0
  %2012 = vmatpush1.xpose.msra.mxu0 0.0
  %2013 = vmatprep.subr.mxu0 0.0
  %2014 = vmatpush1.xpose.msra.mxu0 0.0
  %2015 = vmatprep.subr.mxu0 0.0
  %2016 = vmatpush1.xpose.msra.mxu0 0.0
  %2017 = vmatprep.subr.mxu0 0.0
  %2018 = vmatpush1.xpose.msra.mxu0 0.0
  %2019 = vmatprep.subr.mxu0 0.0
  %2020 = vmatpush1.xpose.msra.mxu0 0.0
  %2021 = vmatprep.subr.mxu0 0.0
  %2022 = vmatpush1.xpose.msra.mxu0 0.0
  %2023 = vmatprep.subr.mxu0 0.0
  %2024 = vmatpush1.xpose.msra.mxu0 0.0
  %2025 = vmatprep.subr.mxu0 0.0
  %2026 = vmatpush1.xpose.msra.mxu0 0.0
  %2027 = vmatprep.subr.mxu0 0.0
  %2028 = vmatpush1.xpose.msra.mxu0 0.0
  %2029 = vmatprep.subr.mxu0 0.0
  %2030 = vmatpush1.xpose.msra.mxu0 0.0
  %2031 = vmatprep.subr.mxu0 0.0
  %2032 = vmatpush1.xpose.msra.mxu0 0.0
  %2033 = vmatprep.subr.mxu0 0.0
  %2034 = vmatpush1.xpose.msra.mxu0 0.0
  %2035 = vmatprep.subr.mxu0 0.0
  %2036 = vmatpush1.xpose.msra.mxu0 0.0
  %2037 = vmatprep.subr.mxu0 0.0
  %2038 = vmatpush1.xpose.msra.mxu0 0.0
  %2039 = vmatprep.subr.mxu0 0.0
  %2040 = vmatpush1.xpose.msra.mxu0 0.0
  %2041 = vmatprep.subr.mxu0 0.0
  %2042 = vmatpush1.xpose.msra.mxu0 0.0
  %2043 = vmatprep.mubr.f32.mxu0 0.0
  %2044 = vmatmul.mubr.f32.gmra.mrb[0].mxu0 %v1975
  %v2045 = vpop.f32.mrb[0].mxu0
  %v2046 = vadd.f32 %v683, %v2045
  %v2047 = vpop.f32.mrb[0].mxu0
  %2048 = vdwg.mxu0
  %v2049 = vsel %vm716, %v463, 0
  %v2051 = vsel %vm716, %v519, 0
  %2053 = vmatprep.subr.mxu0 0.0
  %2054 = vmatpush1.xpose.msra.mxu0 %v2051
  %2055 = vmatprep.subr.mxu0 0.0
  %2056 = vmatpush1.xpose.msra.mxu0 0.0
  %2057 = vmatprep.subr.mxu0 0.0
  %2058 = vmatpush1.xpose.msra.mxu0 0.0
  %2059 = vmatprep.subr.mxu0 0.0
  %2060 = vmatpush1.xpose.msra.mxu0 0.0
  %2061 = vmatprep.subr.mxu0 0.0
  %2062 = vmatpush1.xpose.msra.mxu0 0.0
  %2063 = vmatprep.subr.mxu0 0.0
  %2064 = vmatpush1.xpose.msra.mxu0 0.0
  %2065 = vmatprep.subr.mxu0 0.0
  %2066 = vmatpush1.xpose.msra.mxu0 0.0
  %2067 = vmatprep.subr.mxu0 0.0
  %2068 = vmatpush1.xpose.msra.mxu0 0.0
  %2069 = vmatprep.subr.mxu0 0.0
  %2070 = vmatpush1.xpose.msra.mxu0 0.0
  %2071 = vmatprep.subr.mxu0 0.0
  %2072 = vmatpush1.xpose.msra.mxu0 0.0
  %2073 = vmatprep.subr.mxu0 0.0
  %2074 = vmatpush1.xpose.msra.mxu0 0.0
  %2075 = vmatprep.subr.mxu0 0.0
  %2076 = vmatpush1.xpose.msra.mxu0 0.0
  %2077 = vmatprep.subr.mxu0 0.0
  %2078 = vmatpush1.xpose.msra.mxu0 0.0
  %2079 = vmatprep.subr.mxu0 0.0
  %2080 = vmatpush1.xpose.msra.mxu0 0.0
  %2081 = vmatprep.subr.mxu0 0.0
  %2082 = vmatpush1.xpose.msra.mxu0 0.0
  %2083 = vmatprep.subr.mxu0 0.0
  %2084 = vmatpush1.xpose.msra.mxu0 0.0
  %2085 = vmatprep.subr.mxu0 0.0
  %2086 = vmatpush1.xpose.msra.mxu0 0.0
  %2087 = vmatprep.subr.mxu0 0.0
  %2088 = vmatpush1.xpose.msra.mxu0 0.0
  %2089 = vmatprep.subr.mxu0 0.0
  %2090 = vmatpush1.xpose.msra.mxu0 0.0
  %2091 = vmatprep.subr.mxu0 0.0
  %2092 = vmatpush1.xpose.msra.mxu0 0.0
  %2093 = vmatprep.subr.mxu0 0.0
  %2094 = vmatpush1.xpose.msra.mxu0 0.0
  %2095 = vmatprep.subr.mxu0 0.0
  %2096 = vmatpush1.xpose.msra.mxu0 0.0
  %2097 = vmatprep.subr.mxu0 0.0
  %2098 = vmatpush1.xpose.msra.mxu0 0.0
  %2099 = vmatprep.subr.mxu0 0.0
  %2100 = vmatpush1.xpose.msra.mxu0 0.0
  %2101 = vmatprep.subr.mxu0 0.0
  %2102 = vmatpush1.xpose.msra.mxu0 0.0
  %2103 = vmatprep.subr.mxu0 0.0
  %2104 = vmatpush1.xpose.msra.mxu0 0.0
  %2105 = vmatprep.subr.mxu0 0.0
  %2106 = vmatpush1.xpose.msra.mxu0 0.0
  %2107 = vmatprep.subr.mxu0 0.0
  %2108 = vmatpush1.xpose.msra.mxu0 0.0
  %2109 = vmatprep.subr.mxu0 0.0
  %2110 = vmatpush1.xpose.msra.mxu0 0.0
  %2111 = vmatprep.subr.mxu0 0.0
  %2112 = vmatpush1.xpose.msra.mxu0 0.0
  %2113 = vmatprep.subr.mxu0 0.0
  %2114 = vmatpush1.xpose.msra.mxu0 0.0
  %2115 = vmatprep.subr.mxu0 0.0
  %2116 = vmatpush1.xpose.msra.mxu0 0.0
  %2117 = vmatprep.mubr.f32.mxu0 0.0
  %2118 = vmatmul.mubr.f32.gmra.mrb[0].mxu0 %v2049
  %v2119 = vpop.f32.mrb[0].mxu0
  %v2120 = vadd.f32 %v687, %v2119
  %v2121 = vpop.f32.mrb[0].mxu0
  %2122 = vdwg.mxu0
  %v2123 = vsel %vm716, %v465, 0
  %v2125 = vsel %vm716, %v521, 0
  %2127 = vmatprep.subr.mxu0 0.0
  %2128 = vmatpush1.xpose.msra.mxu0 %v2125
  %2129 = vmatprep.subr.mxu0 0.0
  %2130 = vmatpush1.xpose.msra.mxu0 0.0
  %2131 = vmatprep.subr.mxu0 0.0
  %2132 = vmatpush1.xpose.msra.mxu0 0.0
  %2133 = vmatprep.subr.mxu0 0.0
  %2134 = vmatpush1.xpose.msra.mxu0 0.0
  %2135 = vmatprep.subr.mxu0 0.0
  %2136 = vmatpush1.xpose.msra.mxu0 0.0
  %2137 = vmatprep.subr.mxu0 0.0
  %2138 = vmatpush1.xpose.msra.mxu0 0.0
  %2139 = vmatprep.subr.mxu0 0.0
  %2140 = vmatpush1.xpose.msra.mxu0 0.0
  %2141 = vmatprep.subr.mxu0 0.0
  %2142 = vmatpush1.xpose.msra.mxu0 0.0
  %2143 = vmatprep.subr.mxu0 0.0
  %2144 = vmatpush1.xpose.msra.mxu0 0.0
  %2145 = vmatprep.subr.mxu0 0.0
  %2146 = vmatpush1.xpose.msra.mxu0 0.0
  %2147 = vmatprep.subr.mxu0 0.0
  %2148 = vmatpush1.xpose.msra.mxu0 0.0
  %2149 = vmatprep.subr.mxu0 0.0
  %2150 = vmatpush1.xpose.msra.mxu0 0.0
  %2151 = vmatprep.subr.mxu0 0.0
  %2152 = vmatpush1.xpose.msra.mxu0 0.0
  %2153 = vmatprep.subr.mxu0 0.0
  %2154 = vmatpush1.xpose.msra.mxu0 0.0
  %2155 = vmatprep.subr.mxu0 0.0
  %2156 = vmatpush1.xpose.msra.mxu0 0.0
  %2157 = vmatprep.subr.mxu0 0.0
  %2158 = vmatpush1.xpose.msra.mxu0 0.0
  %2159 = vmatprep.subr.mxu0 0.0
  %2160 = vmatpush1.xpose.msra.mxu0 0.0
  %2161 = vmatprep.subr.mxu0 0.0
  %2162 = vmatpush1.xpose.msra.mxu0 0.0
  %2163 = vmatprep.subr.mxu0 0.0
  %2164 = vmatpush1.xpose.msra.mxu0 0.0
  %2165 = vmatprep.subr.mxu0 0.0
  %2166 = vmatpush1.xpose.msra.mxu0 0.0
  %2167 = vmatprep.subr.mxu0 0.0
  %2168 = vmatpush1.xpose.msra.mxu0 0.0
  %2169 = vmatprep.subr.mxu0 0.0
  %2170 = vmatpush1.xpose.msra.mxu0 0.0
  %2171 = vmatprep.subr.mxu0 0.0
  %2172 = vmatpush1.xpose.msra.mxu0 0.0
  %2173 = vmatprep.subr.mxu0 0.0
  %2174 = vmatpush1.xpose.msra.mxu0 0.0
  %2175 = vmatprep.subr.mxu0 0.0
  %2176 = vmatpush1.xpose.msra.mxu0 0.0
  %2177 = vmatprep.subr.mxu0 0.0
  %2178 = vmatpush1.xpose.msra.mxu0 0.0
  %2179 = vmatprep.subr.mxu0 0.0
  %2180 = vmatpush1.xpose.msra.mxu0 0.0
  %2181 = vmatprep.subr.mxu0 0.0
  %2182 = vmatpush1.xpose.msra.mxu0 0.0
  %2183 = vmatprep.subr.mxu0 0.0
  %2184 = vmatpush1.xpose.msra.mxu0 0.0
  %2185 = vmatprep.subr.mxu0 0.0
  %2186 = vmatpush1.xpose.msra.mxu0 0.0
  %2187 = vmatprep.subr.mxu0 0.0
  %2188 = vmatpush1.xpose.msra.mxu0 0.0
  %2189 = vmatprep.subr.mxu0 0.0
  %2190 = vmatpush1.xpose.msra.mxu0 0.0
  %2191 = vmatprep.mubr.f32.mxu0 0.0
  %2192 = vmatmul.mubr.f32.gmra.mrb[0].mxu0 %v2123
  %v2193 = vpop.f32.mrb[0].mxu0
  %v2194 = vadd.f32 %v691, %v2193
  %v2195 = vpop.f32.mrb[0].mxu0
  %2196 = vdwg.mxu0
  %v2197 = vsel %vm716, %v467, 0
  %v2199 = vsel %vm716, %v523, 0
  %2201 = vmatprep.subr.mxu0 0.0
  %2202 = vmatpush1.xpose.msra.mxu0 %v2199
  %2203 = vmatprep.subr.mxu0 0.0
  %2204 = vmatpush1.xpose.msra.mxu0 0.0
  %2205 = vmatprep.subr.mxu0 0.0
  %2206 = vmatpush1.xpose.msra.mxu0 0.0
  %2207 = vmatprep.subr.mxu0 0.0
  %2208 = vmatpush1.xpose.msra.mxu0 0.0
  %2209 = vmatprep.subr.mxu0 0.0
  %2210 = vmatpush1.xpose.msra.mxu0 0.0
  %2211 = vmatprep.subr.mxu0 0.0
  %2212 = vmatpush1.xpose.msra.mxu0 0.0
  %2213 = vmatprep.subr.mxu0 0.0
  %2214 = vmatpush1.xpose.msra.mxu0 0.0
  %2215 = vmatprep.subr.mxu0 0.0
  %2216 = vmatpush1.xpose.msra.mxu0 0.0
  %2217 = vmatprep.subr.mxu0 0.0
  %2218 = vmatpush1.xpose.msra.mxu0 0.0
  %2219 = vmatprep.subr.mxu0 0.0
  %2220 = vmatpush1.xpose.msra.mxu0 0.0
  %2221 = vmatprep.subr.mxu0 0.0
  %2222 = vmatpush1.xpose.msra.mxu0 0.0
  %2223 = vmatprep.subr.mxu0 0.0
  %2224 = vmatpush1.xpose.msra.mxu0 0.0
  %2225 = vmatprep.subr.mxu0 0.0
  %2226 = vmatpush1.xpose.msra.mxu0 0.0
  %2227 = vmatprep.subr.mxu0 0.0
  %2228 = vmatpush1.xpose.msra.mxu0 0.0
  %2229 = vmatprep.subr.mxu0 0.0
  %2230 = vmatpush1.xpose.msra.mxu0 0.0
  %2231 = vmatprep.subr.mxu0 0.0
  %2232 = vmatpush1.xpose.msra.mxu0 0.0
  %2233 = vmatprep.subr.mxu0 0.0
  %2234 = vmatpush1.xpose.msra.mxu0 0.0
  %2235 = vmatprep.subr.mxu0 0.0
  %2236 = vmatpush1.xpose.msra.mxu0 0.0
  %2237 = vmatprep.subr.mxu0 0.0
  %2238 = vmatpush1.xpose.msra.mxu0 0.0
  %2239 = vmatprep.subr.mxu0 0.0
  %2240 = vmatpush1.xpose.msra.mxu0 0.0
  %2241 = vmatprep.subr.mxu0 0.0
  %2242 = vmatpush1.xpose.msra.mxu0 0.0
  %2243 = vmatprep.subr.mxu0 0.0
  %2244 = vmatpush1.xpose.msra.mxu0 0.0
  %2245 = vmatprep.subr.mxu0 0.0
  %2246 = vmatpush1.xpose.msra.mxu0 0.0
  %2247 = vmatprep.subr.mxu0 0.0
  %2248 = vmatpush1.xpose.msra.mxu0 0.0
  %2249 = vmatprep.subr.mxu0 0.0
  %2250 = vmatpush1.xpose.msra.mxu0 0.0
  %2251 = vmatprep.subr.mxu0 0.0
  %2252 = vmatpush1.xpose.msra.mxu0 0.0
  %2253 = vmatprep.subr.mxu0 0.0
  %2254 = vmatpush1.xpose.msra.mxu0 0.0
  %2255 = vmatprep.subr.mxu0 0.0
  %2256 = vmatpush1.xpose.msra.mxu0 0.0
  %2257 = vmatprep.subr.mxu0 0.0
  %2258 = vmatpush1.xpose.msra.mxu0 0.0
  %2259 = vmatprep.subr.mxu0 0.0
  %2260 = vmatpush1.xpose.msra.mxu0 0.0
  %2261 = vmatprep.subr.mxu0 0.0
  %2262 = vmatpush1.xpose.msra.mxu0 0.0
  %2263 = vmatprep.subr.mxu0 0.0
  %2264 = vmatpush1.xpose.msra.mxu0 0.0
  %2265 = vmatprep.mubr.f32.mxu0 0.0
  %2266 = vmatmul.mubr.f32.gmra.mrb[0].mxu0 %v2197
  %v2267 = vpop.f32.mrb[0].mxu0
  %v2268 = vadd.f32 %v695, %v2267
  %v2269 = vpop.f32.mrb[0].mxu0
  %2270 = vdwg.mxu0
  %v2271 = vsel %vm716, %v469, 0
  %v2273 = vsel %vm716, %v525, 0
  %2275 = vmatprep.subr.mxu0 0.0
  %2276 = vmatpush1.xpose.msra.mxu0 %v2273
  %2277 = vmatprep.subr.mxu0 0.0
  %2278 = vmatpush1.xpose.msra.mxu0 0.0
  %2279 = vmatprep.subr.mxu0 0.0
  %2280 = vmatpush1.xpose.msra.mxu0 0.0
  %2281 = vmatprep.subr.mxu0 0.0
  %2282 = vmatpush1.xpose.msra.mxu0 0.0
  %2283 = vmatprep.subr.mxu0 0.0
  %2284 = vmatpush1.xpose.msra.mxu0 0.0
  %2285 = vmatprep.subr.mxu0 0.0
  %2286 = vmatpush1.xpose.msra.mxu0 0.0
  %2287 = vmatprep.subr.mxu0 0.0
  %2288 = vmatpush1.xpose.msra.mxu0 0.0
  %2289 = vmatprep.subr.mxu0 0.0
  %2290 = vmatpush1.xpose.msra.mxu0 0.0
  %2291 = vmatprep.subr.mxu0 0.0
  %2292 = vmatpush1.xpose.msra.mxu0 0.0
  %2293 = vmatprep.subr.mxu0 0.0
  %2294 = vmatpush1.xpose.msra.mxu0 0.0
  %2295 = vmatprep.subr.mxu0 0.0
  %2296 = vmatpush1.xpose.msra.mxu0 0.0
  %2297 = vmatprep.subr.mxu0 0.0
  %2298 = vmatpush1.xpose.msra.mxu0 0.0
  %2299 = vmatprep.subr.mxu0 0.0
  %2300 = vmatpush1.xpose.msra.mxu0 0.0
  %2301 = vmatprep.subr.mxu0 0.0
  %2302 = vmatpush1.xpose.msra.mxu0 0.0
  %2303 = vmatprep.subr.mxu0 0.0
  %2304 = vmatpush1.xpose.msra.mxu0 0.0
  %2305 = vmatprep.subr.mxu0 0.0
  %2306 = vmatpush1.xpose.msra.mxu0 0.0
  %2307 = vmatprep.subr.mxu0 0.0
  %2308 = vmatpush1.xpose.msra.mxu0 0.0
  %2309 = vmatprep.subr.mxu0 0.0
  %2310 = vmatpush1.xpose.msra.mxu0 0.0
  %2311 = vmatprep.subr.mxu0 0.0
  %2312 = vmatpush1.xpose.msra.mxu0 0.0
  %2313 = vmatprep.subr.mxu0 0.0
  %2314 = vmatpush1.xpose.msra.mxu0 0.0
  %2315 = vmatprep.subr.mxu0 0.0
  %2316 = vmatpush1.xpose.msra.mxu0 0.0
  %2317 = vmatprep.subr.mxu0 0.0
  %2318 = vmatpush1.xpose.msra.mxu0 0.0
  %2319 = vmatprep.subr.mxu0 0.0
  %2320 = vmatpush1.xpose.msra.mxu0 0.0
  %2321 = vmatprep.subr.mxu0 0.0
  %2322 = vmatpush1.xpose.msra.mxu0 0.0
  %2323 = vmatprep.subr.mxu0 0.0
  %2324 = vmatpush1.xpose.msra.mxu0 0.0
  %2325 = vmatprep.subr.mxu0 0.0
  %2326 = vmatpush1.xpose.msra.mxu0 0.0
  %2327 = vmatprep.subr.mxu0 0.0
  %2328 = vmatpush1.xpose.msra.mxu0 0.0
  %2329 = vmatprep.subr.mxu0 0.0
  %2330 = vmatpush1.xpose.msra.mxu0 0.0
  %2331 = vmatprep.subr.mxu0 0.0
  %2332 = vmatpush1.xpose.msra.mxu0 0.0
  %2333 = vmatprep.subr.mxu0 0.0
  %2334 = vmatpush1.xpose.msra.mxu0 0.0
  %2335 = vmatprep.subr.mxu0 0.0
  %2336 = vmatpush1.xpose.msra.mxu0 0.0
  %2337 = vmatprep.subr.mxu0 0.0
  %2338 = vmatpush1.xpose.msra.mxu0 0.0
  %2339 = vmatprep.mubr.f32.mxu0 0.0
  %2340 = vmatmul.mubr.f32.gmra.mrb[0].mxu0 %v2271
  %v2341 = vpop.f32.mrb[0].mxu0
  %v2342 = vadd.f32 %v699, %v2341
  %v2343 = vpop.f32.mrb[0].mxu0
  %2344 = vdwg.mxu0
  %v2345 = vsel %vm716, %v471, 0
  %v2347 = vsel %vm716, %v527, 0
  %2349 = vmatprep.subr.mxu0 0.0
  %2350 = vmatpush1.xpose.msra.mxu0 %v2347
  %2351 = vmatprep.subr.mxu0 0.0
  %2352 = vmatpush1.xpose.msra.mxu0 0.0
  %2353 = vmatprep.subr.mxu0 0.0
  %2354 = vmatpush1.xpose.msra.mxu0 0.0
  %2355 = vmatprep.subr.mxu0 0.0
  %2356 = vmatpush1.xpose.msra.mxu0 0.0
  %2357 = vmatprep.subr.mxu0 0.0
  %2358 = vmatpush1.xpose.msra.mxu0 0.0
  %2359 = vmatprep.subr.mxu0 0.0
  %2360 = vmatpush1.xpose.msra.mxu0 0.0
  %2361 = vmatprep.subr.mxu0 0.0
  %2362 = vmatpush1.xpose.msra.mxu0 0.0
  %2363 = vmatprep.subr.mxu0 0.0
  %2364 = vmatpush1.xpose.msra.mxu0 0.0
  %2365 = vmatprep.subr.mxu0 0.0
  %2366 = vmatpush1.xpose.msra.mxu0 0.0
  %2367 = vmatprep.subr.mxu0 0.0
  %2368 = vmatpush1.xpose.msra.mxu0 0.0
  %2369 = vmatprep.subr.mxu0 0.0
  %2370 = vmatpush1.xpose.msra.mxu0 0.0
  %2371 = vmatprep.subr.mxu0 0.0
  %2372 = vmatpush1.xpose.msra.mxu0 0.0
  %2373 = vmatprep.subr.mxu0 0.0
  %2374 = vmatpush1.xpose.msra.mxu0 0.0
  %2375 = vmatprep.subr.mxu0 0.0
  %2376 = vmatpush1.xpose.msra.mxu0 0.0
  %2377 = vmatprep.subr.mxu0 0.0
  %2378 = vmatpush1.xpose.msra.mxu0 0.0
  %2379 = vmatprep.subr.mxu0 0.0
  %2380 = vmatpush1.xpose.msra.mxu0 0.0
  %2381 = vmatprep.subr.mxu0 0.0
  %2382 = vmatpush1.xpose.msra.mxu0 0.0
  %2383 = vmatprep.subr.mxu0 0.0
  %2384 = vmatpush1.xpose.msra.mxu0 0.0
  %2385 = vmatprep.subr.mxu0 0.0
  %2386 = vmatpush1.xpose.msra.mxu0 0.0
  %2387 = vmatprep.subr.mxu0 0.0
  %2388 = vmatpush1.xpose.msra.mxu0 0.0
  %2389 = vmatprep.subr.mxu0 0.0
  %2390 = vmatpush1.xpose.msra.mxu0 0.0
  %2391 = vmatprep.subr.mxu0 0.0
  %2392 = vmatpush1.xpose.msra.mxu0 0.0
  %2393 = vmatprep.subr.mxu0 0.0
  %2394 = vmatpush1.xpose.msra.mxu0 0.0
  %2395 = vmatprep.subr.mxu0 0.0
  %2396 = vmatpush1.xpose.msra.mxu0 0.0
  %2397 = vmatprep.subr.mxu0 0.0
  %2398 = vmatpush1.xpose.msra.mxu0 0.0
  %2399 = vmatprep.subr.mxu0 0.0
  %2400 = vmatpush1.xpose.msra.mxu0 0.0
  %2401 = vmatprep.subr.mxu0 0.0
  %2402 = vmatpush1.xpose.msra.mxu0 0.0
  %2403 = vmatprep.subr.mxu0 0.0
  %2404 = vmatpush1.xpose.msra.mxu0 0.0
  %2405 = vmatprep.subr.mxu0 0.0
  %2406 = vmatpush1.xpose.msra.mxu0 0.0
  %2407 = vmatprep.subr.mxu0 0.0
  %2408 = vmatpush1.xpose.msra.mxu0 0.0
  %2409 = vmatprep.subr.mxu0 0.0
  %2410 = vmatpush1.xpose.msra.mxu0 0.0
  %2411 = vmatprep.subr.mxu0 0.0
  %2412 = vmatpush1.xpose.msra.mxu0 0.0
  %2413 = vmatprep.mubr.f32.mxu0 0.0
  %2414 = vmatmul.mubr.f32.gmra.mrb[0].mxu0 %v2345
  %v2415 = vpop.f32.mrb[0].mxu0
  %v2416 = vadd.f32 %v703, %v2415
  %v2417 = vpop.f32.mrb[0].mxu0
  %2418 = vdwg.mxu0
  %v2419 = vsel %vm716, %v473, 0
  %v2421 = vsel %vm716, %v529, 0
  %2423 = vmatprep.subr.mxu0 0.0
  %2424 = vmatpush1.xpose.msra.mxu0 %v2421
  %2425 = vmatprep.subr.mxu0 0.0
  %2426 = vmatpush1.xpose.msra.mxu0 0.0
  %2427 = vmatprep.subr.mxu0 0.0
  %2428 = vmatpush1.xpose.msra.mxu0 0.0
  %2429 = vmatprep.subr.mxu0 0.0
  %2430 = vmatpush1.xpose.msra.mxu0 0.0
  %2431 = vmatprep.subr.mxu0 0.0
  %2432 = vmatpush1.xpose.msra.mxu0 0.0
  %2433 = vmatprep.subr.mxu0 0.0
  %2434 = vmatpush1.xpose.msra.mxu0 0.0
  %2435 = vmatprep.subr.mxu0 0.0
  %2436 = vmatpush1.xpose.msra.mxu0 0.0
  %2437 = vmatprep.subr.mxu0 0.0
  %2438 = vmatpush1.xpose.msra.mxu0 0.0
  %2439 = vmatprep.subr.mxu0 0.0
  %2440 = vmatpush1.xpose.msra.mxu0 0.0
  %2441 = vmatprep.subr.mxu0 0.0
  %2442 = vmatpush1.xpose.msra.mxu0 0.0
  %2443 = vmatprep.subr.mxu0 0.0
  %2444 = vmatpush1.xpose.msra.mxu0 0.0
  %2445 = vmatprep.subr.mxu0 0.0
  %2446 = vmatpush1.xpose.msra.mxu0 0.0
  %2447 = vmatprep.subr.mxu0 0.0
  %2448 = vmatpush1.xpose.msra.mxu0 0.0
  %2449 = vmatprep.subr.mxu0 0.0
  %2450 = vmatpush1.xpose.msra.mxu0 0.0
  %2451 = vmatprep.subr.mxu0 0.0
  %2452 = vmatpush1.xpose.msra.mxu0 0.0
  %2453 = vmatprep.subr.mxu0 0.0
  %2454 = vmatpush1.xpose.msra.mxu0 0.0
  %2455 = vmatprep.subr.mxu0 0.0
  %2456 = vmatpush1.xpose.msra.mxu0 0.0
  %2457 = vmatprep.subr.mxu0 0.0
  %2458 = vmatpush1.xpose.msra.mxu0 0.0
  %2459 = vmatprep.subr.mxu0 0.0
  %2460 = vmatpush1.xpose.msra.mxu0 0.0
  %2461 = vmatprep.subr.mxu0 0.0
  %2462 = vmatpush1.xpose.msra.mxu0 0.0
  %2463 = vmatprep.subr.mxu0 0.0
  %2464 = vmatpush1.xpose.msra.mxu0 0.0
  %2465 = vmatprep.subr.mxu0 0.0
  %2466 = vmatpush1.xpose.msra.mxu0 0.0
  %2467 = vmatprep.subr.mxu0 0.0
  %2468 = vmatpush1.xpose.msra.mxu0 0.0
  %2469 = vmatprep.subr.mxu0 0.0
  %2470 = vmatpush1.xpose.msra.mxu0 0.0
  %2471 = vmatprep.subr.mxu0 0.0
  %2472 = vmatpush1.xpose.msra.mxu0 0.0
  %2473 = vmatprep.subr.mxu0 0.0
  %2474 = vmatpush1.xpose.msra.mxu0 0.0
  %2475 = vmatprep.subr.mxu0 0.0
  %2476 = vmatpush1.xpose.msra.mxu0 0.0
  %2477 = vmatprep.subr.mxu0 0.0
  %2478 = vmatpush1.xpose.msra.mxu0 0.0
  %2479 = vmatprep.subr.mxu0 0.0
  %2480 = vmatpush1.xpose.msra.mxu0 0.0
  %2481 = vmatprep.subr.mxu0 0.0
  %2482 = vmatpush1.xpose.msra.mxu0 0.0
  %2483 = vmatprep.subr.mxu0 0.0
  %2484 = vmatpush1.xpose.msra.mxu0 0.0
  %2485 = vmatprep.subr.mxu0 0.0
  %2486 = vmatpush1.xpose.msra.mxu0 0.0
  %2487 = vmatprep.mubr.f32.mxu0 0.0
  %2488 = vmatmul.mubr.f32.gmra.mrb[0].mxu0 %v2419
  %v2489 = vpop.f32.mrb[0].mxu0
  %v2490 = vadd.f32 %v707, %v2489
  %v2491 = vpop.f32.mrb[0].mxu0
  %2492 = vdwg.mxu0
  %v2493 = vsel %vm716, %v475, 0
  %v2495 = vsel %vm716, %v531, 0
  %2497 = vmatprep.subr.mxu0 0.0
  %2498 = vmatpush1.xpose.msra.mxu0 %v2495
  %2499 = vmatprep.subr.mxu0 0.0
  %2500 = vmatpush1.xpose.msra.mxu0 0.0
  %2501 = vmatprep.subr.mxu0 0.0
  %2502 = vmatpush1.xpose.msra.mxu0 0.0
  %2503 = vmatprep.subr.mxu0 0.0
  %2504 = vmatpush1.xpose.msra.mxu0 0.0
  %2505 = vmatprep.subr.mxu0 0.0
  %2506 = vmatpush1.xpose.msra.mxu0 0.0
  %2507 = vmatprep.subr.mxu0 0.0
  %2508 = vmatpush1.xpose.msra.mxu0 0.0
  %2509 = vmatprep.subr.mxu0 0.0
  %2510 = vmatpush1.xpose.msra.mxu0 0.0
  %2511 = vmatprep.subr.mxu0 0.0
  %2512 = vmatpush1.xpose.msra.mxu0 0.0
  %2513 = vmatprep.subr.mxu0 0.0
  %2514 = vmatpush1.xpose.msra.mxu0 0.0
  %2515 = vmatprep.subr.mxu0 0.0
  %2516 = vmatpush1.xpose.msra.mxu0 0.0
  %2517 = vmatprep.subr.mxu0 0.0
  %2518 = vmatpush1.xpose.msra.mxu0 0.0
  %2519 = vmatprep.subr.mxu0 0.0
  %2520 = vmatpush1.xpose.msra.mxu0 0.0
  %2521 = vmatprep.subr.mxu0 0.0
  %2522 = vmatpush1.xpose.msra.mxu0 0.0
  %2523 = vmatprep.subr.mxu0 0.0
  %2524 = vmatpush1.xpose.msra.mxu0 0.0
  %2525 = vmatprep.subr.mxu0 0.0
  %2526 = vmatpush1.xpose.msra.mxu0 0.0
  %2527 = vmatprep.subr.mxu0 0.0
  %2528 = vmatpush1.xpose.msra.mxu0 0.0
  %2529 = vmatprep.subr.mxu0 0.0
  %2530 = vmatpush1.xpose.msra.mxu0 0.0
  %2531 = vmatprep.subr.mxu0 0.0
  %2532 = vmatpush1.xpose.msra.mxu0 0.0
  %2533 = vmatprep.subr.mxu0 0.0
  %2534 = vmatpush1.xpose.msra.mxu0 0.0
  %2535 = vmatprep.subr.mxu0 0.0
  %2536 = vmatpush1.xpose.msra.mxu0 0.0
  %2537 = vmatprep.subr.mxu0 0.0
  %2538 = vmatpush1.xpose.msra.mxu0 0.0
  %2539 = vmatprep.subr.mxu0 0.0
  %2540 = vmatpush1.xpose.msra.mxu0 0.0
  %2541 = vmatprep.subr.mxu0 0.0
  %2542 = vmatpush1.xpose.msra.mxu0 0.0
  %2543 = vmatprep.subr.mxu0 0.0
  %2544 = vmatpush1.xpose.msra.mxu0 0.0
  %2545 = vmatprep.subr.mxu0 0.0
  %2546 = vmatpush1.xpose.msra.mxu0 0.0
  %2547 = vmatprep.subr.mxu0 0.0
  %2548 = vmatpush1.xpose.msra.mxu0 0.0
  %2549 = vmatprep.subr.mxu0 0.0
  %2550 = vmatpush1.xpose.msra.mxu0 0.0
  %2551 = vmatprep.subr.mxu0 0.0
  %2552 = vmatpush1.xpose.msra.mxu0 0.0
  %2553 = vmatprep.subr.mxu0 0.0
  %2554 = vmatpush1.xpose.msra.mxu0 0.0
  %2555 = vmatprep.subr.mxu0 0.0
  %2556 = vmatpush1.xpose.msra.mxu0 0.0
  %2557 = vmatprep.subr.mxu0 0.0
  %2558 = vmatpush1.xpose.msra.mxu0 0.0
  %2559 = vmatprep.subr.mxu0 0.0
  %2560 = vmatpush1.xpose.msra.mxu0 0.0
  %2561 = vmatprep.mubr.f32.mxu0 0.0
  %2562 = vmatmul.mubr.f32.gmra.mrb[0].mxu0 %v2493
  %v2563 = vpop.f32.mrb[0].mxu0
  %v2564 = vadd.f32 %v679, %v2563
  %v2565 = vpop.f32.mrb[0].mxu0
  %2566 = vdwg.mxu0
  %v2567 = vsel %vm716, %v477, 0
  %v2569 = vsel %vm716, %v533, 0
  %2571 = vmatprep.subr.mxu0 0.0
  %2572 = vmatpush1.xpose.msra.mxu0 %v2569
  %2573 = vmatprep.subr.mxu0 0.0
  %2574 = vmatpush1.xpose.msra.mxu0 0.0
  %2575 = vmatprep.subr.mxu0 0.0
  %2576 = vmatpush1.xpose.msra.mxu0 0.0
  %2577 = vmatprep.subr.mxu0 0.0
  %2578 = vmatpush1.xpose.msra.mxu0 0.0
  %2579 = vmatprep.subr.mxu0 0.0
  %2580 = vmatpush1.xpose.msra.mxu0 0.0
  %2581 = vmatprep.subr.mxu0 0.0
  %2582 = vmatpush1.xpose.msra.mxu0 0.0
  %2583 = vmatprep.subr.mxu0 0.0
  %2584 = vmatpush1.xpose.msra.mxu0 0.0
  %2585 = vmatprep.subr.mxu0 0.0
  %2586 = vmatpush1.xpose.msra.mxu0 0.0
  %2587 = vmatprep.subr.mxu0 0.0
  %2588 = vmatpush1.xpose.msra.mxu0 0.0
  %2589 = vmatprep.subr.mxu0 0.0
  %2590 = vmatpush1.xpose.msra.mxu0 0.0
  %2591 = vmatprep.subr.mxu0 0.0
  %2592 = vmatpush1.xpose.msra.mxu0 0.0
  %2593 = vmatprep.subr.mxu0 0.0
  %2594 = vmatpush1.xpose.msra.mxu0 0.0
  %2595 = vmatprep.subr.mxu0 0.0
  %2596 = vmatpush1.xpose.msra.mxu0 0.0
  %2597 = vmatprep.subr.mxu0 0.0
  %2598 = vmatpush1.xpose.msra.mxu0 0.0
  %2599 = vmatprep.subr.mxu0 0.0
  %2600 = vmatpush1.xpose.msra.mxu0 0.0
  %2601 = vmatprep.subr.mxu0 0.0
  %2602 = vmatpush1.xpose.msra.mxu0 0.0
  %2603 = vmatprep.subr.mxu0 0.0
  %2604 = vmatpush1.xpose.msra.mxu0 0.0
  %2605 = vmatprep.subr.mxu0 0.0
  %2606 = vmatpush1.xpose.msra.mxu0 0.0
  %2607 = vmatprep.subr.mxu0 0.0
  %2608 = vmatpush1.xpose.msra.mxu0 0.0
  %2609 = vmatprep.subr.mxu0 0.0
  %2610 = vmatpush1.xpose.msra.mxu0 0.0
  %2611 = vmatprep.subr.mxu0 0.0
  %2612 = vmatpush1.xpose.msra.mxu0 0.0
  %2613 = vmatprep.subr.mxu0 0.0
  %2614 = vmatpush1.xpose.msra.mxu0 0.0
  %2615 = vmatprep.subr.mxu0 0.0
  %2616 = vmatpush1.xpose.msra.mxu0 0.0
  %2617 = vmatprep.subr.mxu0 0.0
  %2618 = vmatpush1.xpose.msra.mxu0 0.0
  %2619 = vmatprep.subr.mxu0 0.0
  %2620 = vmatpush1.xpose.msra.mxu0 0.0
  %2621 = vmatprep.subr.mxu0 0.0
  %2622 = vmatpush1.xpose.msra.mxu0 0.0
  %2623 = vmatprep.subr.mxu0 0.0
  %2624 = vmatpush1.xpose.msra.mxu0 0.0
  %2625 = vmatprep.subr.mxu0 0.0
  %2626 = vmatpush1.xpose.msra.mxu0 0.0
  %2627 = vmatprep.subr.mxu0 0.0
  %2628 = vmatpush1.xpose.msra.mxu0 0.0
  %2629 = vmatprep.subr.mxu0 0.0
  %2630 = vmatpush1.xpose.msra.mxu0 0.0
  %2631 = vmatprep.subr.mxu0 0.0
  %2632 = vmatpush1.xpose.msra.mxu0 0.0
  %2633 = vmatprep.subr.mxu0 0.0
  %2634 = vmatpush1.xpose.msra.mxu0 0.0
  %2635 = vmatprep.mubr.f32.mxu0 0.0
  %2636 = vmatmul.mubr.f32.gmra.mrb[0].mxu0 %v2567
  %v2637 = vpop.f32.mrb[0].mxu0
  %v2638 = vadd.f32 %v683, %v2637
  %v2639 = vpop.f32.mrb[0].mxu0
  %2640 = vdwg.mxu0
  %v2641 = vsel %vm716, %v479, 0
  %v2643 = vsel %vm716, %v535, 0
  %2645 = vmatprep.subr.mxu0 0.0
  %2646 = vmatpush1.xpose.msra.mxu0 %v2643
  %2647 = vmatprep.subr.mxu0 0.0
  %2648 = vmatpush1.xpose.msra.mxu0 0.0
  %2649 = vmatprep.subr.mxu0 0.0
  %2650 = vmatpush1.xpose.msra.mxu0 0.0
  %2651 = vmatprep.subr.mxu0 0.0
  %2652 = vmatpush1.xpose.msra.mxu0 0.0
  %2653 = vmatprep.subr.mxu0 0.0
  %2654 = vmatpush1.xpose.msra.mxu0 0.0
  %2655 = vmatprep.subr.mxu0 0.0
  %2656 = vmatpush1.xpose.msra.mxu0 0.0
  %2657 = vmatprep.subr.mxu0 0.0
  %2658 = vmatpush1.xpose.msra.mxu0 0.0
  %2659 = vmatprep.subr.mxu0 0.0
  %2660 = vmatpush1.xpose.msra.mxu0 0.0
  %2661 = vmatprep.subr.mxu0 0.0
  %2662 = vmatpush1.xpose.msra.mxu0 0.0
  %2663 = vmatprep.subr.mxu0 0.0
  %2664 = vmatpush1.xpose.msra.mxu0 0.0
  %2665 = vmatprep.subr.mxu0 0.0
  %2666 = vmatpush1.xpose.msra.mxu0 0.0
  %2667 = vmatprep.subr.mxu0 0.0
  %2668 = vmatpush1.xpose.msra.mxu0 0.0
  %2669 = vmatprep.subr.mxu0 0.0
  %2670 = vmatpush1.xpose.msra.mxu0 0.0
  %2671 = vmatprep.subr.mxu0 0.0
  %2672 = vmatpush1.xpose.msra.mxu0 0.0
  %2673 = vmatprep.subr.mxu0 0.0
  %2674 = vmatpush1.xpose.msra.mxu0 0.0
  %2675 = vmatprep.subr.mxu0 0.0
  %2676 = vmatpush1.xpose.msra.mxu0 0.0
  %2677 = vmatprep.subr.mxu0 0.0
  %2678 = vmatpush1.xpose.msra.mxu0 0.0
  %2679 = vmatprep.subr.mxu0 0.0
  %2680 = vmatpush1.xpose.msra.mxu0 0.0
  %2681 = vmatprep.subr.mxu0 0.0
  %2682 = vmatpush1.xpose.msra.mxu0 0.0
  %2683 = vmatprep.subr.mxu0 0.0
  %2684 = vmatpush1.xpose.msra.mxu0 0.0
  %2685 = vmatprep.subr.mxu0 0.0
  %2686 = vmatpush1.xpose.msra.mxu0 0.0
  %2687 = vmatprep.subr.mxu0 0.0
  %2688 = vmatpush1.xpose.msra.mxu0 0.0
  %2689 = vmatprep.subr.mxu0 0.0
  %2690 = vmatpush1.xpose.msra.mxu0 0.0
  %2691 = vmatprep.subr.mxu0 0.0
  %2692 = vmatpush1.xpose.msra.mxu0 0.0
  %2693 = vmatprep.subr.mxu0 0.0
  %2694 = vmatpush1.xpose.msra.mxu0 0.0
  %2695 = vmatprep.subr.mxu0 0.0
  %2696 = vmatpush1.xpose.msra.mxu0 0.0
  %2697 = vmatprep.subr.mxu0 0.0
  %2698 = vmatpush1.xpose.msra.mxu0 0.0
  %2699 = vmatprep.subr.mxu0 0.0
  %2700 = vmatpush1.xpose.msra.mxu0 0.0
  %2701 = vmatprep.subr.mxu0 0.0
  %2702 = vmatpush1.xpose.msra.mxu0 0.0
  %2703 = vmatprep.subr.mxu0 0.0
  %2704 = vmatpush1.xpose.msra.mxu0 0.0
  %2705 = vmatprep.subr.mxu0 0.0
  %2706 = vmatpush1.xpose.msra.mxu0 0.0
  %2707 = vmatprep.subr.mxu0 0.0
  %2708 = vmatpush1.xpose.msra.mxu0 0.0
  %2709 = vmatprep.mubr.f32.mxu0 0.0
  %2710 = vmatmul.mubr.f32.gmra.mrb[0].mxu0 %v2641
  %v2711 = vpop.f32.mrb[0].mxu0
  %v2712 = vadd.f32 %v687, %v2711
  %v2713 = vpop.f32.mrb[0].mxu0
  %2714 = vdwg.mxu0
  %v2715 = vsel %vm716, %v481, 0
  %v2717 = vsel %vm716, %v537, 0
  %2719 = vmatprep.subr.mxu0 0.0
  %2720 = vmatpush1.xpose.msra.mxu0 %v2717
  %2721 = vmatprep.subr.mxu0 0.0
  %2722 = vmatpush1.xpose.msra.mxu0 0.0
  %2723 = vmatprep.subr.mxu0 0.0
  %2724 = vmatpush1.xpose.msra.mxu0 0.0
  %2725 = vmatprep.subr.mxu0 0.0
  %2726 = vmatpush1.xpose.msra.mxu0 0.0
  %2727 = vmatprep.subr.mxu0 0.0
  %2728 = vmatpush1.xpose.msra.mxu0 0.0
  %2729 = vmatprep.subr.mxu0 0.0
  %2730 = vmatpush1.xpose.msra.mxu0 0.0
  %2731 = vmatprep.subr.mxu0 0.0
  %2732 = vmatpush1.xpose.msra.mxu0 0.0
  %2733 = vmatprep.subr.mxu0 0.0
  %2734 = vmatpush1.xpose.msra.mxu0 0.0
  %2735 = vmatprep.subr.mxu0 0.0
  %2736 = vmatpush1.xpose.msra.mxu0 0.0
  %2737 = vmatprep.subr.mxu0 0.0
  %2738 = vmatpush1.xpose.msra.mxu0 0.0
  %2739 = vmatprep.subr.mxu0 0.0
  %2740 = vmatpush1.xpose.msra.mxu0 0.0
  %2741 = vmatprep.subr.mxu0 0.0
  %2742 = vmatpush1.xpose.msra.mxu0 0.0
  %2743 = vmatprep.subr.mxu0 0.0
  %2744 = vmatpush1.xpose.msra.mxu0 0.0
  %2745 = vmatprep.subr.mxu0 0.0
  %2746 = vmatpush1.xpose.msra.mxu0 0.0
  %2747 = vmatprep.subr.mxu0 0.0
  %2748 = vmatpush1.xpose.msra.mxu0 0.0
  %2749 = vmatprep.subr.mxu0 0.0
  %2750 = vmatpush1.xpose.msra.mxu0 0.0
  %2751 = vmatprep.subr.mxu0 0.0
  %2752 = vmatpush1.xpose.msra.mxu0 0.0
  %2753 = vmatprep.subr.mxu0 0.0
  %2754 = vmatpush1.xpose.msra.mxu0 0.0
  %2755 = vmatprep.subr.mxu0 0.0
  %2756 = vmatpush1.xpose.msra.mxu0 0.0
  %2757 = vmatprep.subr.mxu0 0.0
  %2758 = vmatpush1.xpose.msra.mxu0 0.0
  %2759 = vmatprep.subr.mxu0 0.0
  %2760 = vmatpush1.xpose.msra.mxu0 0.0
  %2761 = vmatprep.subr.mxu0 0.0
  %2762 = vmatpush1.xpose.msra.mxu0 0.0
  %2763 = vmatprep.subr.mxu0 0.0
  %2764 = vmatpush1.xpose.msra.mxu0 0.0
  %2765 = vmatprep.subr.mxu0 0.0
  %2766 = vmatpush1.xpose.msra.mxu0 0.0
  %2767 = vmatprep.subr.mxu0 0.0
  %2768 = vmatpush1.xpose.msra.mxu0 0.0
  %2769 = vmatprep.subr.mxu0 0.0
  %2770 = vmatpush1.xpose.msra.mxu0 0.0
  %2771 = vmatprep.subr.mxu0 0.0
  %2772 = vmatpush1.xpose.msra.mxu0 0.0
  %2773 = vmatprep.subr.mxu0 0.0
  %2774 = vmatpush1.xpose.msra.mxu0 0.0
  %2775 = vmatprep.subr.mxu0 0.0
  %2776 = vmatpush1.xpose.msra.mxu0 0.0
  %2777 = vmatprep.subr.mxu0 0.0
  %2778 = vmatpush1.xpose.msra.mxu0 0.0
  %2779 = vmatprep.subr.mxu0 0.0
  %2780 = vmatpush1.xpose.msra.mxu0 0.0
  %2781 = vmatprep.subr.mxu0 0.0
  %2782 = vmatpush1.xpose.msra.mxu0 0.0
  %2783 = vmatprep.mubr.f32.mxu0 0.0
  %2784 = vmatmul.mubr.f32.gmra.mrb[0].mxu0 %v2715
  %v2785 = vpop.f32.mrb[0].mxu0
  %v2786 = vadd.f32 %v691, %v2785
  %v2787 = vpop.f32.mrb[0].mxu0
  %2788 = vdwg.mxu0
  %v2789 = vsel %vm716, %v483, 0
  %v2791 = vsel %vm716, %v539, 0
  %2793 = vmatprep.subr.mxu0 0.0
  %2794 = vmatpush1.xpose.msra.mxu0 %v2791
  %2795 = vmatprep.subr.mxu0 0.0
  %2796 = vmatpush1.xpose.msra.mxu0 0.0
  %2797 = vmatprep.subr.mxu0 0.0
  %2798 = vmatpush1.xpose.msra.mxu0 0.0
  %2799 = vmatprep.subr.mxu0 0.0
  %2800 = vmatpush1.xpose.msra.mxu0 0.0
  %2801 = vmatprep.subr.mxu0 0.0
  %2802 = vmatpush1.xpose.msra.mxu0 0.0
  %2803 = vmatprep.subr.mxu0 0.0
  %2804 = vmatpush1.xpose.msra.mxu0 0.0
  %2805 = vmatprep.subr.mxu0 0.0
  %2806 = vmatpush1.xpose.msra.mxu0 0.0
  %2807 = vmatprep.subr.mxu0 0.0
  %2808 = vmatpush1.xpose.msra.mxu0 0.0
  %2809 = vmatprep.subr.mxu0 0.0
  %2810 = vmatpush1.xpose.msra.mxu0 0.0
  %2811 = vmatprep.subr.mxu0 0.0
  %2812 = vmatpush1.xpose.msra.mxu0 0.0
  %2813 = vmatprep.subr.mxu0 0.0
  %2814 = vmatpush1.xpose.msra.mxu0 0.0
  %2815 = vmatprep.subr.mxu0 0.0
  %2816 = vmatpush1.xpose.msra.mxu0 0.0
  %2817 = vmatprep.subr.mxu0 0.0
  %2818 = vmatpush1.xpose.msra.mxu0 0.0
  %2819 = vmatprep.subr.mxu0 0.0
  %2820 = vmatpush1.xpose.msra.mxu0 0.0
  %2821 = vmatprep.subr.mxu0 0.0
  %2822 = vmatpush1.xpose.msra.mxu0 0.0
  %2823 = vmatprep.subr.mxu0 0.0
  %2824 = vmatpush1.xpose.msra.mxu0 0.0
  %2825 = vmatprep.subr.mxu0 0.0
  %2826 = vmatpush1.xpose.msra.mxu0 0.0
  %2827 = vmatprep.subr.mxu0 0.0
  %2828 = vmatpush1.xpose.msra.mxu0 0.0
  %2829 = vmatprep.subr.mxu0 0.0
  %2830 = vmatpush1.xpose.msra.mxu0 0.0
  %2831 = vmatprep.subr.mxu0 0.0
  %2832 = vmatpush1.xpose.msra.mxu0 0.0
  %2833 = vmatprep.subr.mxu0 0.0
  %2834 = vmatpush1.xpose.msra.mxu0 0.0
  %2835 = vmatprep.subr.mxu0 0.0
  %2836 = vmatpush1.xpose.msra.mxu0 0.0
  %2837 = vmatprep.subr.mxu0 0.0
  %2838 = vmatpush1.xpose.msra.mxu0 0.0
  %2839 = vmatprep.subr.mxu0 0.0
  %2840 = vmatpush1.xpose.msra.mxu0 0.0
  %2841 = vmatprep.subr.mxu0 0.0
  %2842 = vmatpush1.xpose.msra.mxu0 0.0
  %2843 = vmatprep.subr.mxu0 0.0
  %2844 = vmatpush1.xpose.msra.mxu0 0.0
  %2845 = vmatprep.subr.mxu0 0.0
  %2846 = vmatpush1.xpose.msra.mxu0 0.0
  %2847 = vmatprep.subr.mxu0 0.0
  %2848 = vmatpush1.xpose.msra.mxu0 0.0
  %2849 = vmatprep.subr.mxu0 0.0
  %2850 = vmatpush1.xpose.msra.mxu0 0.0
  %2851 = vmatprep.subr.mxu0 0.0
  %2852 = vmatpush1.xpose.msra.mxu0 0.0
  %2853 = vmatprep.subr.mxu0 0.0
  %2854 = vmatpush1.xpose.msra.mxu0 0.0
  %2855 = vmatprep.subr.mxu0 0.0
  %2856 = vmatpush1.xpose.msra.mxu0 0.0
  %2857 = vmatprep.mubr.f32.mxu0 0.0
  %2858 = vmatmul.mubr.f32.gmra.mrb[0].mxu0 %v2789
  %v2859 = vpop.f32.mrb[0].mxu0
  %v2860 = vadd.f32 %v695, %v2859
  %v2861 = vpop.f32.mrb[0].mxu0
  %2862 = vdwg.mxu0
  %v2863 = vsel %vm716, %v485, 0
  %v2865 = vsel %vm716, %v541, 0
  %2867 = vmatprep.subr.mxu0 0.0
  %2868 = vmatpush1.xpose.msra.mxu0 %v2865
  %2869 = vmatprep.subr.mxu0 0.0
  %2870 = vmatpush1.xpose.msra.mxu0 0.0
  %2871 = vmatprep.subr.mxu0 0.0
  %2872 = vmatpush1.xpose.msra.mxu0 0.0
  %2873 = vmatprep.subr.mxu0 0.0
  %2874 = vmatpush1.xpose.msra.mxu0 0.0
  %2875 = vmatprep.subr.mxu0 0.0
  %2876 = vmatpush1.xpose.msra.mxu0 0.0
  %2877 = vmatprep.subr.mxu0 0.0
  %2878 = vmatpush1.xpose.msra.mxu0 0.0
  %2879 = vmatprep.subr.mxu0 0.0
  %2880 = vmatpush1.xpose.msra.mxu0 0.0
  %2881 = vmatprep.subr.mxu0 0.0
  %2882 = vmatpush1.xpose.msra.mxu0 0.0
  %2883 = vmatprep.subr.mxu0 0.0
  %2884 = vmatpush1.xpose.msra.mxu0 0.0
  %2885 = vmatprep.subr.mxu0 0.0
  %2886 = vmatpush1.xpose.msra.mxu0 0.0
  %2887 = vmatprep.subr.mxu0 0.0
  %2888 = vmatpush1.xpose.msra.mxu0 0.0
  %2889 = vmatprep.subr.mxu0 0.0
  %2890 = vmatpush1.xpose.msra.mxu0 0.0
  %2891 = vmatprep.subr.mxu0 0.0
  %2892 = vmatpush1.xpose.msra.mxu0 0.0
  %2893 = vmatprep.subr.mxu0 0.0
  %2894 = vmatpush1.xpose.msra.mxu0 0.0
  %2895 = vmatprep.subr.mxu0 0.0
  %2896 = vmatpush1.xpose.msra.mxu0 0.0
  %2897 = vmatprep.subr.mxu0 0.0
  %2898 = vmatpush1.xpose.msra.mxu0 0.0
  %2899 = vmatprep.subr.mxu0 0.0
  %2900 = vmatpush1.xpose.msra.mxu0 0.0
  %2901 = vmatprep.subr.mxu0 0.0
  %2902 = vmatpush1.xpose.msra.mxu0 0.0
  %2903 = vmatprep.subr.mxu0 0.0
  %2904 = vmatpush1.xpose.msra.mxu0 0.0
  %2905 = vmatprep.subr.mxu0 0.0
  %2906 = vmatpush1.xpose.msra.mxu0 0.0
  %2907 = vmatprep.subr.mxu0 0.0
  %2908 = vmatpush1.xpose.msra.mxu0 0.0
  %2909 = vmatprep.subr.mxu0 0.0
  %2910 = vmatpush1.xpose.msra.mxu0 0.0
  %2911 = vmatprep.subr.mxu0 0.0
  %2912 = vmatpush1.xpose.msra.mxu0 0.0
  %2913 = vmatprep.subr.mxu0 0.0
  %2914 = vmatpush1.xpose.msra.mxu0 0.0
  %2915 = vmatprep.subr.mxu0 0.0
  %2916 = vmatpush1.xpose.msra.mxu0 0.0
  %2917 = vmatprep.subr.mxu0 0.0
  %2918 = vmatpush1.xpose.msra.mxu0 0.0
  %2919 = vmatprep.subr.mxu0 0.0
  %2920 = vmatpush1.xpose.msra.mxu0 0.0
  %2921 = vmatprep.subr.mxu0 0.0
  %2922 = vmatpush1.xpose.msra.mxu0 0.0
  %2923 = vmatprep.subr.mxu0 0.0
  %2924 = vmatpush1.xpose.msra.mxu0 0.0
  %2925 = vmatprep.subr.mxu0 0.0
  %2926 = vmatpush1.xpose.msra.mxu0 0.0
  %2927 = vmatprep.subr.mxu0 0.0
  %2928 = vmatpush1.xpose.msra.mxu0 0.0
  %2929 = vmatprep.subr.mxu0 0.0
  %2930 = vmatpush1.xpose.msra.mxu0 0.0
  %2931 = vmatprep.mubr.f32.mxu0 0.0
  %2932 = vmatmul.mubr.f32.gmra.mrb[0].mxu0 %v2863
  %v2933 = vpop.f32.mrb[0].mxu0
  %v2934 = vadd.f32 %v699, %v2933
  %v2935 = vpop.f32.mrb[0].mxu0
  %2936 = vdwg.mxu0
  %v2937 = vsel %vm716, %v487, 0
  %v2939 = vsel %vm716, %v543, 0
  %2941 = vmatprep.subr.mxu0 0.0
  %2942 = vmatpush1.xpose.msra.mxu0 %v2939
  %2943 = vmatprep.subr.mxu0 0.0
  %2944 = vmatpush1.xpose.msra.mxu0 0.0
  %2945 = vmatprep.subr.mxu0 0.0
  %2946 = vmatpush1.xpose.msra.mxu0 0.0
  %2947 = vmatprep.subr.mxu0 0.0
  %2948 = vmatpush1.xpose.msra.mxu0 0.0
  %2949 = vmatprep.subr.mxu0 0.0
  %2950 = vmatpush1.xpose.msra.mxu0 0.0
  %2951 = vmatprep.subr.mxu0 0.0
  %2952 = vmatpush1.xpose.msra.mxu0 0.0
  %2953 = vmatprep.subr.mxu0 0.0
  %2954 = vmatpush1.xpose.msra.mxu0 0.0
  %2955 = vmatprep.subr.mxu0 0.0
  %2956 = vmatpush1.xpose.msra.mxu0 0.0
  %2957 = vmatprep.subr.mxu0 0.0
  %2958 = vmatpush1.xpose.msra.mxu0 0.0
  %2959 = vmatprep.subr.mxu0 0.0
  %2960 = vmatpush1.xpose.msra.mxu0 0.0
  %2961 = vmatprep.subr.mxu0 0.0
  %2962 = vmatpush1.xpose.msra.mxu0 0.0
  %2963 = vmatprep.subr.mxu0 0.0
  %2964 = vmatpush1.xpose.msra.mxu0 0.0
  %2965 = vmatprep.subr.mxu0 0.0
  %2966 = vmatpush1.xpose.msra.mxu0 0.0
  %2967 = vmatprep.subr.mxu0 0.0
  %2968 = vmatpush1.xpose.msra.mxu0 0.0
  %2969 = vmatprep.subr.mxu0 0.0
  %2970 = vmatpush1.xpose.msra.mxu0 0.0
  %2971 = vmatprep.subr.mxu0 0.0
  %2972 = vmatpush1.xpose.msra.mxu0 0.0
  %2973 = vmatprep.subr.mxu0 0.0
  %2974 = vmatpush1.xpose.msra.mxu0 0.0
  %2975 = vmatprep.subr.mxu0 0.0
  %2976 = vmatpush1.xpose.msra.mxu0 0.0
  %2977 = vmatprep.subr.mxu0 0.0
  %2978 = vmatpush1.xpose.msra.mxu0 0.0
  %2979 = vmatprep.subr.mxu0 0.0
  %2980 = vmatpush1.xpose.msra.mxu0 0.0
  %2981 = vmatprep.subr.mxu0 0.0
  %2982 = vmatpush1.xpose.msra.mxu0 0.0
  %2983 = vmatprep.subr.mxu0 0.0
  %2984 = vmatpush1.xpose.msra.mxu0 0.0
  %2985 = vmatprep.subr.mxu0 0.0
  %2986 = vmatpush1.xpose.msra.mxu0 0.0
  %2987 = vmatprep.subr.mxu0 0.0
  %2988 = vmatpush1.xpose.msra.mxu0 0.0
  %2989 = vmatprep.subr.mxu0 0.0
  %2990 = vmatpush1.xpose.msra.mxu0 0.0
  %2991 = vmatprep.subr.mxu0 0.0
  %2992 = vmatpush1.xpose.msra.mxu0 0.0
  %2993 = vmatprep.subr.mxu0 0.0
  %2994 = vmatpush1.xpose.msra.mxu0 0.0
  %2995 = vmatprep.subr.mxu0 0.0
  %2996 = vmatpush1.xpose.msra.mxu0 0.0
  %2997 = vmatprep.subr.mxu0 0.0
  %2998 = vmatpush1.xpose.msra.mxu0 0.0
  %2999 = vmatprep.subr.mxu0 0.0
  %3000 = vmatpush1.xpose.msra.mxu0 0.0
  %3001 = vmatprep.subr.mxu0 0.0
  %3002 = vmatpush1.xpose.msra.mxu0 0.0
  %3003 = vmatprep.subr.mxu0 0.0
  %3004 = vmatpush1.xpose.msra.mxu0 0.0
  %3005 = vmatprep.mubr.f32.mxu0 0.0
  %3006 = vmatmul.mubr.f32.gmra.mrb[0].mxu0 %v2937
  %v3007 = vpop.f32.mrb[0].mxu0
  %v3008 = vadd.f32 %v703, %v3007
  %v3009 = vpop.f32.mrb[0].mxu0
  %3010 = vdwg.mxu0
  %v3011 = vsel %vm716, %v489, 0
  %v3013 = vsel %vm716, %v545, 0
  %3015 = vmatprep.subr.mxu0 0.0
  %3016 = vmatpush1.xpose.msra.mxu0 %v3013
  %3017 = vmatprep.subr.mxu0 0.0
  %3018 = vmatpush1.xpose.msra.mxu0 0.0
  %3019 = vmatprep.subr.mxu0 0.0
  %3020 = vmatpush1.xpose.msra.mxu0 0.0
  %3021 = vmatprep.subr.mxu0 0.0
  %3022 = vmatpush1.xpose.msra.mxu0 0.0
  %3023 = vmatprep.subr.mxu0 0.0
  %3024 = vmatpush1.xpose.msra.mxu0 0.0
  %3025 = vmatprep.subr.mxu0 0.0
  %3026 = vmatpush1.xpose.msra.mxu0 0.0
  %3027 = vmatprep.subr.mxu0 0.0
  %3028 = vmatpush1.xpose.msra.mxu0 0.0
  %3029 = vmatprep.subr.mxu0 0.0
  %3030 = vmatpush1.xpose.msra.mxu0 0.0
  %3031 = vmatprep.subr.mxu0 0.0
  %3032 = vmatpush1.xpose.msra.mxu0 0.0
  %3033 = vmatprep.subr.mxu0 0.0
  %3034 = vmatpush1.xpose.msra.mxu0 0.0
  %3035 = vmatprep.subr.mxu0 0.0
  %3036 = vmatpush1.xpose.msra.mxu0 0.0
  %3037 = vmatprep.subr.mxu0 0.0
  %3038 = vmatpush1.xpose.msra.mxu0 0.0
  %3039 = vmatprep.subr.mxu0 0.0
  %3040 = vmatpush1.xpose.msra.mxu0 0.0
  %3041 = vmatprep.subr.mxu0 0.0
  %3042 = vmatpush1.xpose.msra.mxu0 0.0
  %3043 = vmatprep.subr.mxu0 0.0
  %3044 = vmatpush1.xpose.msra.mxu0 0.0
  %3045 = vmatprep.subr.mxu0 0.0
  %3046 = vmatpush1.xpose.msra.mxu0 0.0
  %3047 = vmatprep.subr.mxu0 0.0
  %3048 = vmatpush1.xpose.msra.mxu0 0.0
  %3049 = vmatprep.subr.mxu0 0.0
  %3050 = vmatpush1.xpose.msra.mxu0 0.0
  %3051 = vmatprep.subr.mxu0 0.0
  %3052 = vmatpush1.xpose.msra.mxu0 0.0
  %3053 = vmatprep.subr.mxu0 0.0
  %3054 = vmatpush1.xpose.msra.mxu0 0.0
  %3055 = vmatprep.subr.mxu0 0.0
  %3056 = vmatpush1.xpose.msra.mxu0 0.0
  %3057 = vmatprep.subr.mxu0 0.0
  %3058 = vmatpush1.xpose.msra.mxu0 0.0
  %3059 = vmatprep.subr.mxu0 0.0
  %3060 = vmatpush1.xpose.msra.mxu0 0.0
  %3061 = vmatprep.subr.mxu0 0.0
  %3062 = vmatpush1.xpose.msra.mxu0 0.0
  %3063 = vmatprep.subr.mxu0 0.0
  %3064 = vmatpush1.xpose.msra.mxu0 0.0
  %3065 = vmatprep.subr.mxu0 0.0
  %3066 = vmatpush1.xpose.msra.mxu0 0.0
  %3067 = vmatprep.subr.mxu0 0.0
  %3068 = vmatpush1.xpose.msra.mxu0 0.0
  %3069 = vmatprep.subr.mxu0 0.0
  %3070 = vmatpush1.xpose.msra.mxu0 0.0
  %3071 = vmatprep.subr.mxu0 0.0
  %3072 = vmatpush1.xpose.msra.mxu0 0.0
  %3073 = vmatprep.subr.mxu0 0.0
  %3074 = vmatpush1.xpose.msra.mxu0 0.0
  %3075 = vmatprep.subr.mxu0 0.0
  %3076 = vmatpush1.xpose.msra.mxu0 0.0
  %3077 = vmatprep.subr.mxu0 0.0
  %3078 = vmatpush1.xpose.msra.mxu0 0.0
  %3079 = vmatprep.mubr.f32.mxu0 0.0
  %3080 = vmatmul.mubr.f32.gmra.mrb[0].mxu0 %v3011
  %v3081 = vpop.f32.mrb[0].mxu0
  %v3082 = vadd.f32 %v707, %v3081
  %v3083 = vpop.f32.mrb[0].mxu0
  %3084 = vdwg.mxu0
  %v3085 = vsel %vm716, %v788, -inf
  %3086 = vmax.xlane.f32.xlu0 %v3085
  %v3087 = vpop.xlane.xlu0 %3086
  %v3088 = vsel %vm716, %v862, -inf
  %3089 = vmax.xlane.f32.xlu0 %v3088
  %v3090 = vpop.xlane.xlu0 %3089
  %v3091 = vsel %vm716, %v936, -inf
  %3092 = vmax.xlane.f32.xlu0 %v3091
  %v3093 = vpop.xlane.xlu0 %3092
  %v3094 = vsel %vm716, %v1010, -inf
  %3095 = vmax.xlane.f32.xlu0 %v3094
  %v3096 = vpop.xlane.xlu0 %3095
  %v3097 = vsel %vm716, %v1084, -inf
  %3098 = vmax.xlane.f32.xlu0 %v3097
  %v3099 = vpop.xlane.xlu0 %3098
  %v3100 = vsel %vm716, %v1158, -inf
  %3101 = vmax.xlane.f32.xlu0 %v3100
  %v3102 = vpop.xlane.xlu0 %3101
  %v3103 = vsel %vm716, %v1232, -inf
  %3104 = vmax.xlane.f32.xlu0 %v3103
  %v3105 = vpop.xlane.xlu0 %3104
  %v3106 = vsel %vm716, %v1306, -inf
  %3107 = vmax.xlane.f32.xlu0 %v3106
  %v3108 = vpop.xlane.xlu0 %3107
  %v3109 = vsel %vm716, %v1380, -inf
  %3110 = vmax.xlane.f32.xlu0 %v3109
  %v3111 = vpop.xlane.xlu0 %3110
  %v3112 = vsel %vm716, %v1454, -inf
  %3113 = vmax.xlane.f32.xlu0 %v3112
  %v3114 = vpop.xlane.xlu0 %3113
  %v3115 = vsel %vm716, %v1528, -inf
  %3116 = vmax.xlane.f32.xlu0 %v3115
  %v3117 = vpop.xlane.xlu0 %3116
  %v3118 = vsel %vm716, %v1602, -inf
  %3119 = vmax.xlane.f32.xlu0 %v3118
  %v3120 = vpop.xlane.xlu0 %3119
  %v3121 = vsel %vm716, %v1676, -inf
  %3122 = vmax.xlane.f32.xlu0 %v3121
  %v3123 = vpop.xlane.xlu0 %3122
  %v3124 = vsel %vm716, %v1750, -inf
  %3125 = vmax.xlane.f32.xlu0 %v3124
  %v3126 = vpop.xlane.xlu0 %3125
  %v3127 = vsel %vm716, %v1824, -inf
  %3128 = vmax.xlane.f32.xlu0 %v3127
  %v3129 = vpop.xlane.xlu0 %3128
  %v3130 = vsel %vm716, %v1898, -inf
  %3131 = vmax.xlane.f32.xlu0 %v3130
  %v3132 = vpop.xlane.xlu0 %3131
  %v3133 = vsel %vm716, %v1972, -inf
  %3134 = vmax.xlane.f32.xlu0 %v3133
  %v3135 = vpop.xlane.xlu0 %3134
  %v3136 = vsel %vm716, %v2046, -inf
  %3137 = vmax.xlane.f32.xlu0 %v3136
  %v3138 = vpop.xlane.xlu0 %3137
  %v3139 = vsel %vm716, %v2120, -inf
  %3140 = vmax.xlane.f32.xlu0 %v3139
  %v3141 = vpop.xlane.xlu0 %3140
  %v3142 = vsel %vm716, %v2194, -inf
  %3143 = vmax.xlane.f32.xlu0 %v3142
  %v3144 = vpop.xlane.xlu0 %3143
  %v3145 = vsel %vm716, %v2268, -inf
  %3146 = vmax.xlane.f32.xlu0 %v3145
  %v3147 = vpop.xlane.xlu0 %3146
  %v3148 = vsel %vm716, %v2342, -inf
  %3149 = vmax.xlane.f32.xlu0 %v3148
  %v3150 = vpop.xlane.xlu0 %3149
  %v3151 = vsel %vm716, %v2416, -inf
  %3152 = vmax.xlane.f32.xlu0 %v3151
  %v3153 = vpop.xlane.xlu0 %3152
  %v3154 = vsel %vm716, %v2490, -inf
  %3155 = vmax.xlane.f32.xlu0 %v3154
  %v3156 = vpop.xlane.xlu0 %3155
  %v3157 = vsel %vm716, %v2564, -inf
  %3158 = vmax.xlane.f32.xlu0 %v3157
  %v3159 = vpop.xlane.xlu0 %3158
  %v3160 = vsel %vm716, %v2638, -inf
  %3161 = vmax.xlane.f32.xlu0 %v3160
  %v3162 = vpop.xlane.xlu0 %3161
  %v3163 = vsel %vm716, %v2712, -inf
  %3164 = vmax.xlane.f32.xlu0 %v3163
  %v3165 = vpop.xlane.xlu0 %3164
  %v3166 = vsel %vm716, %v2786, -inf
  %3167 = vmax.xlane.f32.xlu0 %v3166
  %v3168 = vpop.xlane.xlu0 %3167
  %v3169 = vsel %vm716, %v2860, -inf
  %3170 = vmax.xlane.f32.xlu0 %v3169
  %v3171 = vpop.xlane.xlu0 %3170
  %v3172 = vsel %vm716, %v2934, -inf
  %3173 = vmax.xlane.f32.xlu0 %v3172
  %v3174 = vpop.xlane.xlu0 %3173
  %v3175 = vsel %vm716, %v3008, -inf
  %3176 = vmax.xlane.f32.xlu0 %v3175
  %v3177 = vpop.xlane.xlu0 %3176
  %v3178 = vsel %vm716, %v3082, -inf
  %3179 = vmax.xlane.f32.xlu0 %v3178
  %v3180 = vpop.xlane.xlu0 %3179
  %v3181 = vsub.f32 %v788, %v3087
  %v3182 = vsub.f32 %v862, %v3090
  %v3183 = vsub.f32 %v936, %v3093
  %v3184 = vsub.f32 %v1010, %v3096
  %v3185 = vsub.f32 %v1084, %v3099
  %v3186 = vsub.f32 %v1158, %v3102
  %v3187 = vsub.f32 %v1232, %v3105
  %v3188 = vsub.f32 %v1306, %v3108
  %v3189 = vsub.f32 %v1380, %v3111
  %v3190 = vsub.f32 %v1454, %v3114
  %v3191 = vsub.f32 %v1528, %v3117
  %v3192 = vsub.f32 %v1602, %v3120
  %v3193 = vsub.f32 %v1676, %v3123
  %v3194 = vsub.f32 %v1750, %v3126
  %v3195 = vsub.f32 %v1824, %v3129
  %v3196 = vsub.f32 %v1898, %v3132
  %v3197 = vsub.f32 %v1972, %v3135
  %v3198 = vsub.f32 %v2046, %v3138
  %v3199 = vsub.f32 %v2120, %v3141
  %v3200 = vsub.f32 %v2194, %v3144
  %v3201 = vsub.f32 %v2268, %v3147
  %v3202 = vsub.f32 %v2342, %v3150
  %v3203 = vsub.f32 %v2416, %v3153
  %v3204 = vsub.f32 %v2490, %v3156
  %v3205 = vsub.f32 %v2564, %v3159
  %v3206 = vsub.f32 %v2638, %v3162
  %v3207 = vsub.f32 %v2712, %v3165
  %v3208 = vsub.f32 %v2786, %v3168
  %v3209 = vsub.f32 %v2860, %v3171
  %v3210 = vsub.f32 %v2934, %v3174
  %v3211 = vsub.f32 %v3008, %v3177
  %v3212 = vsub.f32 %v3082, %v3180
  %v3213 = vmul.f32 %v3181, 1.442695
  %v3214 = vpow.pop %v3213
  %v3215 = vmul.f32 %v3182, 1.442695
  %v3216 = vpow.pop %v3215
  %v3217 = vmul.f32 %v3183, 1.442695
  %v3218 = vpow.pop %v3217
  %v3219 = vmul.f32 %v3184, 1.442695
  %v3220 = vpow.pop %v3219
  %v3221 = vmul.f32 %v3185, 1.442695
  %v3222 = vpow.pop %v3221
  %v3223 = vmul.f32 %v3186, 1.442695
  %v3224 = vpow.pop %v3223
  %v3225 = vmul.f32 %v3187, 1.442695
  %v3226 = vpow.pop %v3225
  %v3227 = vmul.f32 %v3188, 1.442695
  %v3228 = vpow.pop %v3227
  %v3229 = vmul.f32 %v3189, 1.442695
  %v3230 = vpow.pop %v3229
  %v3231 = vmul.f32 %v3190, 1.442695
  %v3232 = vpow.pop %v3231
  %v3233 = vmul.f32 %v3191, 1.442695
  %v3234 = vpow.pop %v3233
  %v3235 = vmul.f32 %v3192, 1.442695
  %v3236 = vpow.pop %v3235
  %v3237 = vmul.f32 %v3193, 1.442695
  %v3238 = vpow.pop %v3237
  %v3239 = vmul.f32 %v3194, 1.442695
  %v3240 = vpow.pop %v3239
  %v3241 = vmul.f32 %v3195, 1.442695
  %v3242 = vpow.pop %v3241
  %v3243 = vmul.f32 %v3196, 1.442695
  %v3244 = vpow.pop %v3243
  %v3245 = vmul.f32 %v3197, 1.442695
  %v3246 = vpow.pop %v3245
  %v3247 = vmul.f32 %v3198, 1.442695
  %v3248 = vpow.pop %v3247
  %v3249 = vmul.f32 %v3199, 1.442695
  %v3250 = vpow.pop %v3249
  %v3251 = vmul.f32 %v3200, 1.442695
  %v3252 = vpow.pop %v3251
  %v3253 = vmul.f32 %v3201, 1.442695
  %v3254 = vpow.pop %v3253
  %v3255 = vmul.f32 %v3202, 1.442695
  %v3256 = vpow.pop %v3255
  %v3257 = vmul.f32 %v3203, 1.442695
  %v3258 = vpow.pop %v3257
  %v3259 = vmul.f32 %v3204, 1.442695
  %v3260 = vpow.pop %v3259
  %v3261 = vmul.f32 %v3205, 1.442695
  %v3262 = vpow.pop %v3261
  %v3263 = vmul.f32 %v3206, 1.442695
  %v3264 = vpow.pop %v3263
  %v3265 = vmul.f32 %v3207, 1.442695
  %v3266 = vpow.pop %v3265
  %v3267 = vmul.f32 %v3208, 1.442695
  %v3268 = vpow.pop %v3267
  %v3269 = vmul.f32 %v3209, 1.442695
  %v3270 = vpow.pop %v3269
  %v3271 = vmul.f32 %v3210, 1.442695
  %v3272 = vpow.pop %v3271
  %v3273 = vmul.f32 %v3211, 1.442695
  %v3274 = vpow.pop %v3273
  %v3275 = vmul.f32 %v3212, 1.442695
  %v3276 = vpow.pop %v3275
  %v3277 = vsel %vm716, %v3214, 0.0
  %3278 = vadd.xlane.f32.xlu0 %v3277
  %v3279 = vpop.xlane.xlu0 %3278
  %v3280 = vsel %vm716, %v3216, 0.0
  %3281 = vadd.xlane.f32.xlu0 %v3280
  %v3282 = vpop.xlane.xlu0 %3281
  %v3283 = vsel %vm716, %v3218, 0.0
  %3284 = vadd.xlane.f32.xlu0 %v3283
  %v3285 = vpop.xlane.xlu0 %3284
  %v3286 = vsel %vm716, %v3220, 0.0
  %3287 = vadd.xlane.f32.xlu0 %v3286
  %v3288 = vpop.xlane.xlu0 %3287
  %v3289 = vsel %vm716, %v3222, 0.0
  %3290 = vadd.xlane.f32.xlu0 %v3289
  %v3291 = vpop.xlane.xlu0 %3290
  %v3292 = vsel %vm716, %v3224, 0.0
  %3293 = vadd.xlane.f32.xlu0 %v3292
  %v3294 = vpop.xlane.xlu0 %3293
  %v3295 = vsel %vm716, %v3226, 0.0
  %3296 = vadd.xlane.f32.xlu0 %v3295
  %v3297 = vpop.xlane.xlu0 %3296
  %v3298 = vsel %vm716, %v3228, 0.0
  %3299 = vadd.xlane.f32.xlu0 %v3298
  %v3300 = vpop.xlane.xlu0 %3299
  %v3301 = vsel %vm716, %v3230, 0.0
  %3302 = vadd.xlane.f32.xlu0 %v3301
  %v3303 = vpop.xlane.xlu0 %3302
  %v3304 = vsel %vm716, %v3232, 0.0
  %3305 = vadd.xlane.f32.xlu0 %v3304
  %v3306 = vpop.xlane.xlu0 %3305
  %v3307 = vsel %vm716, %v3234, 0.0
  %3308 = vadd.xlane.f32.xlu0 %v3307
  %v3309 = vpop.xlane.xlu0 %3308
  %v3310 = vsel %vm716, %v3236, 0.0
  %3311 = vadd.xlane.f32.xlu0 %v3310
  %v3312 = vpop.xlane.xlu0 %3311
  %v3313 = vsel %vm716, %v3238, 0.0
  %3314 = vadd.xlane.f32.xlu0 %v3313
  %v3315 = vpop.xlane.xlu0 %3314
  %v3316 = vsel %vm716, %v3240, 0.0
  %3317 = vadd.xlane.f32.xlu0 %v3316
  %v3318 = vpop.xlane.xlu0 %3317
  %v3319 = vsel %vm716, %v3242, 0.0
  %3320 = vadd.xlane.f32.xlu0 %v3319
  %v3321 = vpop.xlane.xlu0 %3320
  %v3322 = vsel %vm716, %v3244, 0.0
  %3323 = vadd.xlane.f32.xlu0 %v3322
  %v3324 = vpop.xlane.xlu0 %3323
  %v3325 = vsel %vm716, %v3246, 0.0
  %3326 = vadd.xlane.f32.xlu0 %v3325
  %v3327 = vpop.xlane.xlu0 %3326
  %v3328 = vsel %vm716, %v3248, 0.0
  %3329 = vadd.xlane.f32.xlu0 %v3328
  %v3330 = vpop.xlane.xlu0 %3329
  %v3331 = vsel %vm716, %v3250, 0.0
  %3332 = vadd.xlane.f32.xlu0 %v3331
  %v3333 = vpop.xlane.xlu0 %3332
  %v3334 = vsel %vm716, %v3252, 0.0
  %3335 = vadd.xlane.f32.xlu0 %v3334
  %v3336 = vpop.xlane.xlu0 %3335
  %v3337 = vsel %vm716, %v3254, 0.0
  %3338 = vadd.xlane.f32.xlu0 %v3337
  %v3339 = vpop.xlane.xlu0 %3338
  %v3340 = vsel %vm716, %v3256, 0.0
  %3341 = vadd.xlane.f32.xlu0 %v3340
  %v3342 = vpop.xlane.xlu0 %3341
  %v3343 = vsel %vm716, %v3258, 0.0
  %3344 = vadd.xlane.f32.xlu0 %v3343
  %v3345 = vpop.xlane.xlu0 %3344
  %v3346 = vsel %vm716, %v3260, 0.0
  %3347 = vadd.xlane.f32.xlu0 %v3346
  %v3348 = vpop.xlane.xlu0 %3347
  %v3349 = vsel %vm716, %v3262, 0.0
  %3350 = vadd.xlane.f32.xlu0 %v3349
  %v3351 = vpop.xlane.xlu0 %3350
  %v3352 = vsel %vm716, %v3264, 0.0
  %3353 = vadd.xlane.f32.xlu0 %v3352
  %v3354 = vpop.xlane.xlu0 %3353
  %v3355 = vsel %vm716, %v3266, 0.0
  %3356 = vadd.xlane.f32.xlu0 %v3355
  %v3357 = vpop.xlane.xlu0 %3356
  %v3358 = vsel %vm716, %v3268, 0.0
  %3359 = vadd.xlane.f32.xlu0 %v3358
  %v3360 = vpop.xlane.xlu0 %3359
  %v3361 = vsel %vm716, %v3270, 0.0
  %3362 = vadd.xlane.f32.xlu0 %v3361
  %v3363 = vpop.xlane.xlu0 %3362
  %v3364 = vsel %vm716, %v3272, 0.0
  %3365 = vadd.xlane.f32.xlu0 %v3364
  %v3366 = vpop.xlane.xlu0 %3365
  %v3367 = vsel %vm716, %v3274, 0.0
  %3368 = vadd.xlane.f32.xlu0 %v3367
  %v3369 = vpop.xlane.xlu0 %3368
  %v3370 = vsel %vm716, %v3276, 0.0
  %3371 = vadd.xlane.f32.xlu0 %v3370
  %v3372 = vpop.xlane.xlu0 %3371
  %v3373 = vrcp.pop %v3279
  %v3374 = vrcp.pop %v3282
  %v3375 = vrcp.pop %v3285
  %v3376 = vrcp.pop %v3288
  %v3377 = vrcp.pop %v3291
  %v3378 = vrcp.pop %v3294
  %v3379 = vrcp.pop %v3297
  %v3380 = vrcp.pop %v3300
  %v3381 = vrcp.pop %v3303
  %v3382 = vrcp.pop %v3306
  %v3383 = vrcp.pop %v3309
  %v3384 = vrcp.pop %v3312
  %v3385 = vrcp.pop %v3315
  %v3386 = vrcp.pop %v3318
  %v3387 = vrcp.pop %v3321
  %v3388 = vrcp.pop %v3324
  %v3389 = vrcp.pop %v3327
  %v3390 = vrcp.pop %v3330
  %v3391 = vrcp.pop %v3333
  %v3392 = vrcp.pop %v3336
  %v3393 = vrcp.pop %v3339
  %v3394 = vrcp.pop %v3342
  %v3395 = vrcp.pop %v3345
  %v3396 = vrcp.pop %v3348
  %v3397 = vrcp.pop %v3351
  %v3398 = vrcp.pop %v3354
  %v3399 = vrcp.pop %v3357
  %v3400 = vrcp.pop %v3360
  %v3401 = vrcp.pop %v3363
  %v3402 = vrcp.pop %v3366
  %v3403 = vrcp.pop %v3369
  %v3404 = vrcp.pop %v3372
  %v3405 = vmul.f32 %v3214, %v3373
  %v3406 = vmul.f32 %v3216, %v3374
  %v3407 = vmul.f32 %v3218, %v3375
  %v3408 = vmul.f32 %v3220, %v3376
  %v3409 = vmul.f32 %v3222, %v3377
  %v3410 = vmul.f32 %v3224, %v3378
  %v3411 = vmul.f32 %v3226, %v3379
  %v3412 = vmul.f32 %v3228, %v3380
  %v3413 = vmul.f32 %v3230, %v3381
  %v3414 = vmul.f32 %v3232, %v3382
  %v3415 = vmul.f32 %v3234, %v3383
  %v3416 = vmul.f32 %v3236, %v3384
  %v3417 = vmul.f32 %v3238, %v3385
  %v3418 = vmul.f32 %v3240, %v3386
  %v3419 = vmul.f32 %v3242, %v3387
  %v3420 = vmul.f32 %v3244, %v3388
  %v3421 = vmul.f32 %v3246, %v3389
  %v3422 = vmul.f32 %v3248, %v3390
  %v3423 = vmul.f32 %v3250, %v3391
  %v3424 = vmul.f32 %v3252, %v3392
  %v3425 = vmul.f32 %v3254, %v3393
  %v3426 = vmul.f32 %v3256, %v3394
  %v3427 = vmul.f32 %v3258, %v3395
  %v3428 = vmul.f32 %v3260, %v3396
  %v3429 = vmul.f32 %v3262, %v3397
  %v3430 = vmul.f32 %v3264, %v3398
  %v3431 = vmul.f32 %v3266, %v3399
  %v3432 = vmul.f32 %v3268, %v3400
  %v3433 = vmul.f32 %v3270, %v3401
  %v3434 = vmul.f32 %v3272, %v3402
  %v3435 = vmul.f32 %v3274, %v3403
  %v3436 = vmul.f32 %v3276, %v3404
  %v3438 = vsel %vm716, %v3405, 0
  %3440 = vmatprep.subr.mxu0 0.0
  %3441 = vmatpush1.msra.mxu0 %v396
  %3442 = vmatprep.subr.mxu0 0.0
  %3443 = vmatpush1.msra.mxu0 0.0
  %3444 = vmatprep.subr.mxu0 0.0
  %3445 = vmatpush1.msra.mxu0 0.0
  %3446 = vmatprep.subr.mxu0 0.0
  %3447 = vmatpush1.msra.mxu0 0.0
  %3448 = vmatprep.subr.mxu0 0.0
  %3449 = vmatpush1.msra.mxu0 0.0
  %3450 = vmatprep.subr.mxu0 0.0
  %3451 = vmatpush1.msra.mxu0 0.0
  %3452 = vmatprep.subr.mxu0 0.0
  %3453 = vmatpush1.msra.mxu0 0.0
  %3454 = vmatprep.subr.mxu0 0.0
  %3455 = vmatpush1.msra.mxu0 0.0
  %3456 = vmatprep.subr.mxu0 0.0
  %3457 = vmatpush1.msra.mxu0 0.0
  %3458 = vmatprep.subr.mxu0 0.0
  %3459 = vmatpush1.msra.mxu0 0.0
  %3460 = vmatprep.subr.mxu0 0.0
  %3461 = vmatpush1.msra.mxu0 0.0
  %3462 = vmatprep.subr.mxu0 0.0
  %3463 = vmatpush1.msra.mxu0 0.0
  %3464 = vmatprep.subr.mxu0 0.0
  %3465 = vmatpush1.msra.mxu0 0.0
  %3466 = vmatprep.subr.mxu0 0.0
  %3467 = vmatpush1.msra.mxu0 0.0
  %3468 = vmatprep.subr.mxu0 0.0
  %3469 = vmatpush1.msra.mxu0 0.0
  %3470 = vmatprep.subr.mxu0 0.0
  %3471 = vmatpush1.msra.mxu0 0.0
  %3472 = vmatprep.subr.mxu0 0.0
  %3473 = vmatpush1.msra.mxu0 0.0
  %3474 = vmatprep.subr.mxu0 0.0
  %3475 = vmatpush1.msra.mxu0 0.0
  %3476 = vmatprep.subr.mxu0 0.0
  %3477 = vmatpush1.msra.mxu0 0.0
  %3478 = vmatprep.subr.mxu0 0.0
  %3479 = vmatpush1.msra.mxu0 0.0
  %3480 = vmatprep.subr.mxu0 0.0
  %3481 = vmatpush1.msra.mxu0 0.0
  %3482 = vmatprep.subr.mxu0 0.0
  %3483 = vmatpush1.msra.mxu0 0.0
  %3484 = vmatprep.subr.mxu0 0.0
  %3485 = vmatpush1.msra.mxu0 0.0
  %3486 = vmatprep.subr.mxu0 0.0
  %3487 = vmatpush1.msra.mxu0 0.0
  %3488 = vmatprep.subr.mxu0 0.0
  %3489 = vmatpush1.msra.mxu0 0.0
  %3490 = vmatprep.subr.mxu0 0.0
  %3491 = vmatpush1.msra.mxu0 0.0
  %3492 = vmatprep.subr.mxu0 0.0
  %3493 = vmatpush1.msra.mxu0 0.0
  %3494 = vmatprep.subr.mxu0 0.0
  %3495 = vmatpush1.msra.mxu0 0.0
  %3496 = vmatprep.subr.mxu0 0.0
  %3497 = vmatpush1.msra.mxu0 0.0
  %3498 = vmatprep.subr.mxu0 0.0
  %3499 = vmatpush1.msra.mxu0 0.0
  %3500 = vmatprep.subr.mxu0 0.0
  %3501 = vmatpush1.msra.mxu0 0.0
  %3502 = vmatprep.subr.mxu0 0.0
  %3503 = vmatpush1.msra.mxu0 0.0
  %3504 = vmatprep.mubr.f32.mxu0 0.0
  %3505 = vmatmul.mubr.f32.gmra.mrb[0].mxu0 %v3438
  %v3506 = vpop.f32.mrb[0].mxu0
  %v3507 = vadd.f32 0.0, %v3506
  %v3508 = vpop.f32.mrb[0].mxu0
  %3509 = vdwg.mxu0
  %v3511 = vsel %vm716, %v3406, 0
  %3513 = vmatprep.subr.mxu0 0.0
  %3514 = vmatpush1.msra.mxu0 %v401
  %3515 = vmatprep.subr.mxu0 0.0
  %3516 = vmatpush1.msra.mxu0 0.0
  %3517 = vmatprep.subr.mxu0 0.0
  %3518 = vmatpush1.msra.mxu0 0.0
  %3519 = vmatprep.subr.mxu0 0.0
  %3520 = vmatpush1.msra.mxu0 0.0
  %3521 = vmatprep.subr.mxu0 0.0
  %3522 = vmatpush1.msra.mxu0 0.0
  %3523 = vmatprep.subr.mxu0 0.0
  %3524 = vmatpush1.msra.mxu0 0.0
  %3525 = vmatprep.subr.mxu0 0.0
  %3526 = vmatpush1.msra.mxu0 0.0
  %3527 = vmatprep.subr.mxu0 0.0
  %3528 = vmatpush1.msra.mxu0 0.0
  %3529 = vmatprep.subr.mxu0 0.0
  %3530 = vmatpush1.msra.mxu0 0.0
  %3531 = vmatprep.subr.mxu0 0.0
  %3532 = vmatpush1.msra.mxu0 0.0
  %3533 = vmatprep.subr.mxu0 0.0
  %3534 = vmatpush1.msra.mxu0 0.0
  %3535 = vmatprep.subr.mxu0 0.0
  %3536 = vmatpush1.msra.mxu0 0.0
  %3537 = vmatprep.subr.mxu0 0.0
  %3538 = vmatpush1.msra.mxu0 0.0
  %3539 = vmatprep.subr.mxu0 0.0
  %3540 = vmatpush1.msra.mxu0 0.0
  %3541 = vmatprep.subr.mxu0 0.0
  %3542 = vmatpush1.msra.mxu0 0.0
  %3543 = vmatprep.subr.mxu0 0.0
  %3544 = vmatpush1.msra.mxu0 0.0
  %3545 = vmatprep.subr.mxu0 0.0
  %3546 = vmatpush1.msra.mxu0 0.0
  %3547 = vmatprep.subr.mxu0 0.0
  %3548 = vmatpush1.msra.mxu0 0.0
  %3549 = vmatprep.subr.mxu0 0.0
  %3550 = vmatpush1.msra.mxu0 0.0
  %3551 = vmatprep.subr.mxu0 0.0
  %3552 = vmatpush1.msra.mxu0 0.0
  %3553 = vmatprep.subr.mxu0 0.0
  %3554 = vmatpush1.msra.mxu0 0.0
  %3555 = vmatprep.subr.mxu0 0.0
  %3556 = vmatpush1.msra.mxu0 0.0
  %3557 = vmatprep.subr.mxu0 0.0
  %3558 = vmatpush1.msra.mxu0 0.0
  %3559 = vmatprep.subr.mxu0 0.0
  %3560 = vmatpush1.msra.mxu0 0.0
  %3561 = vmatprep.subr.mxu0 0.0
  %3562 = vmatpush1.msra.mxu0 0.0
  %3563 = vmatprep.subr.mxu0 0.0
  %3564 = vmatpush1.msra.mxu0 0.0
  %3565 = vmatprep.subr.mxu0 0.0
  %3566 = vmatpush1.msra.mxu0 0.0
  %3567 = vmatprep.subr.mxu0 0.0
  %3568 = vmatpush1.msra.mxu0 0.0
  %3569 = vmatprep.subr.mxu0 0.0
  %3570 = vmatpush1.msra.mxu0 0.0
  %3571 = vmatprep.subr.mxu0 0.0
  %3572 = vmatpush1.msra.mxu0 0.0
  %3573 = vmatprep.subr.mxu0 0.0
  %3574 = vmatpush1.msra.mxu0 0.0
  %3575 = vmatprep.subr.mxu0 0.0
  %3576 = vmatpush1.msra.mxu0 0.0
  %3577 = vmatprep.mubr.f32.mxu0 0.0
  %3578 = vmatmul.mubr.f32.gmra.mrb[0].mxu0 %v3511
  %v3579 = vpop.f32.mrb[0].mxu0
  %v3580 = vadd.f32 0.0, %v3579
  %v3581 = vpop.f32.mrb[0].mxu0
  %3582 = vdwg.mxu0
  %v3584 = vsel %vm716, %v3407, 0
  %3586 = vmatprep.subr.mxu0 0.0
  %3587 = vmatpush1.msra.mxu0 %v406
  %3588 = vmatprep.subr.mxu0 0.0
  %3589 = vmatpush1.msra.mxu0 0.0
  %3590 = vmatprep.subr.mxu0 0.0
  %3591 = vmatpush1.msra.mxu0 0.0
  %3592 = vmatprep.subr.mxu0 0.0
  %3593 = vmatpush1.msra.mxu0 0.0
  %3594 = vmatprep.subr.mxu0 0.0
  %3595 = vmatpush1.msra.mxu0 0.0
  %3596 = vmatprep.subr.mxu0 0.0
  %3597 = vmatpush1.msra.mxu0 0.0
  %3598 = vmatprep.subr.mxu0 0.0
  %3599 = vmatpush1.msra.mxu0 0.0
  %3600 = vmatprep.subr.mxu0 0.0
  %3601 = vmatpush1.msra.mxu0 0.0
  %3602 = vmatprep.subr.mxu0 0.0
  %3603 = vmatpush1.msra.mxu0 0.0
  %3604 = vmatprep.subr.mxu0 0.0
  %3605 = vmatpush1.msra.mxu0 0.0
  %3606 = vmatprep.subr.mxu0 0.0
  %3607 = vmatpush1.msra.mxu0 0.0
  %3608 = vmatprep.subr.mxu0 0.0
  %3609 = vmatpush1.msra.mxu0 0.0
  %3610 = vmatprep.subr.mxu0 0.0
  %3611 = vmatpush1.msra.mxu0 0.0
  %3612 = vmatprep.subr.mxu0 0.0
  %3613 = vmatpush1.msra.mxu0 0.0
  %3614 = vmatprep.subr.mxu0 0.0
  %3615 = vmatpush1.msra.mxu0 0.0
  %3616 = vmatprep.subr.mxu0 0.0
  %3617 = vmatpush1.msra.mxu0 0.0
  %3618 = vmatprep.subr.mxu0 0.0
  %3619 = vmatpush1.msra.mxu0 0.0
  %3620 = vmatprep.subr.mxu0 0.0
  %3621 = vmatpush1.msra.mxu0 0.0
  %3622 = vmatprep.subr.mxu0 0.0
  %3623 = vmatpush1.msra.mxu0 0.0
  %3624 = vmatprep.subr.mxu0 0.0
  %3625 = vmatpush1.msra.mxu0 0.0
  %3626 = vmatprep.subr.mxu0 0.0
  %3627 = vmatpush1.msra.mxu0 0.0
  %3628 = vmatprep.subr.mxu0 0.0
  %3629 = vmatpush1.msra.mxu0 0.0
  %3630 = vmatprep.subr.mxu0 0.0
  %3631 = vmatpush1.msra.mxu0 0.0
  %3632 = vmatprep.subr.mxu0 0.0
  %3633 = vmatpush1.msra.mxu0 0.0
  %3634 = vmatprep.subr.mxu0 0.0
  %3635 = vmatpush1.msra.mxu0 0.0
  %3636 = vmatprep.subr.mxu0 0.0
  %3637 = vmatpush1.msra.mxu0 0.0
  %3638 = vmatprep.subr.mxu0 0.0
  %3639 = vmatpush1.msra.mxu0 0.0
  %3640 = vmatprep.subr.mxu0 0.0
  %3641 = vmatpush1.msra.mxu0 0.0
  %3642 = vmatprep.subr.mxu0 0.0
  %3643 = vmatpush1.msra.mxu0 0.0
  %3644 = vmatprep.subr.mxu0 0.0
  %3645 = vmatpush1.msra.mxu0 0.0
  %3646 = vmatprep.subr.mxu0 0.0
  %3647 = vmatpush1.msra.mxu0 0.0
  %3648 = vmatprep.subr.mxu0 0.0
  %3649 = vmatpush1.msra.mxu0 0.0
  %3650 = vmatprep.mubr.f32.mxu0 0.0
  %3651 = vmatmul.mubr.f32.gmra.mrb[0].mxu0 %v3584
  %v3652 = vpop.f32.mrb[0].mxu0
  %v3653 = vadd.f32 0.0, %v3652
  %v3654 = vpop.f32.mrb[0].mxu0
  %3655 = vdwg.mxu0
  %v3657 = vsel %vm716, %v3408, 0
  %3659 = vmatprep.subr.mxu0 0.0
  %3660 = vmatpush1.msra.mxu0 %v411
  %3661 = vmatprep.subr.mxu0 0.0
  %3662 = vmatpush1.msra.mxu0 0.0
  %3663 = vmatprep.subr.mxu0 0.0
  %3664 = vmatpush1.msra.mxu0 0.0
  %3665 = vmatprep.subr.mxu0 0.0
  %3666 = vmatpush1.msra.mxu0 0.0
  %3667 = vmatprep.subr.mxu0 0.0
  %3668 = vmatpush1.msra.mxu0 0.0
  %3669 = vmatprep.subr.mxu0 0.0
  %3670 = vmatpush1.msra.mxu0 0.0
  %3671 = vmatprep.subr.mxu0 0.0
  %3672 = vmatpush1.msra.mxu0 0.0
  %3673 = vmatprep.subr.mxu0 0.0
  %3674 = vmatpush1.msra.mxu0 0.0
  %3675 = vmatprep.subr.mxu0 0.0
  %3676 = vmatpush1.msra.mxu0 0.0
  %3677 = vmatprep.subr.mxu0 0.0
  %3678 = vmatpush1.msra.mxu0 0.0
  %3679 = vmatprep.subr.mxu0 0.0
  %3680 = vmatpush1.msra.mxu0 0.0
  %3681 = vmatprep.subr.mxu0 0.0
  %3682 = vmatpush1.msra.mxu0 0.0
  %3683 = vmatprep.subr.mxu0 0.0
  %3684 = vmatpush1.msra.mxu0 0.0
  %3685 = vmatprep.subr.mxu0 0.0
  %3686 = vmatpush1.msra.mxu0 0.0
  %3687 = vmatprep.subr.mxu0 0.0
  %3688 = vmatpush1.msra.mxu0 0.0
  %3689 = vmatprep.subr.mxu0 0.0
  %3690 = vmatpush1.msra.mxu0 0.0
  %3691 = vmatprep.subr.mxu0 0.0
  %3692 = vmatpush1.msra.mxu0 0.0
  %3693 = vmatprep.subr.mxu0 0.0
  %3694 = vmatpush1.msra.mxu0 0.0
  %3695 = vmatprep.subr.mxu0 0.0
  %3696 = vmatpush1.msra.mxu0 0.0
  %3697 = vmatprep.subr.mxu0 0.0
  %3698 = vmatpush1.msra.mxu0 0.0
  %3699 = vmatprep.subr.mxu0 0.0
  %3700 = vmatpush1.msra.mxu0 0.0
  %3701 = vmatprep.subr.mxu0 0.0
  %3702 = vmatpush1.msra.mxu0 0.0
  %3703 = vmatprep.subr.mxu0 0.0
  %3704 = vmatpush1.msra.mxu0 0.0
  %3705 = vmatprep.subr.mxu0 0.0
  %3706 = vmatpush1.msra.mxu0 0.0
  %3707 = vmatprep.subr.mxu0 0.0
  %3708 = vmatpush1.msra.mxu0 0.0
  %3709 = vmatprep.subr.mxu0 0.0
  %3710 = vmatpush1.msra.mxu0 0.0
  %3711 = vmatprep.subr.mxu0 0.0
  %3712 = vmatpush1.msra.mxu0 0.0
  %3713 = vmatprep.subr.mxu0 0.0
  %3714 = vmatpush1.msra.mxu0 0.0
  %3715 = vmatprep.subr.mxu0 0.0
  %3716 = vmatpush1.msra.mxu0 0.0
  %3717 = vmatprep.subr.mxu0 0.0
  %3718 = vmatpush1.msra.mxu0 0.0
  %3719 = vmatprep.subr.mxu0 0.0
  %3720 = vmatpush1.msra.mxu0 0.0
  %3721 = vmatprep.subr.mxu0 0.0
  %3722 = vmatpush1.msra.mxu0 0.0
  %3723 = vmatprep.mubr.f32.mxu0 0.0
  %3724 = vmatmul.mubr.f32.gmra.mrb[0].mxu0 %v3657
  %v3725 = vpop.f32.mrb[0].mxu0
  %v3726 = vadd.f32 0.0, %v3725
  %v3727 = vpop.f32.mrb[0].mxu0
  %3728 = vdwg.mxu0
  %v3730 = vsel %vm716, %v3409, 0
  %3732 = vmatprep.subr.mxu0 0.0
  %3733 = vmatpush1.msra.mxu0 %v416
  %3734 = vmatprep.subr.mxu0 0.0
  %3735 = vmatpush1.msra.mxu0 0.0
  %3736 = vmatprep.subr.mxu0 0.0
  %3737 = vmatpush1.msra.mxu0 0.0
  %3738 = vmatprep.subr.mxu0 0.0
  %3739 = vmatpush1.msra.mxu0 0.0
  %3740 = vmatprep.subr.mxu0 0.0
  %3741 = vmatpush1.msra.mxu0 0.0
  %3742 = vmatprep.subr.mxu0 0.0
  %3743 = vmatpush1.msra.mxu0 0.0
  %3744 = vmatprep.subr.mxu0 0.0
  %3745 = vmatpush1.msra.mxu0 0.0
  %3746 = vmatprep.subr.mxu0 0.0
  %3747 = vmatpush1.msra.mxu0 0.0
  %3748 = vmatprep.subr.mxu0 0.0
  %3749 = vmatpush1.msra.mxu0 0.0
  %3750 = vmatprep.subr.mxu0 0.0
  %3751 = vmatpush1.msra.mxu0 0.0
  %3752 = vmatprep.subr.mxu0 0.0
  %3753 = vmatpush1.msra.mxu0 0.0
  %3754 = vmatprep.subr.mxu0 0.0
  %3755 = vmatpush1.msra.mxu0 0.0
  %3756 = vmatprep.subr.mxu0 0.0
  %3757 = vmatpush1.msra.mxu0 0.0
  %3758 = vmatprep.subr.mxu0 0.0
  %3759 = vmatpush1.msra.mxu0 0.0
  %3760 = vmatprep.subr.mxu0 0.0
  %3761 = vmatpush1.msra.mxu0 0.0
  %3762 = vmatprep.subr.mxu0 0.0
  %3763 = vmatpush1.msra.mxu0 0.0
  %3764 = vmatprep.subr.mxu0 0.0
  %3765 = vmatpush1.msra.mxu0 0.0
  %3766 = vmatprep.subr.mxu0 0.0
  %3767 = vmatpush1.msra.mxu0 0.0
  %3768 = vmatprep.subr.mxu0 0.0
  %3769 = vmatpush1.msra.mxu0 0.0
  %3770 = vmatprep.subr.mxu0 0.0
  %3771 = vmatpush1.msra.mxu0 0.0
  %3772 = vmatprep.subr.mxu0 0.0
  %3773 = vmatpush1.msra.mxu0 0.0
  %3774 = vmatprep.subr.mxu0 0.0
  %3775 = vmatpush1.msra.mxu0 0.0
  %3776 = vmatprep.subr.mxu0 0.0
  %3777 = vmatpush1.msra.mxu0 0.0
  %3778 = vmatprep.subr.mxu0 0.0
  %3779 = vmatpush1.msra.mxu0 0.0
  %3780 = vmatprep.subr.mxu0 0.0
  %3781 = vmatpush1.msra.mxu0 0.0
  %3782 = vmatprep.subr.mxu0 0.0
  %3783 = vmatpush1.msra.mxu0 0.0
  %3784 = vmatprep.subr.mxu0 0.0
  %3785 = vmatpush1.msra.mxu0 0.0
  %3786 = vmatprep.subr.mxu0 0.0
  %3787 = vmatpush1.msra.mxu0 0.0
  %3788 = vmatprep.subr.mxu0 0.0
  %3789 = vmatpush1.msra.mxu0 0.0
  %3790 = vmatprep.subr.mxu0 0.0
  %3791 = vmatpush1.msra.mxu0 0.0
  %3792 = vmatprep.subr.mxu0 0.0
  %3793 = vmatpush1.msra.mxu0 0.0
  %3794 = vmatprep.subr.mxu0 0.0
  %3795 = vmatpush1.msra.mxu0 0.0
  %3796 = vmatprep.mubr.f32.mxu0 0.0
  %3797 = vmatmul.mubr.f32.gmra.mrb[0].mxu0 %v3730
  %v3798 = vpop.f32.mrb[0].mxu0
  %v3799 = vadd.f32 0.0, %v3798
  %v3800 = vpop.f32.mrb[0].mxu0
  %3801 = vdwg.mxu0
  %v3803 = vsel %vm716, %v3410, 0
  %3805 = vmatprep.subr.mxu0 0.0
  %3806 = vmatpush1.msra.mxu0 %v421
  %3807 = vmatprep.subr.mxu0 0.0
  %3808 = vmatpush1.msra.mxu0 0.0
  %3809 = vmatprep.subr.mxu0 0.0
  %3810 = vmatpush1.msra.mxu0 0.0
  %3811 = vmatprep.subr.mxu0 0.0
  %3812 = vmatpush1.msra.mxu0 0.0
  %3813 = vmatprep.subr.mxu0 0.0
  %3814 = vmatpush1.msra.mxu0 0.0
  %3815 = vmatprep.subr.mxu0 0.0
  %3816 = vmatpush1.msra.mxu0 0.0
  %3817 = vmatprep.subr.mxu0 0.0
  %3818 = vmatpush1.msra.mxu0 0.0
  %3819 = vmatprep.subr.mxu0 0.0
  %3820 = vmatpush1.msra.mxu0 0.0
  %3821 = vmatprep.subr.mxu0 0.0
  %3822 = vmatpush1.msra.mxu0 0.0
  %3823 = vmatprep.subr.mxu0 0.0
  %3824 = vmatpush1.msra.mxu0 0.0
  %3825 = vmatprep.subr.mxu0 0.0
  %3826 = vmatpush1.msra.mxu0 0.0
  %3827 = vmatprep.subr.mxu0 0.0
  %3828 = vmatpush1.msra.mxu0 0.0
  %3829 = vmatprep.subr.mxu0 0.0
  %3830 = vmatpush1.msra.mxu0 0.0
  %3831 = vmatprep.subr.mxu0 0.0
  %3832 = vmatpush1.msra.mxu0 0.0
  %3833 = vmatprep.subr.mxu0 0.0
  %3834 = vmatpush1.msra.mxu0 0.0
  %3835 = vmatprep.subr.mxu0 0.0
  %3836 = vmatpush1.msra.mxu0 0.0
  %3837 = vmatprep.subr.mxu0 0.0
  %3838 = vmatpush1.msra.mxu0 0.0
  %3839 = vmatprep.subr.mxu0 0.0
  %3840 = vmatpush1.msra.mxu0 0.0
  %3841 = vmatprep.subr.mxu0 0.0
  %3842 = vmatpush1.msra.mxu0 0.0
  %3843 = vmatprep.subr.mxu0 0.0
  %3844 = vmatpush1.msra.mxu0 0.0
  %3845 = vmatprep.subr.mxu0 0.0
  %3846 = vmatpush1.msra.mxu0 0.0
  %3847 = vmatprep.subr.mxu0 0.0
  %3848 = vmatpush1.msra.mxu0 0.0
  %3849 = vmatprep.subr.mxu0 0.0
  %3850 = vmatpush1.msra.mxu0 0.0
  %3851 = vmatprep.subr.mxu0 0.0
  %3852 = vmatpush1.msra.mxu0 0.0
  %3853 = vmatprep.subr.mxu0 0.0
  %3854 = vmatpush1.msra.mxu0 0.0
  %3855 = vmatprep.subr.mxu0 0.0
  %3856 = vmatpush1.msra.mxu0 0.0
  %3857 = vmatprep.subr.mxu0 0.0
  %3858 = vmatpush1.msra.mxu0 0.0
  %3859 = vmatprep.subr.mxu0 0.0
  %3860 = vmatpush1.msra.mxu0 0.0
  %3861 = vmatprep.subr.mxu0 0.0
  %3862 = vmatpush1.msra.mxu0 0.0
  %3863 = vmatprep.subr.mxu0 0.0
  %3864 = vmatpush1.msra.mxu0 0.0
  %3865 = vmatprep.subr.mxu0 0.0
  %3866 = vmatpush1.msra.mxu0 0.0
  %3867 = vmatprep.subr.mxu0 0.0
  %3868 = vmatpush1.msra.mxu0 0.0
  %3869 = vmatprep.mubr.f32.mxu0 0.0
  %3870 = vmatmul.mubr.f32.gmra.mrb[0].mxu0 %v3803
  %v3871 = vpop.f32.mrb[0].mxu0
  %v3872 = vadd.f32 0.0, %v3871
  %v3873 = vpop.f32.mrb[0].mxu0
  %3874 = vdwg.mxu0
  %v3876 = vsel %vm716, %v3411, 0
  %3878 = vmatprep.subr.mxu0 0.0
  %3879 = vmatpush1.msra.mxu0 %v426
  %3880 = vmatprep.subr.mxu0 0.0
  %3881 = vmatpush1.msra.mxu0 0.0
  %3882 = vmatprep.subr.mxu0 0.0
  %3883 = vmatpush1.msra.mxu0 0.0
  %3884 = vmatprep.subr.mxu0 0.0
  %3885 = vmatpush1.msra.mxu0 0.0
  %3886 = vmatprep.subr.mxu0 0.0
  %3887 = vmatpush1.msra.mxu0 0.0
  %3888 = vmatprep.subr.mxu0 0.0
  %3889 = vmatpush1.msra.mxu0 0.0
  %3890 = vmatprep.subr.mxu0 0.0
  %3891 = vmatpush1.msra.mxu0 0.0
  %3892 = vmatprep.subr.mxu0 0.0
  %3893 = vmatpush1.msra.mxu0 0.0
  %3894 = vmatprep.subr.mxu0 0.0
  %3895 = vmatpush1.msra.mxu0 0.0
  %3896 = vmatprep.subr.mxu0 0.0
  %3897 = vmatpush1.msra.mxu0 0.0
  %3898 = vmatprep.subr.mxu0 0.0
  %3899 = vmatpush1.msra.mxu0 0.0
  %3900 = vmatprep.subr.mxu0 0.0
  %3901 = vmatpush1.msra.mxu0 0.0
  %3902 = vmatprep.subr.mxu0 0.0
  %3903 = vmatpush1.msra.mxu0 0.0
  %3904 = vmatprep.subr.mxu0 0.0
  %3905 = vmatpush1.msra.mxu0 0.0
  %3906 = vmatprep.subr.mxu0 0.0
  %3907 = vmatpush1.msra.mxu0 0.0
  %3908 = vmatprep.subr.mxu0 0.0
  %3909 = vmatpush1.msra.mxu0 0.0
  %3910 = vmatprep.subr.mxu0 0.0
  %3911 = vmatpush1.msra.mxu0 0.0
  %3912 = vmatprep.subr.mxu0 0.0
  %3913 = vmatpush1.msra.mxu0 0.0
  %3914 = vmatprep.subr.mxu0 0.0
  %3915 = vmatpush1.msra.mxu0 0.0
  %3916 = vmatprep.subr.mxu0 0.0
  %3917 = vmatpush1.msra.mxu0 0.0
  %3918 = vmatprep.subr.mxu0 0.0
  %3919 = vmatpush1.msra.mxu0 0.0
  %3920 = vmatprep.subr.mxu0 0.0
  %3921 = vmatpush1.msra.mxu0 0.0
  %3922 = vmatprep.subr.mxu0 0.0
  %3923 = vmatpush1.msra.mxu0 0.0
  %3924 = vmatprep.subr.mxu0 0.0
  %3925 = vmatpush1.msra.mxu0 0.0
  %3926 = vmatprep.subr.mxu0 0.0
  %3927 = vmatpush1.msra.mxu0 0.0
  %3928 = vmatprep.subr.mxu0 0.0
  %3929 = vmatpush1.msra.mxu0 0.0
  %3930 = vmatprep.subr.mxu0 0.0
  %3931 = vmatpush1.msra.mxu0 0.0
  %3932 = vmatprep.subr.mxu0 0.0
  %3933 = vmatpush1.msra.mxu0 0.0
  %3934 = vmatprep.subr.mxu0 0.0
  %3935 = vmatpush1.msra.mxu0 0.0
  %3936 = vmatprep.subr.mxu0 0.0
  %3937 = vmatpush1.msra.mxu0 0.0
  %3938 = vmatprep.subr.mxu0 0.0
  %3939 = vmatpush1.msra.mxu0 0.0
  %3940 = vmatprep.subr.mxu0 0.0
  %3941 = vmatpush1.msra.mxu0 0.0
  %3942 = vmatprep.mubr.f32.mxu0 0.0
  %3943 = vmatmul.mubr.f32.gmra.mrb[0].mxu0 %v3876
  %v3944 = vpop.f32.mrb[0].mxu0
  %v3945 = vadd.f32 0.0, %v3944
  %v3946 = vpop.f32.mrb[0].mxu0
  %3947 = vdwg.mxu0
  %v3949 = vsel %vm716, %v3412, 0
  %3951 = vmatprep.subr.mxu0 0.0
  %3952 = vmatpush1.msra.mxu0 %v431
  %3953 = vmatprep.subr.mxu0 0.0
  %3954 = vmatpush1.msra.mxu0 0.0
  %3955 = vmatprep.subr.mxu0 0.0
  %3956 = vmatpush1.msra.mxu0 0.0
  %3957 = vmatprep.subr.mxu0 0.0
  %3958 = vmatpush1.msra.mxu0 0.0
  %3959 = vmatprep.subr.mxu0 0.0
  %3960 = vmatpush1.msra.mxu0 0.0
  %3961 = vmatprep.subr.mxu0 0.0
  %3962 = vmatpush1.msra.mxu0 0.0
  %3963 = vmatprep.subr.mxu0 0.0
  %3964 = vmatpush1.msra.mxu0 0.0
  %3965 = vmatprep.subr.mxu0 0.0
  %3966 = vmatpush1.msra.mxu0 0.0
  %3967 = vmatprep.subr.mxu0 0.0
  %3968 = vmatpush1.msra.mxu0 0.0
  %3969 = vmatprep.subr.mxu0 0.0
  %3970 = vmatpush1.msra.mxu0 0.0
  %3971 = vmatprep.subr.mxu0 0.0
  %3972 = vmatpush1.msra.mxu0 0.0
  %3973 = vmatprep.subr.mxu0 0.0
  %3974 = vmatpush1.msra.mxu0 0.0
  %3975 = vmatprep.subr.mxu0 0.0
  %3976 = vmatpush1.msra.mxu0 0.0
  %3977 = vmatprep.subr.mxu0 0.0
  %3978 = vmatpush1.msra.mxu0 0.0
  %3979 = vmatprep.subr.mxu0 0.0
  %3980 = vmatpush1.msra.mxu0 0.0
  %3981 = vmatprep.subr.mxu0 0.0
  %3982 = vmatpush1.msra.mxu0 0.0
  %3983 = vmatprep.subr.mxu0 0.0
  %3984 = vmatpush1.msra.mxu0 0.0
  %3985 = vmatprep.subr.mxu0 0.0
  %3986 = vmatpush1.msra.mxu0 0.0
  %3987 = vmatprep.subr.mxu0 0.0
  %3988 = vmatpush1.msra.mxu0 0.0
  %3989 = vmatprep.subr.mxu0 0.0
  %3990 = vmatpush1.msra.mxu0 0.0
  %3991 = vmatprep.subr.mxu0 0.0
  %3992 = vmatpush1.msra.mxu0 0.0
  %3993 = vmatprep.subr.mxu0 0.0
  %3994 = vmatpush1.msra.mxu0 0.0
  %3995 = vmatprep.subr.mxu0 0.0
  %3996 = vmatpush1.msra.mxu0 0.0
  %3997 = vmatprep.subr.mxu0 0.0
  %3998 = vmatpush1.msra.mxu0 0.0
  %3999 = vmatprep.subr.mxu0 0.0
  %4000 = vmatpush1.msra.mxu0 0.0
  %4001 = vmatprep.subr.mxu0 0.0
  %4002 = vmatpush1.msra.mxu0 0.0
  %4003 = vmatprep.subr.mxu0 0.0
  %4004 = vmatpush1.msra.mxu0 0.0
  %4005 = vmatprep.subr.mxu0 0.0
  %4006 = vmatpush1.msra.mxu0 0.0
  %4007 = vmatprep.subr.mxu0 0.0
  %4008 = vmatpush1.msra.mxu0 0.0
  %4009 = vmatprep.subr.mxu0 0.0
  %4010 = vmatpush1.msra.mxu0 0.0
  %4011 = vmatprep.subr.mxu0 0.0
  %4012 = vmatpush1.msra.mxu0 0.0
  %4013 = vmatprep.subr.mxu0 0.0
  %4014 = vmatpush1.msra.mxu0 0.0
  %4015 = vmatprep.mubr.f32.mxu0 0.0
  %4016 = vmatmul.mubr.f32.gmra.mrb[0].mxu0 %v3949
  %v4017 = vpop.f32.mrb[0].mxu0
  %v4018 = vadd.f32 0.0, %v4017
  %v4019 = vpop.f32.mrb[0].mxu0
  %4020 = vdwg.mxu0
  %v4022 = vsel %vm716, %v3413, 0
  %4024 = vmatprep.subr.mxu0 0.0
  %4025 = vmatpush1.msra.mxu0 %v555
  %4026 = vmatprep.subr.mxu0 0.0
  %4027 = vmatpush1.msra.mxu0 0.0
  %4028 = vmatprep.subr.mxu0 0.0
  %4029 = vmatpush1.msra.mxu0 0.0
  %4030 = vmatprep.subr.mxu0 0.0
  %4031 = vmatpush1.msra.mxu0 0.0
  %4032 = vmatprep.subr.mxu0 0.0
  %4033 = vmatpush1.msra.mxu0 0.0
  %4034 = vmatprep.subr.mxu0 0.0
  %4035 = vmatpush1.msra.mxu0 0.0
  %4036 = vmatprep.subr.mxu0 0.0
  %4037 = vmatpush1.msra.mxu0 0.0
  %4038 = vmatprep.subr.mxu0 0.0
  %4039 = vmatpush1.msra.mxu0 0.0
  %4040 = vmatprep.subr.mxu0 0.0
  %4041 = vmatpush1.msra.mxu0 0.0
  %4042 = vmatprep.subr.mxu0 0.0
  %4043 = vmatpush1.msra.mxu0 0.0
  %4044 = vmatprep.subr.mxu0 0.0
  %4045 = vmatpush1.msra.mxu0 0.0
  %4046 = vmatprep.subr.mxu0 0.0
  %4047 = vmatpush1.msra.mxu0 0.0
  %4048 = vmatprep.subr.mxu0 0.0
  %4049 = vmatpush1.msra.mxu0 0.0
  %4050 = vmatprep.subr.mxu0 0.0
  %4051 = vmatpush1.msra.mxu0 0.0
  %4052 = vmatprep.subr.mxu0 0.0
  %4053 = vmatpush1.msra.mxu0 0.0
  %4054 = vmatprep.subr.mxu0 0.0
  %4055 = vmatpush1.msra.mxu0 0.0
  %4056 = vmatprep.subr.mxu0 0.0
  %4057 = vmatpush1.msra.mxu0 0.0
  %4058 = vmatprep.subr.mxu0 0.0
  %4059 = vmatpush1.msra.mxu0 0.0
  %4060 = vmatprep.subr.mxu0 0.0
  %4061 = vmatpush1.msra.mxu0 0.0
  %4062 = vmatprep.subr.mxu0 0.0
  %4063 = vmatpush1.msra.mxu0 0.0
  %4064 = vmatprep.subr.mxu0 0.0
  %4065 = vmatpush1.msra.mxu0 0.0
  %4066 = vmatprep.subr.mxu0 0.0
  %4067 = vmatpush1.msra.mxu0 0.0
  %4068 = vmatprep.subr.mxu0 0.0
  %4069 = vmatpush1.msra.mxu0 0.0
  %4070 = vmatprep.subr.mxu0 0.0
  %4071 = vmatpush1.msra.mxu0 0.0
  %4072 = vmatprep.subr.mxu0 0.0
  %4073 = vmatpush1.msra.mxu0 0.0
  %4074 = vmatprep.subr.mxu0 0.0
  %4075 = vmatpush1.msra.mxu0 0.0
  %4076 = vmatprep.subr.mxu0 0.0
  %4077 = vmatpush1.msra.mxu0 0.0
  %4078 = vmatprep.subr.mxu0 0.0
  %4079 = vmatpush1.msra.mxu0 0.0
  %4080 = vmatprep.subr.mxu0 0.0
  %4081 = vmatpush1.msra.mxu0 0.0
  %4082 = vmatprep.subr.mxu0 0.0
  %4083 = vmatpush1.msra.mxu0 0.0
  %4084 = vmatprep.subr.mxu0 0.0
  %4085 = vmatpush1.msra.mxu0 0.0
  %4086 = vmatprep.subr.mxu0 0.0
  %4087 = vmatpush1.msra.mxu0 0.0
  %4088 = vmatprep.mubr.f32.mxu0 0.0
  %4089 = vmatmul.mubr.f32.gmra.mrb[0].mxu0 %v4022
  %v4090 = vpop.f32.mrb[0].mxu0
  %v4091 = vadd.f32 0.0, %v4090
  %v4092 = vpop.f32.mrb[0].mxu0
  %4093 = vdwg.mxu0
  %v4095 = vsel %vm716, %v3414, 0
  %4097 = vmatprep.subr.mxu0 0.0
  %4098 = vmatpush1.msra.mxu0 %v557
  %4099 = vmatprep.subr.mxu0 0.0
  %4100 = vmatpush1.msra.mxu0 0.0
  %4101 = vmatprep.subr.mxu0 0.0
  %4102 = vmatpush1.msra.mxu0 0.0
  %4103 = vmatprep.subr.mxu0 0.0
  %4104 = vmatpush1.msra.mxu0 0.0
  %4105 = vmatprep.subr.mxu0 0.0
  %4106 = vmatpush1.msra.mxu0 0.0
  %4107 = vmatprep.subr.mxu0 0.0
  %4108 = vmatpush1.msra.mxu0 0.0
  %4109 = vmatprep.subr.mxu0 0.0
  %4110 = vmatpush1.msra.mxu0 0.0
  %4111 = vmatprep.subr.mxu0 0.0
  %4112 = vmatpush1.msra.mxu0 0.0
  %4113 = vmatprep.subr.mxu0 0.0
  %4114 = vmatpush1.msra.mxu0 0.0
  %4115 = vmatprep.subr.mxu0 0.0
  %4116 = vmatpush1.msra.mxu0 0.0
  %4117 = vmatprep.subr.mxu0 0.0
  %4118 = vmatpush1.msra.mxu0 0.0
  %4119 = vmatprep.subr.mxu0 0.0
  %4120 = vmatpush1.msra.mxu0 0.0
  %4121 = vmatprep.subr.mxu0 0.0
  %4122 = vmatpush1.msra.mxu0 0.0
  %4123 = vmatprep.subr.mxu0 0.0
  %4124 = vmatpush1.msra.mxu0 0.0
  %4125 = vmatprep.subr.mxu0 0.0
  %4126 = vmatpush1.msra.mxu0 0.0
  %4127 = vmatprep.subr.mxu0 0.0
  %4128 = vmatpush1.msra.mxu0 0.0
  %4129 = vmatprep.subr.mxu0 0.0
  %4130 = vmatpush1.msra.mxu0 0.0
  %4131 = vmatprep.subr.mxu0 0.0
  %4132 = vmatpush1.msra.mxu0 0.0
  %4133 = vmatprep.subr.mxu0 0.0
  %4134 = vmatpush1.msra.mxu0 0.0
  %4135 = vmatprep.subr.mxu0 0.0
  %4136 = vmatpush1.msra.mxu0 0.0
  %4137 = vmatprep.subr.mxu0 0.0
  %4138 = vmatpush1.msra.mxu0 0.0
  %4139 = vmatprep.subr.mxu0 0.0
  %4140 = vmatpush1.msra.mxu0 0.0
  %4141 = vmatprep.subr.mxu0 0.0
  %4142 = vmatpush1.msra.mxu0 0.0
  %4143 = vmatprep.subr.mxu0 0.0
  %4144 = vmatpush1.msra.mxu0 0.0
  %4145 = vmatprep.subr.mxu0 0.0
  %4146 = vmatpush1.msra.mxu0 0.0
  %4147 = vmatprep.subr.mxu0 0.0
  %4148 = vmatpush1.msra.mxu0 0.0
  %4149 = vmatprep.subr.mxu0 0.0
  %4150 = vmatpush1.msra.mxu0 0.0
  %4151 = vmatprep.subr.mxu0 0.0
  %4152 = vmatpush1.msra.mxu0 0.0
  %4153 = vmatprep.subr.mxu0 0.0
  %4154 = vmatpush1.msra.mxu0 0.0
  %4155 = vmatprep.subr.mxu0 0.0
  %4156 = vmatpush1.msra.mxu0 0.0
  %4157 = vmatprep.subr.mxu0 0.0
  %4158 = vmatpush1.msra.mxu0 0.0
  %4159 = vmatprep.subr.mxu0 0.0
  %4160 = vmatpush1.msra.mxu0 0.0
  %4161 = vmatprep.mubr.f32.mxu0 0.0
  %4162 = vmatmul.mubr.f32.gmra.mrb[0].mxu0 %v4095
  %v4163 = vpop.f32.mrb[0].mxu0
  %v4164 = vadd.f32 0.0, %v4163
  %v4165 = vpop.f32.mrb[0].mxu0
  %4166 = vdwg.mxu0
  %v4168 = vsel %vm716, %v3415, 0
  %4170 = vmatprep.subr.mxu0 0.0
  %4171 = vmatpush1.msra.mxu0 %v559
  %4172 = vmatprep.subr.mxu0 0.0
  %4173 = vmatpush1.msra.mxu0 0.0
  %4174 = vmatprep.subr.mxu0 0.0
  %4175 = vmatpush1.msra.mxu0 0.0
  %4176 = vmatprep.subr.mxu0 0.0
  %4177 = vmatpush1.msra.mxu0 0.0
  %4178 = vmatprep.subr.mxu0 0.0
  %4179 = vmatpush1.msra.mxu0 0.0
  %4180 = vmatprep.subr.mxu0 0.0
  %4181 = vmatpush1.msra.mxu0 0.0
  %4182 = vmatprep.subr.mxu0 0.0
  %4183 = vmatpush1.msra.mxu0 0.0
  %4184 = vmatprep.subr.mxu0 0.0
  %4185 = vmatpush1.msra.mxu0 0.0
  %4186 = vmatprep.subr.mxu0 0.0
  %4187 = vmatpush1.msra.mxu0 0.0
  %4188 = vmatprep.subr.mxu0 0.0
  %4189 = vmatpush1.msra.mxu0 0.0
  %4190 = vmatprep.subr.mxu0 0.0
  %4191 = vmatpush1.msra.mxu0 0.0
  %4192 = vmatprep.subr.mxu0 0.0
  %4193 = vmatpush1.msra.mxu0 0.0
  %4194 = vmatprep.subr.mxu0 0.0
  %4195 = vmatpush1.msra.mxu0 0.0
  %4196 = vmatprep.subr.mxu0 0.0
  %4197 = vmatpush1.msra.mxu0 0.0
  %4198 = vmatprep.subr.mxu0 0.0
  %4199 = vmatpush1.msra.mxu0 0.0
  %4200 = vmatprep.subr.mxu0 0.0
  %4201 = vmatpush1.msra.mxu0 0.0
  %4202 = vmatprep.subr.mxu0 0.0
  %4203 = vmatpush1.msra.mxu0 0.0
  %4204 = vmatprep.subr.mxu0 0.0
  %4205 = vmatpush1.msra.mxu0 0.0
  %4206 = vmatprep.subr.mxu0 0.0
  %4207 = vmatpush1.msra.mxu0 0.0
  %4208 = vmatprep.subr.mxu0 0.0
  %4209 = vmatpush1.msra.mxu0 0.0
  %4210 = vmatprep.subr.mxu0 0.0
  %4211 = vmatpush1.msra.mxu0 0.0
  %4212 = vmatprep.subr.mxu0 0.0
  %4213 = vmatpush1.msra.mxu0 0.0
  %4214 = vmatprep.subr.mxu0 0.0
  %4215 = vmatpush1.msra.mxu0 0.0
  %4216 = vmatprep.subr.mxu0 0.0
  %4217 = vmatpush1.msra.mxu0 0.0
  %4218 = vmatprep.subr.mxu0 0.0
  %4219 = vmatpush1.msra.mxu0 0.0
  %4220 = vmatprep.subr.mxu0 0.0
  %4221 = vmatpush1.msra.mxu0 0.0
  %4222 = vmatprep.subr.mxu0 0.0
  %4223 = vmatpush1.msra.mxu0 0.0
  %4224 = vmatprep.subr.mxu0 0.0
  %4225 = vmatpush1.msra.mxu0 0.0
  %4226 = vmatprep.subr.mxu0 0.0
  %4227 = vmatpush1.msra.mxu0 0.0
  %4228 = vmatprep.subr.mxu0 0.0
  %4229 = vmatpush1.msra.mxu0 0.0
  %4230 = vmatprep.subr.mxu0 0.0
  %4231 = vmatpush1.msra.mxu0 0.0
  %4232 = vmatprep.subr.mxu0 0.0
  %4233 = vmatpush1.msra.mxu0 0.0
  %4234 = vmatprep.mubr.f32.mxu0 0.0
  %4235 = vmatmul.mubr.f32.gmra.mrb[0].mxu0 %v4168
  %v4236 = vpop.f32.mrb[0].mxu0
  %v4237 = vadd.f32 0.0, %v4236
  %v4238 = vpop.f32.mrb[0].mxu0
  %4239 = vdwg.mxu0
  %v4241 = vsel %vm716, %v3416, 0
  %4243 = vmatprep.subr.mxu0 0.0
  %4244 = vmatpush1.msra.mxu0 %v561
  %4245 = vmatprep.subr.mxu0 0.0
  %4246 = vmatpush1.msra.mxu0 0.0
  %4247 = vmatprep.subr.mxu0 0.0
  %4248 = vmatpush1.msra.mxu0 0.0
  %4249 = vmatprep.subr.mxu0 0.0
  %4250 = vmatpush1.msra.mxu0 0.0
  %4251 = vmatprep.subr.mxu0 0.0
  %4252 = vmatpush1.msra.mxu0 0.0
  %4253 = vmatprep.subr.mxu0 0.0
  %4254 = vmatpush1.msra.mxu0 0.0
  %4255 = vmatprep.subr.mxu0 0.0
  %4256 = vmatpush1.msra.mxu0 0.0
  %4257 = vmatprep.subr.mxu0 0.0
  %4258 = vmatpush1.msra.mxu0 0.0
  %4259 = vmatprep.subr.mxu0 0.0
  %4260 = vmatpush1.msra.mxu0 0.0
  %4261 = vmatprep.subr.mxu0 0.0
  %4262 = vmatpush1.msra.mxu0 0.0
  %4263 = vmatprep.subr.mxu0 0.0
  %4264 = vmatpush1.msra.mxu0 0.0
  %4265 = vmatprep.subr.mxu0 0.0
  %4266 = vmatpush1.msra.mxu0 0.0
  %4267 = vmatprep.subr.mxu0 0.0
  %4268 = vmatpush1.msra.mxu0 0.0
  %4269 = vmatprep.subr.mxu0 0.0
  %4270 = vmatpush1.msra.mxu0 0.0
  %4271 = vmatprep.subr.mxu0 0.0
  %4272 = vmatpush1.msra.mxu0 0.0
  %4273 = vmatprep.subr.mxu0 0.0
  %4274 = vmatpush1.msra.mxu0 0.0
  %4275 = vmatprep.subr.mxu0 0.0
  %4276 = vmatpush1.msra.mxu0 0.0
  %4277 = vmatprep.subr.mxu0 0.0
  %4278 = vmatpush1.msra.mxu0 0.0
  %4279 = vmatprep.subr.mxu0 0.0
  %4280 = vmatpush1.msra.mxu0 0.0
  %4281 = vmatprep.subr.mxu0 0.0
  %4282 = vmatpush1.msra.mxu0 0.0
  %4283 = vmatprep.subr.mxu0 0.0
  %4284 = vmatpush1.msra.mxu0 0.0
  %4285 = vmatprep.subr.mxu0 0.0
  %4286 = vmatpush1.msra.mxu0 0.0
  %4287 = vmatprep.subr.mxu0 0.0
  %4288 = vmatpush1.msra.mxu0 0.0
  %4289 = vmatprep.subr.mxu0 0.0
  %4290 = vmatpush1.msra.mxu0 0.0
  %4291 = vmatprep.subr.mxu0 0.0
  %4292 = vmatpush1.msra.mxu0 0.0
  %4293 = vmatprep.subr.mxu0 0.0
  %4294 = vmatpush1.msra.mxu0 0.0
  %4295 = vmatprep.subr.mxu0 0.0
  %4296 = vmatpush1.msra.mxu0 0.0
  %4297 = vmatprep.subr.mxu0 0.0
  %4298 = vmatpush1.msra.mxu0 0.0
  %4299 = vmatprep.subr.mxu0 0.0
  %4300 = vmatpush1.msra.mxu0 0.0
  %4301 = vmatprep.subr.mxu0 0.0
  %4302 = vmatpush1.msra.mxu0 0.0
  %4303 = vmatprep.subr.mxu0 0.0
  %4304 = vmatpush1.msra.mxu0 0.0
  %4305 = vmatprep.subr.mxu0 0.0
  %4306 = vmatpush1.msra.mxu0 0.0
  %4307 = vmatprep.mubr.f32.mxu0 0.0
  %4308 = vmatmul.mubr.f32.gmra.mrb[0].mxu0 %v4241
  %v4309 = vpop.f32.mrb[0].mxu0
  %v4310 = vadd.f32 0.0, %v4309
  %v4311 = vpop.f32.mrb[0].mxu0
  %4312 = vdwg.mxu0
  %v4314 = vsel %vm716, %v3417, 0
  %4316 = vmatprep.subr.mxu0 0.0
  %4317 = vmatpush1.msra.mxu0 %v563
  %4318 = vmatprep.subr.mxu0 0.0
  %4319 = vmatpush1.msra.mxu0 0.0
  %4320 = vmatprep.subr.mxu0 0.0
  %4321 = vmatpush1.msra.mxu0 0.0
  %4322 = vmatprep.subr.mxu0 0.0
  %4323 = vmatpush1.msra.mxu0 0.0
  %4324 = vmatprep.subr.mxu0 0.0
  %4325 = vmatpush1.msra.mxu0 0.0
  %4326 = vmatprep.subr.mxu0 0.0
  %4327 = vmatpush1.msra.mxu0 0.0
  %4328 = vmatprep.subr.mxu0 0.0
  %4329 = vmatpush1.msra.mxu0 0.0
  %4330 = vmatprep.subr.mxu0 0.0
  %4331 = vmatpush1.msra.mxu0 0.0
  %4332 = vmatprep.subr.mxu0 0.0
  %4333 = vmatpush1.msra.mxu0 0.0
  %4334 = vmatprep.subr.mxu0 0.0
  %4335 = vmatpush1.msra.mxu0 0.0
  %4336 = vmatprep.subr.mxu0 0.0
  %4337 = vmatpush1.msra.mxu0 0.0
  %4338 = vmatprep.subr.mxu0 0.0
  %4339 = vmatpush1.msra.mxu0 0.0
  %4340 = vmatprep.subr.mxu0 0.0
  %4341 = vmatpush1.msra.mxu0 0.0
  %4342 = vmatprep.subr.mxu0 0.0
  %4343 = vmatpush1.msra.mxu0 0.0
  %4344 = vmatprep.subr.mxu0 0.0
  %4345 = vmatpush1.msra.mxu0 0.0
  %4346 = vmatprep.subr.mxu0 0.0
  %4347 = vmatpush1.msra.mxu0 0.0
  %4348 = vmatprep.subr.mxu0 0.0
  %4349 = vmatpush1.msra.mxu0 0.0
  %4350 = vmatprep.subr.mxu0 0.0
  %4351 = vmatpush1.msra.mxu0 0.0
  %4352 = vmatprep.subr.mxu0 0.0
  %4353 = vmatpush1.msra.mxu0 0.0
  %4354 = vmatprep.subr.mxu0 0.0
  %4355 = vmatpush1.msra.mxu0 0.0
  %4356 = vmatprep.subr.mxu0 0.0
  %4357 = vmatpush1.msra.mxu0 0.0
  %4358 = vmatprep.subr.mxu0 0.0
  %4359 = vmatpush1.msra.mxu0 0.0
  %4360 = vmatprep.subr.mxu0 0.0
  %4361 = vmatpush1.msra.mxu0 0.0
  %4362 = vmatprep.subr.mxu0 0.0
  %4363 = vmatpush1.msra.mxu0 0.0
  %4364 = vmatprep.subr.mxu0 0.0
  %4365 = vmatpush1.msra.mxu0 0.0
  %4366 = vmatprep.subr.mxu0 0.0
  %4367 = vmatpush1.msra.mxu0 0.0
  %4368 = vmatprep.subr.mxu0 0.0
  %4369 = vmatpush1.msra.mxu0 0.0
  %4370 = vmatprep.subr.mxu0 0.0
  %4371 = vmatpush1.msra.mxu0 0.0
  %4372 = vmatprep.subr.mxu0 0.0
  %4373 = vmatpush1.msra.mxu0 0.0
  %4374 = vmatprep.subr.mxu0 0.0
  %4375 = vmatpush1.msra.mxu0 0.0
  %4376 = vmatprep.subr.mxu0 0.0
  %4377 = vmatpush1.msra.mxu0 0.0
  %4378 = vmatprep.subr.mxu0 0.0
  %4379 = vmatpush1.msra.mxu0 0.0
  %4380 = vmatprep.mubr.f32.mxu0 0.0
  %4381 = vmatmul.mubr.f32.gmra.mrb[0].mxu0 %v4314
  %v4382 = vpop.f32.mrb[0].mxu0
  %v4383 = vadd.f32 0.0, %v4382
  %v4384 = vpop.f32.mrb[0].mxu0
  %4385 = vdwg.mxu0
  %v4387 = vsel %vm716, %v3418, 0
  %4389 = vmatprep.subr.mxu0 0.0
  %4390 = vmatpush1.msra.mxu0 %v565
  %4391 = vmatprep.subr.mxu0 0.0
  %4392 = vmatpush1.msra.mxu0 0.0
  %4393 = vmatprep.subr.mxu0 0.0
  %4394 = vmatpush1.msra.mxu0 0.0
  %4395 = vmatprep.subr.mxu0 0.0
  %4396 = vmatpush1.msra.mxu0 0.0
  %4397 = vmatprep.subr.mxu0 0.0
  %4398 = vmatpush1.msra.mxu0 0.0
  %4399 = vmatprep.subr.mxu0 0.0
  %4400 = vmatpush1.msra.mxu0 0.0
  %4401 = vmatprep.subr.mxu0 0.0
  %4402 = vmatpush1.msra.mxu0 0.0
  %4403 = vmatprep.subr.mxu0 0.0
  %4404 = vmatpush1.msra.mxu0 0.0
  %4405 = vmatprep.subr.mxu0 0.0
  %4406 = vmatpush1.msra.mxu0 0.0
  %4407 = vmatprep.subr.mxu0 0.0
  %4408 = vmatpush1.msra.mxu0 0.0
  %4409 = vmatprep.subr.mxu0 0.0
  %4410 = vmatpush1.msra.mxu0 0.0
  %4411 = vmatprep.subr.mxu0 0.0
  %4412 = vmatpush1.msra.mxu0 0.0
  %4413 = vmatprep.subr.mxu0 0.0
  %4414 = vmatpush1.msra.mxu0 0.0
  %4415 = vmatprep.subr.mxu0 0.0
  %4416 = vmatpush1.msra.mxu0 0.0
  %4417 = vmatprep.subr.mxu0 0.0
  %4418 = vmatpush1.msra.mxu0 0.0
  %4419 = vmatprep.subr.mxu0 0.0
  %4420 = vmatpush1.msra.mxu0 0.0
  %4421 = vmatprep.subr.mxu0 0.0
  %4422 = vmatpush1.msra.mxu0 0.0
  %4423 = vmatprep.subr.mxu0 0.0
  %4424 = vmatpush1.msra.mxu0 0.0
  %4425 = vmatprep.subr.mxu0 0.0
  %4426 = vmatpush1.msra.mxu0 0.0
  %4427 = vmatprep.subr.mxu0 0.0
  %4428 = vmatpush1.msra.mxu0 0.0
  %4429 = vmatprep.subr.mxu0 0.0
  %4430 = vmatpush1.msra.mxu0 0.0
  %4431 = vmatprep.subr.mxu0 0.0
  %4432 = vmatpush1.msra.mxu0 0.0
  %4433 = vmatprep.subr.mxu0 0.0
  %4434 = vmatpush1.msra.mxu0 0.0
  %4435 = vmatprep.subr.mxu0 0.0
  %4436 = vmatpush1.msra.mxu0 0.0
  %4437 = vmatprep.subr.mxu0 0.0
  %4438 = vmatpush1.msra.mxu0 0.0
  %4439 = vmatprep.subr.mxu0 0.0
  %4440 = vmatpush1.msra.mxu0 0.0
  %4441 = vmatprep.subr.mxu0 0.0
  %4442 = vmatpush1.msra.mxu0 0.0
  %4443 = vmatprep.subr.mxu0 0.0
  %4444 = vmatpush1.msra.mxu0 0.0
  %4445 = vmatprep.subr.mxu0 0.0
  %4446 = vmatpush1.msra.mxu0 0.0
  %4447 = vmatprep.subr.mxu0 0.0
  %4448 = vmatpush1.msra.mxu0 0.0
  %4449 = vmatprep.subr.mxu0 0.0
  %4450 = vmatpush1.msra.mxu0 0.0
  %4451 = vmatprep.subr.mxu0 0.0
  %4452 = vmatpush1.msra.mxu0 0.0
  %4453 = vmatprep.mubr.f32.mxu0 0.0
  %4454 = vmatmul.mubr.f32.gmra.mrb[0].mxu0 %v4387
  %v4455 = vpop.f32.mrb[0].mxu0
  %v4456 = vadd.f32 0.0, %v4455
  %v4457 = vpop.f32.mrb[0].mxu0
  %4458 = vdwg.mxu0
  %v4460 = vsel %vm716, %v3419, 0
  %4462 = vmatprep.subr.mxu0 0.0
  %4463 = vmatpush1.msra.mxu0 %v567
  %4464 = vmatprep.subr.mxu0 0.0
  %4465 = vmatpush1.msra.mxu0 0.0
  %4466 = vmatprep.subr.mxu0 0.0
  %4467 = vmatpush1.msra.mxu0 0.0
  %4468 = vmatprep.subr.mxu0 0.0
  %4469 = vmatpush1.msra.mxu0 0.0
  %4470 = vmatprep.subr.mxu0 0.0
  %4471 = vmatpush1.msra.mxu0 0.0
  %4472 = vmatprep.subr.mxu0 0.0
  %4473 = vmatpush1.msra.mxu0 0.0
  %4474 = vmatprep.subr.mxu0 0.0
  %4475 = vmatpush1.msra.mxu0 0.0
  %4476 = vmatprep.subr.mxu0 0.0
  %4477 = vmatpush1.msra.mxu0 0.0
  %4478 = vmatprep.subr.mxu0 0.0
  %4479 = vmatpush1.msra.mxu0 0.0
  %4480 = vmatprep.subr.mxu0 0.0
  %4481 = vmatpush1.msra.mxu0 0.0
  %4482 = vmatprep.subr.mxu0 0.0
  %4483 = vmatpush1.msra.mxu0 0.0
  %4484 = vmatprep.subr.mxu0 0.0
  %4485 = vmatpush1.msra.mxu0 0.0
  %4486 = vmatprep.subr.mxu0 0.0
  %4487 = vmatpush1.msra.mxu0 0.0
  %4488 = vmatprep.subr.mxu0 0.0
  %4489 = vmatpush1.msra.mxu0 0.0
  %4490 = vmatprep.subr.mxu0 0.0
  %4491 = vmatpush1.msra.mxu0 0.0
  %4492 = vmatprep.subr.mxu0 0.0
  %4493 = vmatpush1.msra.mxu0 0.0
  %4494 = vmatprep.subr.mxu0 0.0
  %4495 = vmatpush1.msra.mxu0 0.0
  %4496 = vmatprep.subr.mxu0 0.0
  %4497 = vmatpush1.msra.mxu0 0.0
  %4498 = vmatprep.subr.mxu0 0.0
  %4499 = vmatpush1.msra.mxu0 0.0
  %4500 = vmatprep.subr.mxu0 0.0
  %4501 = vmatpush1.msra.mxu0 0.0
  %4502 = vmatprep.subr.mxu0 0.0
  %4503 = vmatpush1.msra.mxu0 0.0
  %4504 = vmatprep.subr.mxu0 0.0
  %4505 = vmatpush1.msra.mxu0 0.0
  %4506 = vmatprep.subr.mxu0 0.0
  %4507 = vmatpush1.msra.mxu0 0.0
  %4508 = vmatprep.subr.mxu0 0.0
  %4509 = vmatpush1.msra.mxu0 0.0
  %4510 = vmatprep.subr.mxu0 0.0
  %4511 = vmatpush1.msra.mxu0 0.0
  %4512 = vmatprep.subr.mxu0 0.0
  %4513 = vmatpush1.msra.mxu0 0.0
  %4514 = vmatprep.subr.mxu0 0.0
  %4515 = vmatpush1.msra.mxu0 0.0
  %4516 = vmatprep.subr.mxu0 0.0
  %4517 = vmatpush1.msra.mxu0 0.0
  %4518 = vmatprep.subr.mxu0 0.0
  %4519 = vmatpush1.msra.mxu0 0.0
  %4520 = vmatprep.subr.mxu0 0.0
  %4521 = vmatpush1.msra.mxu0 0.0
  %4522 = vmatprep.subr.mxu0 0.0
  %4523 = vmatpush1.msra.mxu0 0.0
  %4524 = vmatprep.subr.mxu0 0.0
  %4525 = vmatpush1.msra.mxu0 0.0
  %4526 = vmatprep.mubr.f32.mxu0 0.0
  %4527 = vmatmul.mubr.f32.gmra.mrb[0].mxu0 %v4460
  %v4528 = vpop.f32.mrb[0].mxu0
  %v4529 = vadd.f32 0.0, %v4528
  %v4530 = vpop.f32.mrb[0].mxu0
  %4531 = vdwg.mxu0
  %v4533 = vsel %vm716, %v3420, 0
  %4535 = vmatprep.subr.mxu0 0.0
  %4536 = vmatpush1.msra.mxu0 %v569
  %4537 = vmatprep.subr.mxu0 0.0
  %4538 = vmatpush1.msra.mxu0 0.0
  %4539 = vmatprep.subr.mxu0 0.0
  %4540 = vmatpush1.msra.mxu0 0.0
  %4541 = vmatprep.subr.mxu0 0.0
  %4542 = vmatpush1.msra.mxu0 0.0
  %4543 = vmatprep.subr.mxu0 0.0
  %4544 = vmatpush1.msra.mxu0 0.0
  %4545 = vmatprep.subr.mxu0 0.0
  %4546 = vmatpush1.msra.mxu0 0.0
  %4547 = vmatprep.subr.mxu0 0.0
  %4548 = vmatpush1.msra.mxu0 0.0
  %4549 = vmatprep.subr.mxu0 0.0
  %4550 = vmatpush1.msra.mxu0 0.0
  %4551 = vmatprep.subr.mxu0 0.0
  %4552 = vmatpush1.msra.mxu0 0.0
  %4553 = vmatprep.subr.mxu0 0.0
  %4554 = vmatpush1.msra.mxu0 0.0
  %4555 = vmatprep.subr.mxu0 0.0
  %4556 = vmatpush1.msra.mxu0 0.0
  %4557 = vmatprep.subr.mxu0 0.0
  %4558 = vmatpush1.msra.mxu0 0.0
  %4559 = vmatprep.subr.mxu0 0.0
  %4560 = vmatpush1.msra.mxu0 0.0
  %4561 = vmatprep.subr.mxu0 0.0
  %4562 = vmatpush1.msra.mxu0 0.0
  %4563 = vmatprep.subr.mxu0 0.0
  %4564 = vmatpush1.msra.mxu0 0.0
  %4565 = vmatprep.subr.mxu0 0.0
  %4566 = vmatpush1.msra.mxu0 0.0
  %4567 = vmatprep.subr.mxu0 0.0
  %4568 = vmatpush1.msra.mxu0 0.0
  %4569 = vmatprep.subr.mxu0 0.0
  %4570 = vmatpush1.msra.mxu0 0.0
  %4571 = vmatprep.subr.mxu0 0.0
  %4572 = vmatpush1.msra.mxu0 0.0
  %4573 = vmatprep.subr.mxu0 0.0
  %4574 = vmatpush1.msra.mxu0 0.0
  %4575 = vmatprep.subr.mxu0 0.0
  %4576 = vmatpush1.msra.mxu0 0.0
  %4577 = vmatprep.subr.mxu0 0.0
  %4578 = vmatpush1.msra.mxu0 0.0
  %4579 = vmatprep.subr.mxu0 0.0
  %4580 = vmatpush1.msra.mxu0 0.0
  %4581 = vmatprep.subr.mxu0 0.0
  %4582 = vmatpush1.msra.mxu0 0.0
  %4583 = vmatprep.subr.mxu0 0.0
  %4584 = vmatpush1.msra.mxu0 0.0
  %4585 = vmatprep.subr.mxu0 0.0
  %4586 = vmatpush1.msra.mxu0 0.0
  %4587 = vmatprep.subr.mxu0 0.0
  %4588 = vmatpush1.msra.mxu0 0.0
  %4589 = vmatprep.subr.mxu0 0.0
  %4590 = vmatpush1.msra.mxu0 0.0
  %4591 = vmatprep.subr.mxu0 0.0
  %4592 = vmatpush1.msra.mxu0 0.0
  %4593 = vmatprep.subr.mxu0 0.0
  %4594 = vmatpush1.msra.mxu0 0.0
  %4595 = vmatprep.subr.mxu0 0.0
  %4596 = vmatpush1.msra.mxu0 0.0
  %4597 = vmatprep.subr.mxu0 0.0
  %4598 = vmatpush1.msra.mxu0 0.0
  %4599 = vmatprep.mubr.f32.mxu0 0.0
  %4600 = vmatmul.mubr.f32.gmra.mrb[0].mxu0 %v4533
  %v4601 = vpop.f32.mrb[0].mxu0
  %v4602 = vadd.f32 0.0, %v4601
  %v4603 = vpop.f32.mrb[0].mxu0
  %4604 = vdwg.mxu0
  %v4606 = vsel %vm716, %v3421, 0
  %4608 = vmatprep.subr.mxu0 0.0
  %4609 = vmatpush1.msra.mxu0 %v579
  %4610 = vmatprep.subr.mxu0 0.0
  %4611 = vmatpush1.msra.mxu0 0.0
  %4612 = vmatprep.subr.mxu0 0.0
  %4613 = vmatpush1.msra.mxu0 0.0
  %4614 = vmatprep.subr.mxu0 0.0
  %4615 = vmatpush1.msra.mxu0 0.0
  %4616 = vmatprep.subr.mxu0 0.0
  %4617 = vmatpush1.msra.mxu0 0.0
  %4618 = vmatprep.subr.mxu0 0.0
  %4619 = vmatpush1.msra.mxu0 0.0
  %4620 = vmatprep.subr.mxu0 0.0
  %4621 = vmatpush1.msra.mxu0 0.0
  %4622 = vmatprep.subr.mxu0 0.0
  %4623 = vmatpush1.msra.mxu0 0.0
  %4624 = vmatprep.subr.mxu0 0.0
  %4625 = vmatpush1.msra.mxu0 0.0
  %4626 = vmatprep.subr.mxu0 0.0
  %4627 = vmatpush1.msra.mxu0 0.0
  %4628 = vmatprep.subr.mxu0 0.0
  %4629 = vmatpush1.msra.mxu0 0.0
  %4630 = vmatprep.subr.mxu0 0.0
  %4631 = vmatpush1.msra.mxu0 0.0
  %4632 = vmatprep.subr.mxu0 0.0
  %4633 = vmatpush1.msra.mxu0 0.0
  %4634 = vmatprep.subr.mxu0 0.0
  %4635 = vmatpush1.msra.mxu0 0.0
  %4636 = vmatprep.subr.mxu0 0.0
  %4637 = vmatpush1.msra.mxu0 0.0
  %4638 = vmatprep.subr.mxu0 0.0
  %4639 = vmatpush1.msra.mxu0 0.0
  %4640 = vmatprep.subr.mxu0 0.0
  %4641 = vmatpush1.msra.mxu0 0.0
  %4642 = vmatprep.subr.mxu0 0.0
  %4643 = vmatpush1.msra.mxu0 0.0
  %4644 = vmatprep.subr.mxu0 0.0
  %4645 = vmatpush1.msra.mxu0 0.0
  %4646 = vmatprep.subr.mxu0 0.0
  %4647 = vmatpush1.msra.mxu0 0.0
  %4648 = vmatprep.subr.mxu0 0.0
  %4649 = vmatpush1.msra.mxu0 0.0
  %4650 = vmatprep.subr.mxu0 0.0
  %4651 = vmatpush1.msra.mxu0 0.0
  %4652 = vmatprep.subr.mxu0 0.0
  %4653 = vmatpush1.msra.mxu0 0.0
  %4654 = vmatprep.subr.mxu0 0.0
  %4655 = vmatpush1.msra.mxu0 0.0
  %4656 = vmatprep.subr.mxu0 0.0
  %4657 = vmatpush1.msra.mxu0 0.0
  %4658 = vmatprep.subr.mxu0 0.0
  %4659 = vmatpush1.msra.mxu0 0.0
  %4660 = vmatprep.subr.mxu0 0.0
  %4661 = vmatpush1.msra.mxu0 0.0
  %4662 = vmatprep.subr.mxu0 0.0
  %4663 = vmatpush1.msra.mxu0 0.0
  %4664 = vmatprep.subr.mxu0 0.0
  %4665 = vmatpush1.msra.mxu0 0.0
  %4666 = vmatprep.subr.mxu0 0.0
  %4667 = vmatpush1.msra.mxu0 0.0
  %4668 = vmatprep.subr.mxu0 0.0
  %4669 = vmatpush1.msra.mxu0 0.0
  %4670 = vmatprep.subr.mxu0 0.0
  %4671 = vmatpush1.msra.mxu0 0.0
  %4672 = vmatprep.mubr.f32.mxu0 0.0
  %4673 = vmatmul.mubr.f32.gmra.mrb[0].mxu0 %v4606
  %v4674 = vpop.f32.mrb[0].mxu0
  %v4675 = vadd.f32 0.0, %v4674
  %v4676 = vpop.f32.mrb[0].mxu0
  %4677 = vdwg.mxu0
  %v4679 = vsel %vm716, %v3422, 0
  %4681 = vmatprep.subr.mxu0 0.0
  %4682 = vmatpush1.msra.mxu0 %v581
  %4683 = vmatprep.subr.mxu0 0.0
  %4684 = vmatpush1.msra.mxu0 0.0
  %4685 = vmatprep.subr.mxu0 0.0
  %4686 = vmatpush1.msra.mxu0 0.0
  %4687 = vmatprep.subr.mxu0 0.0
  %4688 = vmatpush1.msra.mxu0 0.0
  %4689 = vmatprep.subr.mxu0 0.0
  %4690 = vmatpush1.msra.mxu0 0.0
  %4691 = vmatprep.subr.mxu0 0.0
  %4692 = vmatpush1.msra.mxu0 0.0
  %4693 = vmatprep.subr.mxu0 0.0
  %4694 = vmatpush1.msra.mxu0 0.0
  %4695 = vmatprep.subr.mxu0 0.0
  %4696 = vmatpush1.msra.mxu0 0.0
  %4697 = vmatprep.subr.mxu0 0.0
  %4698 = vmatpush1.msra.mxu0 0.0
  %4699 = vmatprep.subr.mxu0 0.0
  %4700 = vmatpush1.msra.mxu0 0.0
  %4701 = vmatprep.subr.mxu0 0.0
  %4702 = vmatpush1.msra.mxu0 0.0
  %4703 = vmatprep.subr.mxu0 0.0
  %4704 = vmatpush1.msra.mxu0 0.0
  %4705 = vmatprep.subr.mxu0 0.0
  %4706 = vmatpush1.msra.mxu0 0.0
  %4707 = vmatprep.subr.mxu0 0.0
  %4708 = vmatpush1.msra.mxu0 0.0
  %4709 = vmatprep.subr.mxu0 0.0
  %4710 = vmatpush1.msra.mxu0 0.0
  %4711 = vmatprep.subr.mxu0 0.0
  %4712 = vmatpush1.msra.mxu0 0.0
  %4713 = vmatprep.subr.mxu0 0.0
  %4714 = vmatpush1.msra.mxu0 0.0
  %4715 = vmatprep.subr.mxu0 0.0
  %4716 = vmatpush1.msra.mxu0 0.0
  %4717 = vmatprep.subr.mxu0 0.0
  %4718 = vmatpush1.msra.mxu0 0.0
  %4719 = vmatprep.subr.mxu0 0.0
  %4720 = vmatpush1.msra.mxu0 0.0
  %4721 = vmatprep.subr.mxu0 0.0
  %4722 = vmatpush1.msra.mxu0 0.0
  %4723 = vmatprep.subr.mxu0 0.0
  %4724 = vmatpush1.msra.mxu0 0.0
  %4725 = vmatprep.subr.mxu0 0.0
  %4726 = vmatpush1.msra.mxu0 0.0
  %4727 = vmatprep.subr.mxu0 0.0
  %4728 = vmatpush1.msra.mxu0 0.0
  %4729 = vmatprep.subr.mxu0 0.0
  %4730 = vmatpush1.msra.mxu0 0.0
  %4731 = vmatprep.subr.mxu0 0.0
  %4732 = vmatpush1.msra.mxu0 0.0
  %4733 = vmatprep.subr.mxu0 0.0
  %4734 = vmatpush1.msra.mxu0 0.0
  %4735 = vmatprep.subr.mxu0 0.0
  %4736 = vmatpush1.msra.mxu0 0.0
  %4737 = vmatprep.subr.mxu0 0.0
  %4738 = vmatpush1.msra.mxu0 0.0
  %4739 = vmatprep.subr.mxu0 0.0
  %4740 = vmatpush1.msra.mxu0 0.0
  %4741 = vmatprep.subr.mxu0 0.0
  %4742 = vmatpush1.msra.mxu0 0.0
  %4743 = vmatprep.subr.mxu0 0.0
  %4744 = vmatpush1.msra.mxu0 0.0
  %4745 = vmatprep.mubr.f32.mxu0 0.0
  %4746 = vmatmul.mubr.f32.gmra.mrb[0].mxu0 %v4679
  %v4747 = vpop.f32.mrb[0].mxu0
  %v4748 = vadd.f32 0.0, %v4747
  %v4749 = vpop.f32.mrb[0].mxu0
  %4750 = vdwg.mxu0
  %v4752 = vsel %vm716, %v3423, 0
  %4754 = vmatprep.subr.mxu0 0.0
  %4755 = vmatpush1.msra.mxu0 %v583
  %4756 = vmatprep.subr.mxu0 0.0
  %4757 = vmatpush1.msra.mxu0 0.0
  %4758 = vmatprep.subr.mxu0 0.0
  %4759 = vmatpush1.msra.mxu0 0.0
  %4760 = vmatprep.subr.mxu0 0.0
  %4761 = vmatpush1.msra.mxu0 0.0
  %4762 = vmatprep.subr.mxu0 0.0
  %4763 = vmatpush1.msra.mxu0 0.0
  %4764 = vmatprep.subr.mxu0 0.0
  %4765 = vmatpush1.msra.mxu0 0.0
  %4766 = vmatprep.subr.mxu0 0.0
  %4767 = vmatpush1.msra.mxu0 0.0
  %4768 = vmatprep.subr.mxu0 0.0
  %4769 = vmatpush1.msra.mxu0 0.0
  %4770 = vmatprep.subr.mxu0 0.0
  %4771 = vmatpush1.msra.mxu0 0.0
  %4772 = vmatprep.subr.mxu0 0.0
  %4773 = vmatpush1.msra.mxu0 0.0
  %4774 = vmatprep.subr.mxu0 0.0
  %4775 = vmatpush1.msra.mxu0 0.0
  %4776 = vmatprep.subr.mxu0 0.0
  %4777 = vmatpush1.msra.mxu0 0.0
  %4778 = vmatprep.subr.mxu0 0.0
  %4779 = vmatpush1.msra.mxu0 0.0
  %4780 = vmatprep.subr.mxu0 0.0
  %4781 = vmatpush1.msra.mxu0 0.0
  %4782 = vmatprep.subr.mxu0 0.0
  %4783 = vmatpush1.msra.mxu0 0.0
  %4784 = vmatprep.subr.mxu0 0.0
  %4785 = vmatpush1.msra.mxu0 0.0
  %4786 = vmatprep.subr.mxu0 0.0
  %4787 = vmatpush1.msra.mxu0 0.0
  %4788 = vmatprep.subr.mxu0 0.0
  %4789 = vmatpush1.msra.mxu0 0.0
  %4790 = vmatprep.subr.mxu0 0.0
  %4791 = vmatpush1.msra.mxu0 0.0
  %4792 = vmatprep.subr.mxu0 0.0
  %4793 = vmatpush1.msra.mxu0 0.0
  %4794 = vmatprep.subr.mxu0 0.0
  %4795 = vmatpush1.msra.mxu0 0.0
  %4796 = vmatprep.subr.mxu0 0.0
  %4797 = vmatpush1.msra.mxu0 0.0
  %4798 = vmatprep.subr.mxu0 0.0
  %4799 = vmatpush1.msra.mxu0 0.0
  %4800 = vmatprep.subr.mxu0 0.0
  %4801 = vmatpush1.msra.mxu0 0.0
  %4802 = vmatprep.subr.mxu0 0.0
  %4803 = vmatpush1.msra.mxu0 0.0
  %4804 = vmatprep.subr.mxu0 0.0
  %4805 = vmatpush1.msra.mxu0 0.0
  %4806 = vmatprep.subr.mxu0 0.0
  %4807 = vmatpush1.msra.mxu0 0.0
  %4808 = vmatprep.subr.mxu0 0.0
  %4809 = vmatpush1.msra.mxu0 0.0
  %4810 = vmatprep.subr.mxu0 0.0
  %4811 = vmatpush1.msra.mxu0 0.0
  %4812 = vmatprep.subr.mxu0 0.0
  %4813 = vmatpush1.msra.mxu0 0.0
  %4814 = vmatprep.subr.mxu0 0.0
  %4815 = vmatpush1.msra.mxu0 0.0
  %4816 = vmatprep.subr.mxu0 0.0
  %4817 = vmatpush1.msra.mxu0 0.0
  %4818 = vmatprep.mubr.f32.mxu0 0.0
  %4819 = vmatmul.mubr.f32.gmra.mrb[0].mxu0 %v4752
  %v4820 = vpop.f32.mrb[0].mxu0
  %v4821 = vadd.f32 0.0, %v4820
  %v4822 = vpop.f32.mrb[0].mxu0
  %4823 = vdwg.mxu0
  %v4825 = vsel %vm716, %v3424, 0
  %4827 = vmatprep.subr.mxu0 0.0
  %4828 = vmatpush1.msra.mxu0 %v585
  %4829 = vmatprep.subr.mxu0 0.0
  %4830 = vmatpush1.msra.mxu0 0.0
  %4831 = vmatprep.subr.mxu0 0.0
  %4832 = vmatpush1.msra.mxu0 0.0
  %4833 = vmatprep.subr.mxu0 0.0
  %4834 = vmatpush1.msra.mxu0 0.0
  %4835 = vmatprep.subr.mxu0 0.0
  %4836 = vmatpush1.msra.mxu0 0.0
  %4837 = vmatprep.subr.mxu0 0.0
  %4838 = vmatpush1.msra.mxu0 0.0
  %4839 = vmatprep.subr.mxu0 0.0
  %4840 = vmatpush1.msra.mxu0 0.0
  %4841 = vmatprep.subr.mxu0 0.0
  %4842 = vmatpush1.msra.mxu0 0.0
  %4843 = vmatprep.subr.mxu0 0.0
  %4844 = vmatpush1.msra.mxu0 0.0
  %4845 = vmatprep.subr.mxu0 0.0
  %4846 = vmatpush1.msra.mxu0 0.0
  %4847 = vmatprep.subr.mxu0 0.0
  %4848 = vmatpush1.msra.mxu0 0.0
  %4849 = vmatprep.subr.mxu0 0.0
  %4850 = vmatpush1.msra.mxu0 0.0
  %4851 = vmatprep.subr.mxu0 0.0
  %4852 = vmatpush1.msra.mxu0 0.0
  %4853 = vmatprep.subr.mxu0 0.0
  %4854 = vmatpush1.msra.mxu0 0.0
  %4855 = vmatprep.subr.mxu0 0.0
  %4856 = vmatpush1.msra.mxu0 0.0
  %4857 = vmatprep.subr.mxu0 0.0
  %4858 = vmatpush1.msra.mxu0 0.0
  %4859 = vmatprep.subr.mxu0 0.0
  %4860 = vmatpush1.msra.mxu0 0.0
  %4861 = vmatprep.subr.mxu0 0.0
  %4862 = vmatpush1.msra.mxu0 0.0
  %4863 = vmatprep.subr.mxu0 0.0
  %4864 = vmatpush1.msra.mxu0 0.0
  %4865 = vmatprep.subr.mxu0 0.0
  %4866 = vmatpush1.msra.mxu0 0.0
  %4867 = vmatprep.subr.mxu0 0.0
  %4868 = vmatpush1.msra.mxu0 0.0
  %4869 = vmatprep.subr.mxu0 0.0
  %4870 = vmatpush1.msra.mxu0 0.0
  %4871 = vmatprep.subr.mxu0 0.0
  %4872 = vmatpush1.msra.mxu0 0.0
  %4873 = vmatprep.subr.mxu0 0.0
  %4874 = vmatpush1.msra.mxu0 0.0
  %4875 = vmatprep.subr.mxu0 0.0
  %4876 = vmatpush1.msra.mxu0 0.0
  %4877 = vmatprep.subr.mxu0 0.0
  %4878 = vmatpush1.msra.mxu0 0.0
  %4879 = vmatprep.subr.mxu0 0.0
  %4880 = vmatpush1.msra.mxu0 0.0
  %4881 = vmatprep.subr.mxu0 0.0
  %4882 = vmatpush1.msra.mxu0 0.0
  %4883 = vmatprep.subr.mxu0 0.0
  %4884 = vmatpush1.msra.mxu0 0.0
  %4885 = vmatprep.subr.mxu0 0.0
  %4886 = vmatpush1.msra.mxu0 0.0
  %4887 = vmatprep.subr.mxu0 0.0
  %4888 = vmatpush1.msra.mxu0 0.0
  %4889 = vmatprep.subr.mxu0 0.0
  %4890 = vmatpush1.msra.mxu0 0.0
  %4891 = vmatprep.mubr.f32.mxu0 0.0
  %4892 = vmatmul.mubr.f32.gmra.mrb[0].mxu0 %v4825
  %v4893 = vpop.f32.mrb[0].mxu0
  %v4894 = vadd.f32 0.0, %v4893
  %v4895 = vpop.f32.mrb[0].mxu0
  %4896 = vdwg.mxu0
  %v4898 = vsel %vm716, %v3425, 0
  %4900 = vmatprep.subr.mxu0 0.0
  %4901 = vmatpush1.msra.mxu0 %v587
  %4902 = vmatprep.subr.mxu0 0.0
  %4903 = vmatpush1.msra.mxu0 0.0
  %4904 = vmatprep.subr.mxu0 0.0
  %4905 = vmatpush1.msra.mxu0 0.0
  %4906 = vmatprep.subr.mxu0 0.0
  %4907 = vmatpush1.msra.mxu0 0.0
  %4908 = vmatprep.subr.mxu0 0.0
  %4909 = vmatpush1.msra.mxu0 0.0
  %4910 = vmatprep.subr.mxu0 0.0
  %4911 = vmatpush1.msra.mxu0 0.0
  %4912 = vmatprep.subr.mxu0 0.0
  %4913 = vmatpush1.msra.mxu0 0.0
  %4914 = vmatprep.subr.mxu0 0.0
  %4915 = vmatpush1.msra.mxu0 0.0
  %4916 = vmatprep.subr.mxu0 0.0
  %4917 = vmatpush1.msra.mxu0 0.0
  %4918 = vmatprep.subr.mxu0 0.0
  %4919 = vmatpush1.msra.mxu0 0.0
  %4920 = vmatprep.subr.mxu0 0.0
  %4921 = vmatpush1.msra.mxu0 0.0
  %4922 = vmatprep.subr.mxu0 0.0
  %4923 = vmatpush1.msra.mxu0 0.0
  %4924 = vmatprep.subr.mxu0 0.0
  %4925 = vmatpush1.msra.mxu0 0.0
  %4926 = vmatprep.subr.mxu0 0.0
  %4927 = vmatpush1.msra.mxu0 0.0
  %4928 = vmatprep.subr.mxu0 0.0
  %4929 = vmatpush1.msra.mxu0 0.0
  %4930 = vmatprep.subr.mxu0 0.0
  %4931 = vmatpush1.msra.mxu0 0.0
  %4932 = vmatprep.subr.mxu0 0.0
  %4933 = vmatpush1.msra.mxu0 0.0
  %4934 = vmatprep.subr.mxu0 0.0
  %4935 = vmatpush1.msra.mxu0 0.0
  %4936 = vmatprep.subr.mxu0 0.0
  %4937 = vmatpush1.msra.mxu0 0.0
  %4938 = vmatprep.subr.mxu0 0.0
  %4939 = vmatpush1.msra.mxu0 0.0
  %4940 = vmatprep.subr.mxu0 0.0
  %4941 = vmatpush1.msra.mxu0 0.0
  %4942 = vmatprep.subr.mxu0 0.0
  %4943 = vmatpush1.msra.mxu0 0.0
  %4944 = vmatprep.subr.mxu0 0.0
  %4945 = vmatpush1.msra.mxu0 0.0
  %4946 = vmatprep.subr.mxu0 0.0
  %4947 = vmatpush1.msra.mxu0 0.0
  %4948 = vmatprep.subr.mxu0 0.0
  %4949 = vmatpush1.msra.mxu0 0.0
  %4950 = vmatprep.subr.mxu0 0.0
  %4951 = vmatpush1.msra.mxu0 0.0
  %4952 = vmatprep.subr.mxu0 0.0
  %4953 = vmatpush1.msra.mxu0 0.0
  %4954 = vmatprep.subr.mxu0 0.0
  %4955 = vmatpush1.msra.mxu0 0.0
  %4956 = vmatprep.subr.mxu0 0.0
  %4957 = vmatpush1.msra.mxu0 0.0
  %4958 = vmatprep.subr.mxu0 0.0
  %4959 = vmatpush1.msra.mxu0 0.0
  %4960 = vmatprep.subr.mxu0 0.0
  %4961 = vmatpush1.msra.mxu0 0.0
  %4962 = vmatprep.subr.mxu0 0.0
  %4963 = vmatpush1.msra.mxu0 0.0
  %4964 = vmatprep.mubr.f32.mxu0 0.0
  %4965 = vmatmul.mubr.f32.gmra.mrb[0].mxu0 %v4898
  %v4966 = vpop.f32.mrb[0].mxu0
  %v4967 = vadd.f32 0.0, %v4966
  %v4968 = vpop.f32.mrb[0].mxu0
  %4969 = vdwg.mxu0
  %v4971 = vsel %vm716, %v3426, 0
  %4973 = vmatprep.subr.mxu0 0.0
  %4974 = vmatpush1.msra.mxu0 %v589
  %4975 = vmatprep.subr.mxu0 0.0
  %4976 = vmatpush1.msra.mxu0 0.0
  %4977 = vmatprep.subr.mxu0 0.0
  %4978 = vmatpush1.msra.mxu0 0.0
  %4979 = vmatprep.subr.mxu0 0.0
  %4980 = vmatpush1.msra.mxu0 0.0
  %4981 = vmatprep.subr.mxu0 0.0
  %4982 = vmatpush1.msra.mxu0 0.0
  %4983 = vmatprep.subr.mxu0 0.0
  %4984 = vmatpush1.msra.mxu0 0.0
  %4985 = vmatprep.subr.mxu0 0.0
  %4986 = vmatpush1.msra.mxu0 0.0
  %4987 = vmatprep.subr.mxu0 0.0
  %4988 = vmatpush1.msra.mxu0 0.0
  %4989 = vmatprep.subr.mxu0 0.0
  %4990 = vmatpush1.msra.mxu0 0.0
  %4991 = vmatprep.subr.mxu0 0.0
  %4992 = vmatpush1.msra.mxu0 0.0
  %4993 = vmatprep.subr.mxu0 0.0
  %4994 = vmatpush1.msra.mxu0 0.0
  %4995 = vmatprep.subr.mxu0 0.0
  %4996 = vmatpush1.msra.mxu0 0.0
  %4997 = vmatprep.subr.mxu0 0.0
  %4998 = vmatpush1.msra.mxu0 0.0
  %4999 = vmatprep.subr.mxu0 0.0
  %5000 = vmatpush1.msra.mxu0 0.0
  %5001 = vmatprep.subr.mxu0 0.0
  %5002 = vmatpush1.msra.mxu0 0.0
  %5003 = vmatprep.subr.mxu0 0.0
  %5004 = vmatpush1.msra.mxu0 0.0
  %5005 = vmatprep.subr.mxu0 0.0
  %5006 = vmatpush1.msra.mxu0 0.0
  %5007 = vmatprep.subr.mxu0 0.0
  %5008 = vmatpush1.msra.mxu0 0.0
  %5009 = vmatprep.subr.mxu0 0.0
  %5010 = vmatpush1.msra.mxu0 0.0
  %5011 = vmatprep.subr.mxu0 0.0
  %5012 = vmatpush1.msra.mxu0 0.0
  %5013 = vmatprep.subr.mxu0 0.0
  %5014 = vmatpush1.msra.mxu0 0.0
  %5015 = vmatprep.subr.mxu0 0.0
  %5016 = vmatpush1.msra.mxu0 0.0
  %5017 = vmatprep.subr.mxu0 0.0
  %5018 = vmatpush1.msra.mxu0 0.0
  %5019 = vmatprep.subr.mxu0 0.0
  %5020 = vmatpush1.msra.mxu0 0.0
  %5021 = vmatprep.subr.mxu0 0.0
  %5022 = vmatpush1.msra.mxu0 0.0
  %5023 = vmatprep.subr.mxu0 0.0
  %5024 = vmatpush1.msra.mxu0 0.0
  %5025 = vmatprep.subr.mxu0 0.0
  %5026 = vmatpush1.msra.mxu0 0.0
  %5027 = vmatprep.subr.mxu0 0.0
  %5028 = vmatpush1.msra.mxu0 0.0
  %5029 = vmatprep.subr.mxu0 0.0
  %5030 = vmatpush1.msra.mxu0 0.0
  %5031 = vmatprep.subr.mxu0 0.0
  %5032 = vmatpush1.msra.mxu0 0.0
  %5033 = vmatprep.subr.mxu0 0.0
  %5034 = vmatpush1.msra.mxu0 0.0
  %5035 = vmatprep.subr.mxu0 0.0
  %5036 = vmatpush1.msra.mxu0 0.0
  %5037 = vmatprep.mubr.f32.mxu0 0.0
  %5038 = vmatmul.mubr.f32.gmra.mrb[0].mxu0 %v4971
  %v5039 = vpop.f32.mrb[0].mxu0
  %v5040 = vadd.f32 0.0, %v5039
  %v5041 = vpop.f32.mrb[0].mxu0
  %5042 = vdwg.mxu0
  %v5044 = vsel %vm716, %v3427, 0
  %5046 = vmatprep.subr.mxu0 0.0
  %5047 = vmatpush1.msra.mxu0 %v591
  %5048 = vmatprep.subr.mxu0 0.0
  %5049 = vmatpush1.msra.mxu0 0.0
  %5050 = vmatprep.subr.mxu0 0.0
  %5051 = vmatpush1.msra.mxu0 0.0
  %5052 = vmatprep.subr.mxu0 0.0
  %5053 = vmatpush1.msra.mxu0 0.0
  %5054 = vmatprep.subr.mxu0 0.0
  %5055 = vmatpush1.msra.mxu0 0.0
  %5056 = vmatprep.subr.mxu0 0.0
  %5057 = vmatpush1.msra.mxu0 0.0
  %5058 = vmatprep.subr.mxu0 0.0
  %5059 = vmatpush1.msra.mxu0 0.0
  %5060 = vmatprep.subr.mxu0 0.0
  %5061 = vmatpush1.msra.mxu0 0.0
  %5062 = vmatprep.subr.mxu0 0.0
  %5063 = vmatpush1.msra.mxu0 0.0
  %5064 = vmatprep.subr.mxu0 0.0
  %5065 = vmatpush1.msra.mxu0 0.0
  %5066 = vmatprep.subr.mxu0 0.0
  %5067 = vmatpush1.msra.mxu0 0.0
  %5068 = vmatprep.subr.mxu0 0.0
  %5069 = vmatpush1.msra.mxu0 0.0
  %5070 = vmatprep.subr.mxu0 0.0
  %5071 = vmatpush1.msra.mxu0 0.0
  %5072 = vmatprep.subr.mxu0 0.0
  %5073 = vmatpush1.msra.mxu0 0.0
  %5074 = vmatprep.subr.mxu0 0.0
  %5075 = vmatpush1.msra.mxu0 0.0
  %5076 = vmatprep.subr.mxu0 0.0
  %5077 = vmatpush1.msra.mxu0 0.0
  %5078 = vmatprep.subr.mxu0 0.0
  %5079 = vmatpush1.msra.mxu0 0.0
  %5080 = vmatprep.subr.mxu0 0.0
  %5081 = vmatpush1.msra.mxu0 0.0
  %5082 = vmatprep.subr.mxu0 0.0
  %5083 = vmatpush1.msra.mxu0 0.0
  %5084 = vmatprep.subr.mxu0 0.0
  %5085 = vmatpush1.msra.mxu0 0.0
  %5086 = vmatprep.subr.mxu0 0.0
  %5087 = vmatpush1.msra.mxu0 0.0
  %5088 = vmatprep.subr.mxu0 0.0
  %5089 = vmatpush1.msra.mxu0 0.0
  %5090 = vmatprep.subr.mxu0 0.0
  %5091 = vmatpush1.msra.mxu0 0.0
  %5092 = vmatprep.subr.mxu0 0.0
  %5093 = vmatpush1.msra.mxu0 0.0
  %5094 = vmatprep.subr.mxu0 0.0
  %5095 = vmatpush1.msra.mxu0 0.0
  %5096 = vmatprep.subr.mxu0 0.0
  %5097 = vmatpush1.msra.mxu0 0.0
  %5098 = vmatprep.subr.mxu0 0.0
  %5099 = vmatpush1.msra.mxu0 0.0
  %5100 = vmatprep.subr.mxu0 0.0
  %5101 = vmatpush1.msra.mxu0 0.0
  %5102 = vmatprep.subr.mxu0 0.0
  %5103 = vmatpush1.msra.mxu0 0.0
  %5104 = vmatprep.subr.mxu0 0.0
  %5105 = vmatpush1.msra.mxu0 0.0
  %5106 = vmatprep.subr.mxu0 0.0
  %5107 = vmatpush1.msra.mxu0 0.0
  %5108 = vmatprep.subr.mxu0 0.0
  %5109 = vmatpush1.msra.mxu0 0.0
  %5110 = vmatprep.mubr.f32.mxu0 0.0
  %5111 = vmatmul.mubr.f32.gmra.mrb[0].mxu0 %v5044
  %v5112 = vpop.f32.mrb[0].mxu0
  %v5113 = vadd.f32 0.0, %v5112
  %v5114 = vpop.f32.mrb[0].mxu0
  %5115 = vdwg.mxu0
  %v5117 = vsel %vm716, %v3428, 0
  %5119 = vmatprep.subr.mxu0 0.0
  %5120 = vmatpush1.msra.mxu0 %v593
  %5121 = vmatprep.subr.mxu0 0.0
  %5122 = vmatpush1.msra.mxu0 0.0
  %5123 = vmatprep.subr.mxu0 0.0
  %5124 = vmatpush1.msra.mxu0 0.0
  %5125 = vmatprep.subr.mxu0 0.0
  %5126 = vmatpush1.msra.mxu0 0.0
  %5127 = vmatprep.subr.mxu0 0.0
  %5128 = vmatpush1.msra.mxu0 0.0
  %5129 = vmatprep.subr.mxu0 0.0
  %5130 = vmatpush1.msra.mxu0 0.0
  %5131 = vmatprep.subr.mxu0 0.0
  %5132 = vmatpush1.msra.mxu0 0.0
  %5133 = vmatprep.subr.mxu0 0.0
  %5134 = vmatpush1.msra.mxu0 0.0
  %5135 = vmatprep.subr.mxu0 0.0
  %5136 = vmatpush1.msra.mxu0 0.0
  %5137 = vmatprep.subr.mxu0 0.0
  %5138 = vmatpush1.msra.mxu0 0.0
  %5139 = vmatprep.subr.mxu0 0.0
  %5140 = vmatpush1.msra.mxu0 0.0
  %5141 = vmatprep.subr.mxu0 0.0
  %5142 = vmatpush1.msra.mxu0 0.0
  %5143 = vmatprep.subr.mxu0 0.0
  %5144 = vmatpush1.msra.mxu0 0.0
  %5145 = vmatprep.subr.mxu0 0.0
  %5146 = vmatpush1.msra.mxu0 0.0
  %5147 = vmatprep.subr.mxu0 0.0
  %5148 = vmatpush1.msra.mxu0 0.0
  %5149 = vmatprep.subr.mxu0 0.0
  %5150 = vmatpush1.msra.mxu0 0.0
  %5151 = vmatprep.subr.mxu0 0.0
  %5152 = vmatpush1.msra.mxu0 0.0
  %5153 = vmatprep.subr.mxu0 0.0
  %5154 = vmatpush1.msra.mxu0 0.0
  %5155 = vmatprep.subr.mxu0 0.0
  %5156 = vmatpush1.msra.mxu0 0.0
  %5157 = vmatprep.subr.mxu0 0.0
  %5158 = vmatpush1.msra.mxu0 0.0
  %5159 = vmatprep.subr.mxu0 0.0
  %5160 = vmatpush1.msra.mxu0 0.0
  %5161 = vmatprep.subr.mxu0 0.0
  %5162 = vmatpush1.msra.mxu0 0.0
  %5163 = vmatprep.subr.mxu0 0.0
  %5164 = vmatpush1.msra.mxu0 0.0
  %5165 = vmatprep.subr.mxu0 0.0
  %5166 = vmatpush1.msra.mxu0 0.0
  %5167 = vmatprep.subr.mxu0 0.0
  %5168 = vmatpush1.msra.mxu0 0.0
  %5169 = vmatprep.subr.mxu0 0.0
  %5170 = vmatpush1.msra.mxu0 0.0
  %5171 = vmatprep.subr.mxu0 0.0
  %5172 = vmatpush1.msra.mxu0 0.0
  %5173 = vmatprep.subr.mxu0 0.0
  %5174 = vmatpush1.msra.mxu0 0.0
  %5175 = vmatprep.subr.mxu0 0.0
  %5176 = vmatpush1.msra.mxu0 0.0
  %5177 = vmatprep.subr.mxu0 0.0
  %5178 = vmatpush1.msra.mxu0 0.0
  %5179 = vmatprep.subr.mxu0 0.0
  %5180 = vmatpush1.msra.mxu0 0.0
  %5181 = vmatprep.subr.mxu0 0.0
  %5182 = vmatpush1.msra.mxu0 0.0
  %5183 = vmatprep.mubr.f32.mxu0 0.0
  %5184 = vmatmul.mubr.f32.gmra.mrb[0].mxu0 %v5117
  %v5185 = vpop.f32.mrb[0].mxu0
  %v5186 = vadd.f32 0.0, %v5185
  %v5187 = vpop.f32.mrb[0].mxu0
  %5188 = vdwg.mxu0
  %v5190 = vsel %vm716, %v3429, 0
  %5192 = vmatprep.subr.mxu0 0.0
  %5193 = vmatpush1.msra.mxu0 %v603
  %5194 = vmatprep.subr.mxu0 0.0
  %5195 = vmatpush1.msra.mxu0 0.0
  %5196 = vmatprep.subr.mxu0 0.0
  %5197 = vmatpush1.msra.mxu0 0.0
  %5198 = vmatprep.subr.mxu0 0.0
  %5199 = vmatpush1.msra.mxu0 0.0
  %5200 = vmatprep.subr.mxu0 0.0
  %5201 = vmatpush1.msra.mxu0 0.0
  %5202 = vmatprep.subr.mxu0 0.0
  %5203 = vmatpush1.msra.mxu0 0.0
  %5204 = vmatprep.subr.mxu0 0.0
  %5205 = vmatpush1.msra.mxu0 0.0
  %5206 = vmatprep.subr.mxu0 0.0
  %5207 = vmatpush1.msra.mxu0 0.0
  %5208 = vmatprep.subr.mxu0 0.0
  %5209 = vmatpush1.msra.mxu0 0.0
  %5210 = vmatprep.subr.mxu0 0.0
  %5211 = vmatpush1.msra.mxu0 0.0
  %5212 = vmatprep.subr.mxu0 0.0
  %5213 = vmatpush1.msra.mxu0 0.0
  %5214 = vmatprep.subr.mxu0 0.0
  %5215 = vmatpush1.msra.mxu0 0.0
  %5216 = vmatprep.subr.mxu0 0.0
  %5217 = vmatpush1.msra.mxu0 0.0
  %5218 = vmatprep.subr.mxu0 0.0
  %5219 = vmatpush1.msra.mxu0 0.0
  %5220 = vmatprep.subr.mxu0 0.0
  %5221 = vmatpush1.msra.mxu0 0.0
  %5222 = vmatprep.subr.mxu0 0.0
  %5223 = vmatpush1.msra.mxu0 0.0
  %5224 = vmatprep.subr.mxu0 0.0
  %5225 = vmatpush1.msra.mxu0 0.0
  %5226 = vmatprep.subr.mxu0 0.0
  %5227 = vmatpush1.msra.mxu0 0.0
  %5228 = vmatprep.subr.mxu0 0.0
  %5229 = vmatpush1.msra.mxu0 0.0
  %5230 = vmatprep.subr.mxu0 0.0
  %5231 = vmatpush1.msra.mxu0 0.0
  %5232 = vmatprep.subr.mxu0 0.0
  %5233 = vmatpush1.msra.mxu0 0.0
  %5234 = vmatprep.subr.mxu0 0.0
  %5235 = vmatpush1.msra.mxu0 0.0
  %5236 = vmatprep.subr.mxu0 0.0
  %5237 = vmatpush1.msra.mxu0 0.0
  %5238 = vmatprep.subr.mxu0 0.0
  %5239 = vmatpush1.msra.mxu0 0.0
  %5240 = vmatprep.subr.mxu0 0.0
  %5241 = vmatpush1.msra.mxu0 0.0
  %5242 = vmatprep.subr.mxu0 0.0
  %5243 = vmatpush1.msra.mxu0 0.0
  %5244 = vmatprep.subr.mxu0 0.0
  %5245 = vmatpush1.msra.mxu0 0.0
  %5246 = vmatprep.subr.mxu0 0.0
  %5247 = vmatpush1.msra.mxu0 0.0
  %5248 = vmatprep.subr.mxu0 0.0
  %5249 = vmatpush1.msra.mxu0 0.0
  %5250 = vmatprep.subr.mxu0 0.0
  %5251 = vmatpush1.msra.mxu0 0.0
  %5252 = vmatprep.subr.mxu0 0.0
  %5253 = vmatpush1.msra.mxu0 0.0
  %5254 = vmatprep.subr.mxu0 0.0
  %5255 = vmatpush1.msra.mxu0 0.0
  %5256 = vmatprep.mubr.f32.mxu0 0.0
  %5257 = vmatmul.mubr.f32.gmra.mrb[0].mxu0 %v5190
  %v5258 = vpop.f32.mrb[0].mxu0
  %v5259 = vadd.f32 0.0, %v5258
  %v5260 = vpop.f32.mrb[0].mxu0
  %5261 = vdwg.mxu0
  %v5263 = vsel %vm716, %v3430, 0
  %5265 = vmatprep.subr.mxu0 0.0
  %5266 = vmatpush1.msra.mxu0 %v605
  %5267 = vmatprep.subr.mxu0 0.0
  %5268 = vmatpush1.msra.mxu0 0.0
  %5269 = vmatprep.subr.mxu0 0.0
  %5270 = vmatpush1.msra.mxu0 0.0
  %5271 = vmatprep.subr.mxu0 0.0
  %5272 = vmatpush1.msra.mxu0 0.0
  %5273 = vmatprep.subr.mxu0 0.0
  %5274 = vmatpush1.msra.mxu0 0.0
  %5275 = vmatprep.subr.mxu0 0.0
  %5276 = vmatpush1.msra.mxu0 0.0
  %5277 = vmatprep.subr.mxu0 0.0
  %5278 = vmatpush1.msra.mxu0 0.0
  %5279 = vmatprep.subr.mxu0 0.0
  %5280 = vmatpush1.msra.mxu0 0.0
  %5281 = vmatprep.subr.mxu0 0.0
  %5282 = vmatpush1.msra.mxu0 0.0
  %5283 = vmatprep.subr.mxu0 0.0
  %5284 = vmatpush1.msra.mxu0 0.0
  %5285 = vmatprep.subr.mxu0 0.0
  %5286 = vmatpush1.msra.mxu0 0.0
  %5287 = vmatprep.subr.mxu0 0.0
  %5288 = vmatpush1.msra.mxu0 0.0
  %5289 = vmatprep.subr.mxu0 0.0
  %5290 = vmatpush1.msra.mxu0 0.0
  %5291 = vmatprep.subr.mxu0 0.0
  %5292 = vmatpush1.msra.mxu0 0.0
  %5293 = vmatprep.subr.mxu0 0.0
  %5294 = vmatpush1.msra.mxu0 0.0
  %5295 = vmatprep.subr.mxu0 0.0
  %5296 = vmatpush1.msra.mxu0 0.0
  %5297 = vmatprep.subr.mxu0 0.0
  %5298 = vmatpush1.msra.mxu0 0.0
  %5299 = vmatprep.subr.mxu0 0.0
  %5300 = vmatpush1.msra.mxu0 0.0
  %5301 = vmatprep.subr.mxu0 0.0
  %5302 = vmatpush1.msra.mxu0 0.0
  %5303 = vmatprep.subr.mxu0 0.0
  %5304 = vmatpush1.msra.mxu0 0.0
  %5305 = vmatprep.subr.mxu0 0.0
  %5306 = vmatpush1.msra.mxu0 0.0
  %5307 = vmatprep.subr.mxu0 0.0
  %5308 = vmatpush1.msra.mxu0 0.0
  %5309 = vmatprep.subr.mxu0 0.0
  %5310 = vmatpush1.msra.mxu0 0.0
  %5311 = vmatprep.subr.mxu0 0.0
  %5312 = vmatpush1.msra.mxu0 0.0
  %5313 = vmatprep.subr.mxu0 0.0
  %5314 = vmatpush1.msra.mxu0 0.0
  %5315 = vmatprep.subr.mxu0 0.0
  %5316 = vmatpush1.msra.mxu0 0.0
  %5317 = vmatprep.subr.mxu0 0.0
  %5318 = vmatpush1.msra.mxu0 0.0
  %5319 = vmatprep.subr.mxu0 0.0
  %5320 = vmatpush1.msra.mxu0 0.0
  %5321 = vmatprep.subr.mxu0 0.0
  %5322 = vmatpush1.msra.mxu0 0.0
  %5323 = vmatprep.subr.mxu0 0.0
  %5324 = vmatpush1.msra.mxu0 0.0
  %5325 = vmatprep.subr.mxu0 0.0
  %5326 = vmatpush1.msra.mxu0 0.0
  %5327 = vmatprep.subr.mxu0 0.0
  %5328 = vmatpush1.msra.mxu0 0.0
  %5329 = vmatprep.mubr.f32.mxu0 0.0
  %5330 = vmatmul.mubr.f32.gmra.mrb[0].mxu0 %v5263
  %v5331 = vpop.f32.mrb[0].mxu0
  %v5332 = vadd.f32 0.0, %v5331
  %v5333 = vpop.f32.mrb[0].mxu0
  %5334 = vdwg.mxu0
  %v5336 = vsel %vm716, %v3431, 0
  %5338 = vmatprep.subr.mxu0 0.0
  %5339 = vmatpush1.msra.mxu0 %v607
  %5340 = vmatprep.subr.mxu0 0.0
  %5341 = vmatpush1.msra.mxu0 0.0
  %5342 = vmatprep.subr.mxu0 0.0
  %5343 = vmatpush1.msra.mxu0 0.0
  %5344 = vmatprep.subr.mxu0 0.0
  %5345 = vmatpush1.msra.mxu0 0.0
  %5346 = vmatprep.subr.mxu0 0.0
  %5347 = vmatpush1.msra.mxu0 0.0
  %5348 = vmatprep.subr.mxu0 0.0
  %5349 = vmatpush1.msra.mxu0 0.0
  %5350 = vmatprep.subr.mxu0 0.0
  %5351 = vmatpush1.msra.mxu0 0.0
  %5352 = vmatprep.subr.mxu0 0.0
  %5353 = vmatpush1.msra.mxu0 0.0
  %5354 = vmatprep.subr.mxu0 0.0
  %5355 = vmatpush1.msra.mxu0 0.0
  %5356 = vmatprep.subr.mxu0 0.0
  %5357 = vmatpush1.msra.mxu0 0.0
  %5358 = vmatprep.subr.mxu0 0.0
  %5359 = vmatpush1.msra.mxu0 0.0
  %5360 = vmatprep.subr.mxu0 0.0
  %5361 = vmatpush1.msra.mxu0 0.0
  %5362 = vmatprep.subr.mxu0 0.0
  %5363 = vmatpush1.msra.mxu0 0.0
  %5364 = vmatprep.subr.mxu0 0.0
  %5365 = vmatpush1.msra.mxu0 0.0
  %5366 = vmatprep.subr.mxu0 0.0
  %5367 = vmatpush1.msra.mxu0 0.0
  %5368 = vmatprep.subr.mxu0 0.0
  %5369 = vmatpush1.msra.mxu0 0.0
  %5370 = vmatprep.subr.mxu0 0.0
  %5371 = vmatpush1.msra.mxu0 0.0
  %5372 = vmatprep.subr.mxu0 0.0
  %5373 = vmatpush1.msra.mxu0 0.0
  %5374 = vmatprep.subr.mxu0 0.0
  %5375 = vmatpush1.msra.mxu0 0.0
  %5376 = vmatprep.subr.mxu0 0.0
  %5377 = vmatpush1.msra.mxu0 0.0
  %5378 = vmatprep.subr.mxu0 0.0
  %5379 = vmatpush1.msra.mxu0 0.0
  %5380 = vmatprep.subr.mxu0 0.0
  %5381 = vmatpush1.msra.mxu0 0.0
  %5382 = vmatprep.subr.mxu0 0.0
  %5383 = vmatpush1.msra.mxu0 0.0
  %5384 = vmatprep.subr.mxu0 0.0
  %5385 = vmatpush1.msra.mxu0 0.0
  %5386 = vmatprep.subr.mxu0 0.0
  %5387 = vmatpush1.msra.mxu0 0.0
  %5388 = vmatprep.subr.mxu0 0.0
  %5389 = vmatpush1.msra.mxu0 0.0
  %5390 = vmatprep.subr.mxu0 0.0
  %5391 = vmatpush1.msra.mxu0 0.0
  %5392 = vmatprep.subr.mxu0 0.0
  %5393 = vmatpush1.msra.mxu0 0.0
  %5394 = vmatprep.subr.mxu0 0.0
  %5395 = vmatpush1.msra.mxu0 0.0
  %5396 = vmatprep.subr.mxu0 0.0
  %5397 = vmatpush1.msra.mxu0 0.0
  %5398 = vmatprep.subr.mxu0 0.0
  %5399 = vmatpush1.msra.mxu0 0.0
  %5400 = vmatprep.subr.mxu0 0.0
  %5401 = vmatpush1.msra.mxu0 0.0
  %5402 = vmatprep.mubr.f32.mxu0 0.0
  %5403 = vmatmul.mubr.f32.gmra.mrb[0].mxu0 %v5336
  %v5404 = vpop.f32.mrb[0].mxu0
  %v5405 = vadd.f32 0.0, %v5404
  %v5406 = vpop.f32.mrb[0].mxu0
  %5407 = vdwg.mxu0
  %v5409 = vsel %vm716, %v3432, 0
  %5411 = vmatprep.subr.mxu0 0.0
  %5412 = vmatpush1.msra.mxu0 %v609
  %5413 = vmatprep.subr.mxu0 0.0
  %5414 = vmatpush1.msra.mxu0 0.0
  %5415 = vmatprep.subr.mxu0 0.0
  %5416 = vmatpush1.msra.mxu0 0.0
  %5417 = vmatprep.subr.mxu0 0.0
  %5418 = vmatpush1.msra.mxu0 0.0
  %5419 = vmatprep.subr.mxu0 0.0
  %5420 = vmatpush1.msra.mxu0 0.0
  %5421 = vmatprep.subr.mxu0 0.0
  %5422 = vmatpush1.msra.mxu0 0.0
  %5423 = vmatprep.subr.mxu0 0.0
  %5424 = vmatpush1.msra.mxu0 0.0
  %5425 = vmatprep.subr.mxu0 0.0
  %5426 = vmatpush1.msra.mxu0 0.0
  %5427 = vmatprep.subr.mxu0 0.0
  %5428 = vmatpush1.msra.mxu0 0.0
  %5429 = vmatprep.subr.mxu0 0.0
  %5430 = vmatpush1.msra.mxu0 0.0
  %5431 = vmatprep.subr.mxu0 0.0
  %5432 = vmatpush1.msra.mxu0 0.0
  %5433 = vmatprep.subr.mxu0 0.0
  %5434 = vmatpush1.msra.mxu0 0.0
  %5435 = vmatprep.subr.mxu0 0.0
  %5436 = vmatpush1.msra.mxu0 0.0
  %5437 = vmatprep.subr.mxu0 0.0
  %5438 = vmatpush1.msra.mxu0 0.0
  %5439 = vmatprep.subr.mxu0 0.0
  %5440 = vmatpush1.msra.mxu0 0.0
  %5441 = vmatprep.subr.mxu0 0.0
  %5442 = vmatpush1.msra.mxu0 0.0
  %5443 = vmatprep.subr.mxu0 0.0
  %5444 = vmatpush1.msra.mxu0 0.0
  %5445 = vmatprep.subr.mxu0 0.0
  %5446 = vmatpush1.msra.mxu0 0.0
  %5447 = vmatprep.subr.mxu0 0.0
  %5448 = vmatpush1.msra.mxu0 0.0
  %5449 = vmatprep.subr.mxu0 0.0
  %5450 = vmatpush1.msra.mxu0 0.0
  %5451 = vmatprep.subr.mxu0 0.0
  %5452 = vmatpush1.msra.mxu0 0.0
  %5453 = vmatprep.subr.mxu0 0.0
  %5454 = vmatpush1.msra.mxu0 0.0
  %5455 = vmatprep.subr.mxu0 0.0
  %5456 = vmatpush1.msra.mxu0 0.0
  %5457 = vmatprep.subr.mxu0 0.0
  %5458 = vmatpush1.msra.mxu0 0.0
  %5459 = vmatprep.subr.mxu0 0.0
  %5460 = vmatpush1.msra.mxu0 0.0
  %5461 = vmatprep.subr.mxu0 0.0
  %5462 = vmatpush1.msra.mxu0 0.0
  %5463 = vmatprep.subr.mxu0 0.0
  %5464 = vmatpush1.msra.mxu0 0.0
  %5465 = vmatprep.subr.mxu0 0.0
  %5466 = vmatpush1.msra.mxu0 0.0
  %5467 = vmatprep.subr.mxu0 0.0
  %5468 = vmatpush1.msra.mxu0 0.0
  %5469 = vmatprep.subr.mxu0 0.0
  %5470 = vmatpush1.msra.mxu0 0.0
  %5471 = vmatprep.subr.mxu0 0.0
  %5472 = vmatpush1.msra.mxu0 0.0
  %5473 = vmatprep.subr.mxu0 0.0
  %5474 = vmatpush1.msra.mxu0 0.0
  %5475 = vmatprep.mubr.f32.mxu0 0.0
  %5476 = vmatmul.mubr.f32.gmra.mrb[0].mxu0 %v5409
  %v5477 = vpop.f32.mrb[0].mxu0
  %v5478 = vadd.f32 0.0, %v5477
  %v5479 = vpop.f32.mrb[0].mxu0
  %5480 = vdwg.mxu0
  %v5482 = vsel %vm716, %v3433, 0
  %5484 = vmatprep.subr.mxu0 0.0
  %5485 = vmatpush1.msra.mxu0 %v611
  %5486 = vmatprep.subr.mxu0 0.0
  %5487 = vmatpush1.msra.mxu0 0.0
  %5488 = vmatprep.subr.mxu0 0.0
  %5489 = vmatpush1.msra.mxu0 0.0
  %5490 = vmatprep.subr.mxu0 0.0
  %5491 = vmatpush1.msra.mxu0 0.0
  %5492 = vmatprep.subr.mxu0 0.0
  %5493 = vmatpush1.msra.mxu0 0.0
  %5494 = vmatprep.subr.mxu0 0.0
  %5495 = vmatpush1.msra.mxu0 0.0
  %5496 = vmatprep.subr.mxu0 0.0
  %5497 = vmatpush1.msra.mxu0 0.0
  %5498 = vmatprep.subr.mxu0 0.0
  %5499 = vmatpush1.msra.mxu0 0.0
  %5500 = vmatprep.subr.mxu0 0.0
  %5501 = vmatpush1.msra.mxu0 0.0
  %5502 = vmatprep.subr.mxu0 0.0
  %5503 = vmatpush1.msra.mxu0 0.0
  %5504 = vmatprep.subr.mxu0 0.0
  %5505 = vmatpush1.msra.mxu0 0.0
  %5506 = vmatprep.subr.mxu0 0.0
  %5507 = vmatpush1.msra.mxu0 0.0
  %5508 = vmatprep.subr.mxu0 0.0
  %5509 = vmatpush1.msra.mxu0 0.0
  %5510 = vmatprep.subr.mxu0 0.0
  %5511 = vmatpush1.msra.mxu0 0.0
  %5512 = vmatprep.subr.mxu0 0.0
  %5513 = vmatpush1.msra.mxu0 0.0
  %5514 = vmatprep.subr.mxu0 0.0
  %5515 = vmatpush1.msra.mxu0 0.0
  %5516 = vmatprep.subr.mxu0 0.0
  %5517 = vmatpush1.msra.mxu0 0.0
  %5518 = vmatprep.subr.mxu0 0.0
  %5519 = vmatpush1.msra.mxu0 0.0
  %5520 = vmatprep.subr.mxu0 0.0
  %5521 = vmatpush1.msra.mxu0 0.0
  %5522 = vmatprep.subr.mxu0 0.0
  %5523 = vmatpush1.msra.mxu0 0.0
  %5524 = vmatprep.subr.mxu0 0.0
  %5525 = vmatpush1.msra.mxu0 0.0
  %5526 = vmatprep.subr.mxu0 0.0
  %5527 = vmatpush1.msra.mxu0 0.0
  %5528 = vmatprep.subr.mxu0 0.0
  %5529 = vmatpush1.msra.mxu0 0.0
  %5530 = vmatprep.subr.mxu0 0.0
  %5531 = vmatpush1.msra.mxu0 0.0
  %5532 = vmatprep.subr.mxu0 0.0
  %5533 = vmatpush1.msra.mxu0 0.0
  %5534 = vmatprep.subr.mxu0 0.0
  %5535 = vmatpush1.msra.mxu0 0.0
  %5536 = vmatprep.subr.mxu0 0.0
  %5537 = vmatpush1.msra.mxu0 0.0
  %5538 = vmatprep.subr.mxu0 0.0
  %5539 = vmatpush1.msra.mxu0 0.0
  %5540 = vmatprep.subr.mxu0 0.0
  %5541 = vmatpush1.msra.mxu0 0.0
  %5542 = vmatprep.subr.mxu0 0.0
  %5543 = vmatpush1.msra.mxu0 0.0
  %5544 = vmatprep.subr.mxu0 0.0
  %5545 = vmatpush1.msra.mxu0 0.0
  %5546 = vmatprep.subr.mxu0 0.0
  %5547 = vmatpush1.msra.mxu0 0.0
  %5548 = vmatprep.mubr.f32.mxu0 0.0
  %5549 = vmatmul.mubr.f32.gmra.mrb[0].mxu0 %v5482
  %v5550 = vpop.f32.mrb[0].mxu0
  %v5551 = vadd.f32 0.0, %v5550
  %v5552 = vpop.f32.mrb[0].mxu0
  %5553 = vdwg.mxu0
  %v5555 = vsel %vm716, %v3434, 0
  %5557 = vmatprep.subr.mxu0 0.0
  %5558 = vmatpush1.msra.mxu0 %v613
  %5559 = vmatprep.subr.mxu0 0.0
  %5560 = vmatpush1.msra.mxu0 0.0
  %5561 = vmatprep.subr.mxu0 0.0
  %5562 = vmatpush1.msra.mxu0 0.0
  %5563 = vmatprep.subr.mxu0 0.0
  %5564 = vmatpush1.msra.mxu0 0.0
  %5565 = vmatprep.subr.mxu0 0.0
  %5566 = vmatpush1.msra.mxu0 0.0
  %5567 = vmatprep.subr.mxu0 0.0
  %5568 = vmatpush1.msra.mxu0 0.0
  %5569 = vmatprep.subr.mxu0 0.0
  %5570 = vmatpush1.msra.mxu0 0.0
  %5571 = vmatprep.subr.mxu0 0.0
  %5572 = vmatpush1.msra.mxu0 0.0
  %5573 = vmatprep.subr.mxu0 0.0
  %5574 = vmatpush1.msra.mxu0 0.0
  %5575 = vmatprep.subr.mxu0 0.0
  %5576 = vmatpush1.msra.mxu0 0.0
  %5577 = vmatprep.subr.mxu0 0.0
  %5578 = vmatpush1.msra.mxu0 0.0
  %5579 = vmatprep.subr.mxu0 0.0
  %5580 = vmatpush1.msra.mxu0 0.0
  %5581 = vmatprep.subr.mxu0 0.0
  %5582 = vmatpush1.msra.mxu0 0.0
  %5583 = vmatprep.subr.mxu0 0.0
  %5584 = vmatpush1.msra.mxu0 0.0
  %5585 = vmatprep.subr.mxu0 0.0
  %5586 = vmatpush1.msra.mxu0 0.0
  %5587 = vmatprep.subr.mxu0 0.0
  %5588 = vmatpush1.msra.mxu0 0.0
  %5589 = vmatprep.subr.mxu0 0.0
  %5590 = vmatpush1.msra.mxu0 0.0
  %5591 = vmatprep.subr.mxu0 0.0
  %5592 = vmatpush1.msra.mxu0 0.0
  %5593 = vmatprep.subr.mxu0 0.0
  %5594 = vmatpush1.msra.mxu0 0.0
  %5595 = vmatprep.subr.mxu0 0.0
  %5596 = vmatpush1.msra.mxu0 0.0
  %5597 = vmatprep.subr.mxu0 0.0
  %5598 = vmatpush1.msra.mxu0 0.0
  %5599 = vmatprep.subr.mxu0 0.0
  %5600 = vmatpush1.msra.mxu0 0.0
  %5601 = vmatprep.subr.mxu0 0.0
  %5602 = vmatpush1.msra.mxu0 0.0
  %5603 = vmatprep.subr.mxu0 0.0
  %5604 = vmatpush1.msra.mxu0 0.0
  %5605 = vmatprep.subr.mxu0 0.0
  %5606 = vmatpush1.msra.mxu0 0.0
  %5607 = vmatprep.subr.mxu0 0.0
  %5608 = vmatpush1.msra.mxu0 0.0
  %5609 = vmatprep.subr.mxu0 0.0
  %5610 = vmatpush1.msra.mxu0 0.0
  %5611 = vmatprep.subr.mxu0 0.0
  %5612 = vmatpush1.msra.mxu0 0.0
  %5613 = vmatprep.subr.mxu0 0.0
  %5614 = vmatpush1.msra.mxu0 0.0
  %5615 = vmatprep.subr.mxu0 0.0
  %5616 = vmatpush1.msra.mxu0 0.0
  %5617 = vmatprep.subr.mxu0 0.0
  %5618 = vmatpush1.msra.mxu0 0.0
  %5619 = vmatprep.subr.mxu0 0.0
  %5620 = vmatpush1.msra.mxu0 0.0
  %5621 = vmatprep.mubr.f32.mxu0 0.0
  %5622 = vmatmul.mubr.f32.gmra.mrb[0].mxu0 %v5555
  %v5623 = vpop.f32.mrb[0].mxu0
  %v5624 = vadd.f32 0.0, %v5623
  %v5625 = vpop.f32.mrb[0].mxu0
  %5626 = vdwg.mxu0
  %v5628 = vsel %vm716, %v3435, 0
  %5630 = vmatprep.subr.mxu0 0.0
  %5631 = vmatpush1.msra.mxu0 %v615
  %5632 = vmatprep.subr.mxu0 0.0
  %5633 = vmatpush1.msra.mxu0 0.0
  %5634 = vmatprep.subr.mxu0 0.0
  %5635 = vmatpush1.msra.mxu0 0.0
  %5636 = vmatprep.subr.mxu0 0.0
  %5637 = vmatpush1.msra.mxu0 0.0
  %5638 = vmatprep.subr.mxu0 0.0
  %5639 = vmatpush1.msra.mxu0 0.0
  %5640 = vmatprep.subr.mxu0 0.0
  %5641 = vmatpush1.msra.mxu0 0.0
  %5642 = vmatprep.subr.mxu0 0.0
  %5643 = vmatpush1.msra.mxu0 0.0
  %5644 = vmatprep.subr.mxu0 0.0
  %5645 = vmatpush1.msra.mxu0 0.0
  %5646 = vmatprep.subr.mxu0 0.0
  %5647 = vmatpush1.msra.mxu0 0.0
  %5648 = vmatprep.subr.mxu0 0.0
  %5649 = vmatpush1.msra.mxu0 0.0
  %5650 = vmatprep.subr.mxu0 0.0
  %5651 = vmatpush1.msra.mxu0 0.0
  %5652 = vmatprep.subr.mxu0 0.0
  %5653 = vmatpush1.msra.mxu0 0.0
  %5654 = vmatprep.subr.mxu0 0.0
  %5655 = vmatpush1.msra.mxu0 0.0
  %5656 = vmatprep.subr.mxu0 0.0
  %5657 = vmatpush1.msra.mxu0 0.0
  %5658 = vmatprep.subr.mxu0 0.0
  %5659 = vmatpush1.msra.mxu0 0.0
  %5660 = vmatprep.subr.mxu0 0.0
  %5661 = vmatpush1.msra.mxu0 0.0
  %5662 = vmatprep.subr.mxu0 0.0
  %5663 = vmatpush1.msra.mxu0 0.0
  %5664 = vmatprep.subr.mxu0 0.0
  %5665 = vmatpush1.msra.mxu0 0.0
  %5666 = vmatprep.subr.mxu0 0.0
  %5667 = vmatpush1.msra.mxu0 0.0
  %5668 = vmatprep.subr.mxu0 0.0
  %5669 = vmatpush1.msra.mxu0 0.0
  %5670 = vmatprep.subr.mxu0 0.0
  %5671 = vmatpush1.msra.mxu0 0.0
  %5672 = vmatprep.subr.mxu0 0.0
  %5673 = vmatpush1.msra.mxu0 0.0
  %5674 = vmatprep.subr.mxu0 0.0
  %5675 = vmatpush1.msra.mxu0 0.0
  %5676 = vmatprep.subr.mxu0 0.0
  %5677 = vmatpush1.msra.mxu0 0.0
  %5678 = vmatprep.subr.mxu0 0.0
  %5679 = vmatpush1.msra.mxu0 0.0
  %5680 = vmatprep.subr.mxu0 0.0
  %5681 = vmatpush1.msra.mxu0 0.0
  %5682 = vmatprep.subr.mxu0 0.0
  %5683 = vmatpush1.msra.mxu0 0.0
  %5684 = vmatprep.subr.mxu0 0.0
  %5685 = vmatpush1.msra.mxu0 0.0
  %5686 = vmatprep.subr.mxu0 0.0
  %5687 = vmatpush1.msra.mxu0 0.0
  %5688 = vmatprep.subr.mxu0 0.0
  %5689 = vmatpush1.msra.mxu0 0.0
  %5690 = vmatprep.subr.mxu0 0.0
  %5691 = vmatpush1.msra.mxu0 0.0
  %5692 = vmatprep.subr.mxu0 0.0
  %5693 = vmatpush1.msra.mxu0 0.0
  %5694 = vmatprep.mubr.f32.mxu0 0.0
  %5695 = vmatmul.mubr.f32.gmra.mrb[0].mxu0 %v5628
  %v5696 = vpop.f32.mrb[0].mxu0
  %v5697 = vadd.f32 0.0, %v5696
  %v5698 = vpop.f32.mrb[0].mxu0
  %5699 = vdwg.mxu0
  %v5701 = vsel %vm716, %v3436, 0
  %5703 = vmatprep.subr.mxu0 0.0
  %5704 = vmatpush1.msra.mxu0 %v617
  %5705 = vmatprep.subr.mxu0 0.0
  %5706 = vmatpush1.msra.mxu0 0.0
  %5707 = vmatprep.subr.mxu0 0.0
  %5708 = vmatpush1.msra.mxu0 0.0
  %5709 = vmatprep.subr.mxu0 0.0
  %5710 = vmatpush1.msra.mxu0 0.0
  %5711 = vmatprep.subr.mxu0 0.0
  %5712 = vmatpush1.msra.mxu0 0.0
  %5713 = vmatprep.subr.mxu0 0.0
  %5714 = vmatpush1.msra.mxu0 0.0
  %5715 = vmatprep.subr.mxu0 0.0
  %5716 = vmatpush1.msra.mxu0 0.0
  %5717 = vmatprep.subr.mxu0 0.0
  %5718 = vmatpush1.msra.mxu0 0.0
  %5719 = vmatprep.subr.mxu0 0.0
  %5720 = vmatpush1.msra.mxu0 0.0
  %5721 = vmatprep.subr.mxu0 0.0
  %5722 = vmatpush1.msra.mxu0 0.0
  %5723 = vmatprep.subr.mxu0 0.0
  %5724 = vmatpush1.msra.mxu0 0.0
  %5725 = vmatprep.subr.mxu0 0.0
  %5726 = vmatpush1.msra.mxu0 0.0
  %5727 = vmatprep.subr.mxu0 0.0
  %5728 = vmatpush1.msra.mxu0 0.0
  %5729 = vmatprep.subr.mxu0 0.0
  %5730 = vmatpush1.msra.mxu0 0.0
  %5731 = vmatprep.subr.mxu0 0.0
  %5732 = vmatpush1.msra.mxu0 0.0
  %5733 = vmatprep.subr.mxu0 0.0
  %5734 = vmatpush1.msra.mxu0 0.0
  %5735 = vmatprep.subr.mxu0 0.0
  %5736 = vmatpush1.msra.mxu0 0.0
  %5737 = vmatprep.subr.mxu0 0.0
  %5738 = vmatpush1.msra.mxu0 0.0
  %5739 = vmatprep.subr.mxu0 0.0
  %5740 = vmatpush1.msra.mxu0 0.0
  %5741 = vmatprep.subr.mxu0 0.0
  %5742 = vmatpush1.msra.mxu0 0.0
  %5743 = vmatprep.subr.mxu0 0.0
  %5744 = vmatpush1.msra.mxu0 0.0
  %5745 = vmatprep.subr.mxu0 0.0
  %5746 = vmatpush1.msra.mxu0 0.0
  %5747 = vmatprep.subr.mxu0 0.0
  %5748 = vmatpush1.msra.mxu0 0.0
  %5749 = vmatprep.subr.mxu0 0.0
  %5750 = vmatpush1.msra.mxu0 0.0
  %5751 = vmatprep.subr.mxu0 0.0
  %5752 = vmatpush1.msra.mxu0 0.0
  %5753 = vmatprep.subr.mxu0 0.0
  %5754 = vmatpush1.msra.mxu0 0.0
  %5755 = vmatprep.subr.mxu0 0.0
  %5756 = vmatpush1.msra.mxu0 0.0
  %5757 = vmatprep.subr.mxu0 0.0
  %5758 = vmatpush1.msra.mxu0 0.0
  %5759 = vmatprep.subr.mxu0 0.0
  %5760 = vmatpush1.msra.mxu0 0.0
  %5761 = vmatprep.subr.mxu0 0.0
  %5762 = vmatpush1.msra.mxu0 0.0
  %5763 = vmatprep.subr.mxu0 0.0
  %5764 = vmatpush1.msra.mxu0 0.0
  %5765 = vmatprep.subr.mxu0 0.0
  %5766 = vmatpush1.msra.mxu0 0.0
  %5767 = vmatprep.mubr.f32.mxu0 0.0
  %5768 = vmatmul.mubr.f32.gmra.mrb[0].mxu0 %v5701
  %v5769 = vpop.f32.mrb[0].mxu0
  %v5770 = vadd.f32 0.0, %v5769
  %v5771 = vpop.f32.mrb[0].mxu0
  %5772 = vdwg.mxu0
  %5781 = vrot.lane.b32.xlu0 %v4091, 8
  %v5782 = vpop.permute.xlu0 %5781
  %5783 = vrot.lane.b32.xlu0 %v4164, 8
  %v5784 = vpop.permute.xlu0 %5783
  %5785 = vrot.lane.b32.xlu0 %v4237, 8
  %v5786 = vpop.permute.xlu0 %5785
  %5787 = vrot.lane.b32.xlu0 %v4310, 8
  %v5788 = vpop.permute.xlu0 %5787
  %5789 = vrot.lane.b32.xlu0 %v4383, 8
  %v5790 = vpop.permute.xlu0 %5789
  %5791 = vrot.lane.b32.xlu0 %v4456, 8
  %v5792 = vpop.permute.xlu0 %5791
  %5793 = vrot.lane.b32.xlu0 %v4529, 8
  %v5794 = vpop.permute.xlu0 %5793
  %5795 = vrot.lane.b32.xlu0 %v4602, 8
  %v5796 = vpop.permute.xlu0 %5795
  %5813 = vrot.lane.b32.xlu0 %v4675, 16
  %v5814 = vpop.permute.xlu0 %5813
  %5815 = vrot.lane.b32.xlu0 %v4748, 16
  %v5816 = vpop.permute.xlu0 %5815
  %5817 = vrot.lane.b32.xlu0 %v4821, 16
  %v5818 = vpop.permute.xlu0 %5817
  %5819 = vrot.lane.b32.xlu0 %v4894, 16
  %v5820 = vpop.permute.xlu0 %5819
  %5821 = vrot.lane.b32.xlu0 %v4967, 16
  %v5822 = vpop.permute.xlu0 %5821
  %5823 = vrot.lane.b32.xlu0 %v5040, 16
  %v5824 = vpop.permute.xlu0 %5823
  %5825 = vrot.lane.b32.xlu0 %v5113, 16
  %v5826 = vpop.permute.xlu0 %5825
  %5827 = vrot.lane.b32.xlu0 %v5186, 16
  %v5828 = vpop.permute.xlu0 %5827
  %5845 = vrot.lane.b32.xlu0 %v5259, 24
  %v5846 = vpop.permute.xlu0 %5845
  %5847 = vrot.lane.b32.xlu0 %v5332, 24
  %v5848 = vpop.permute.xlu0 %5847
  %5849 = vrot.lane.b32.xlu0 %v5405, 24
  %v5850 = vpop.permute.xlu0 %5849
  %5851 = vrot.lane.b32.xlu0 %v5478, 24
  %v5852 = vpop.permute.xlu0 %5851
  %5853 = vrot.lane.b32.xlu0 %v5551, 24
  %v5854 = vpop.permute.xlu0 %5853
  %5855 = vrot.lane.b32.xlu0 %v5624, 24
  %v5856 = vpop.permute.xlu0 %5855
  %5857 = vrot.lane.b32.xlu0 %v5697, 24
  %v5858 = vpop.permute.xlu0 %5857
  %5859 = vrot.lane.b32.xlu0 %v5770, 24
  %v5860 = vpop.permute.xlu0 %5859
  %v5869 = vsel %vm716, %v3507, %v5782
  %v5870 = vsel %vm716, %v3580, %v5784
  %v5871 = vsel %vm716, %v3653, %v5786
  %v5872 = vsel %vm716, %v3726, %v5788
  %v5873 = vsel %vm716, %v3799, %v5790
  %v5874 = vsel %vm716, %v3872, %v5792
  %v5875 = vsel %vm716, %v3945, %v5794
  %v5876 = vsel %vm716, %v4018, %v5796
  %vm5877 = vcmask 130048
  %v5878 = vsel %vm5877, %v5869, %v5814
  %v5879 = vsel %vm5877, %v5870, %v5816
  %v5880 = vsel %vm5877, %v5871, %v5818
  %v5881 = vsel %vm5877, %v5872, %v5820
  %v5882 = vsel %vm5877, %v5873, %v5822
  %v5883 = vsel %vm5877, %v5874, %v5824
  %v5884 = vsel %vm5877, %v5875, %v5826
  %v5885 = vsel %vm5877, %v5876, %v5828
  %vm5886 = vcmask 195584
  %v5887 = vsel %vm5886, %v5878, %v5846
  %v5888 = vsel %vm5886, %v5879, %v5848
  %v5889 = vsel %vm5886, %v5880, %v5850
  %v5890 = vsel %vm5886, %v5881, %v5852
  %v5891 = vsel %vm5886, %v5882, %v5854
  %v5892 = vsel %vm5886, %v5883, %v5856
  %v5893 = vsel %vm5886, %v5884, %v5858
  %v5894 = vsel %vm5886, %v5885, %v5860
  %v5895 = vld [vmem:[%s5] sm:$0xff]
  %v5896 = vld [vmem:[%s5 + $0x8] sm:$0xff]
  %v5897 = vld [vmem:[%s5 + $0x10] sm:$0xff]
  %v5898 = vld [vmem:[%s5 + $0x18] sm:$0xff]
  %v5899 = vld [vmem:[%s7] sm:$0x1]
  %v5901 = vlaneseq
  %v5902 = vshrl.u32 %v5901, 7
  %v5903 = vsub.s32 0, %v5902
  %v5904 = vrot.slane %v5899, %v5903
  %vm5906 = vcmask 261120
  %v5908 = vsel %vm5906, %v5887, 0
  %v5911 = vsel %vm5906, %v5888, 0
  %v5914 = vsel %vm5906, %v5889, 0
  %v5917 = vsel %vm5906, %v5890, 0
  %v5920 = vsel %vm5906, %v5891, 0
  %v5923 = vsel %vm5906, %v5892, 0
  %v5926 = vsel %vm5906, %v5893, 0
  %v5929 = vsel %vm5906, %v5894, 0
  %5931 = vmatprep.subr.mxu0 0.0
  %5932 = vmatpush1.msra.mxu0 %v5895
  %5933 = vmatprep.subr.mxu0 0.0
  %5934 = vmatpush1.msra.mxu0 %v5896
  %5935 = vmatprep.subr.mxu0 0.0
  %5936 = vmatpush1.msra.mxu0 %v5897
  %5937 = vmatprep.subr.mxu0 0.0
  %5938 = vmatpush1.msra.mxu0 %v5898
  %5939 = vmatprep.subr.mxu0 0.0
  %5940 = vmatpush1.msra.mxu0 0.0
  %5941 = vmatprep.subr.mxu0 0.0
  %5942 = vmatpush1.msra.mxu0 0.0
  %5943 = vmatprep.subr.mxu0 0.0
  %5944 = vmatpush1.msra.mxu0 0.0
  %5945 = vmatprep.subr.mxu0 0.0
  %5946 = vmatpush1.msra.mxu0 0.0
  %5947 = vmatprep.subr.mxu0 0.0
  %5948 = vmatpush1.msra.mxu0 0.0
  %5949 = vmatprep.subr.mxu0 0.0
  %5950 = vmatpush1.msra.mxu0 0.0
  %5951 = vmatprep.subr.mxu0 0.0
  %5952 = vmatpush1.msra.mxu0 0.0
  %5953 = vmatprep.subr.mxu0 0.0
  %5954 = vmatpush1.msra.mxu0 0.0
  %5955 = vmatprep.subr.mxu0 0.0
  %5956 = vmatpush1.msra.mxu0 0.0
  %5957 = vmatprep.subr.mxu0 0.0
  %5958 = vmatpush1.msra.mxu0 0.0
  %5959 = vmatprep.subr.mxu0 0.0
  %5960 = vmatpush1.msra.mxu0 0.0
  %5961 = vmatprep.subr.mxu0 0.0
  %5962 = vmatpush1.msra.mxu0 0.0
  %5963 = vmatprep.subr.mxu0 0.0
  %5964 = vmatpush1.msra.mxu0 0.0
  %5965 = vmatprep.subr.mxu0 0.0
  %5966 = vmatpush1.msra.mxu0 0.0
  %5967 = vmatprep.subr.mxu0 0.0
  %5968 = vmatpush1.msra.mxu0 0.0
  %5969 = vmatprep.subr.mxu0 0.0
  %5970 = vmatpush1.msra.mxu0 0.0
  %5971 = vmatprep.subr.mxu0 0.0
  %5972 = vmatpush1.msra.mxu0 0.0
  %5973 = vmatprep.subr.mxu0 0.0
  %5974 = vmatpush1.msra.mxu0 0.0
  %5975 = vmatprep.subr.mxu0 0.0
  %5976 = vmatpush1.msra.mxu0 0.0
  %5977 = vmatprep.subr.mxu0 0.0
  %5978 = vmatpush1.msra.mxu0 0.0
  %5979 = vmatprep.subr.mxu0 0.0
  %5980 = vmatpush1.msra.mxu0 0.0
  %5981 = vmatprep.subr.mxu0 0.0
  %5982 = vmatpush1.msra.mxu0 0.0
  %5983 = vmatprep.subr.mxu0 0.0
  %5984 = vmatpush1.msra.mxu0 0.0
  %5985 = vmatprep.subr.mxu0 0.0
  %5986 = vmatpush1.msra.mxu0 0.0
  %5987 = vmatprep.subr.mxu0 0.0
  %5988 = vmatpush1.msra.mxu0 0.0
  %5989 = vmatprep.subr.mxu0 0.0
  %5990 = vmatpush1.msra.mxu0 0.0
  %5991 = vmatprep.subr.mxu0 0.0
  %5992 = vmatpush1.msra.mxu0 0.0
  %5993 = vmatprep.subr.mxu0 0.0
  %5994 = vmatpush1.msra.mxu0 0.0
  %5995 = vmatprep.mubr.f32.mxu0 0.0
  %5996 = vmatmul.mubr.f32.gmra.mrb[0].mxu0 %v5908
  %v5997 = vpop.f32.mrb[0].mxu0
  %v5998 = vadd.f32 %v5904, %v5997
  %v5999 = vpop.f32.mrb[0].mxu0
  %6000 = vmatprep.mubr.f32.mxu0 0.0
  %6001 = vmatmul.mubr.f32.gmra.mrb[0].mxu0 %v5911
  %v6002 = vpop.f32.mrb[0].mxu0
  %v6003 = vadd.f32 %v5904, %v6002
  %v6004 = vpop.f32.mrb[0].mxu0
  %6005 = vmatprep.mubr.f32.mxu0 0.0
  %6006 = vmatmul.mubr.f32.gmra.mrb[0].mxu0 %v5914
  %v6007 = vpop.f32.mrb[0].mxu0
  %v6008 = vadd.f32 %v5904, %v6007
  %v6009 = vpop.f32.mrb[0].mxu0
  %6010 = vmatprep.mubr.f32.mxu0 0.0
  %6011 = vmatmul.mubr.f32.gmra.mrb[0].mxu0 %v5917
  %v6012 = vpop.f32.mrb[0].mxu0
  %v6013 = vadd.f32 %v5904, %v6012
  %v6014 = vpop.f32.mrb[0].mxu0
  %6015 = vmatprep.mubr.f32.mxu0 0.0
  %6016 = vmatmul.mubr.f32.gmra.mrb[0].mxu0 %v5920
  %v6017 = vpop.f32.mrb[0].mxu0
  %v6018 = vadd.f32 %v5904, %v6017
  %v6019 = vpop.f32.mrb[0].mxu0
  %6020 = vmatprep.mubr.f32.mxu0 0.0
  %6021 = vmatmul.mubr.f32.gmra.mrb[0].mxu0 %v5923
  %v6022 = vpop.f32.mrb[0].mxu0
  %v6023 = vadd.f32 %v5904, %v6022
  %v6024 = vpop.f32.mrb[0].mxu0
  %6025 = vmatprep.mubr.f32.mxu0 0.0
  %6026 = vmatmul.mubr.f32.gmra.mrb[0].mxu0 %v5926
  %v6027 = vpop.f32.mrb[0].mxu0
  %v6028 = vadd.f32 %v5904, %v6027
  %v6029 = vpop.f32.mrb[0].mxu0
  %6030 = vmatprep.mubr.f32.mxu0 0.0
  %6031 = vmatmul.mubr.f32.gmra.mrb[0].mxu0 %v5929
  %v6032 = vpop.f32.mrb[0].mxu0
  %v6033 = vadd.f32 %v5904, %v6032
  %v6034 = vpop.f32.mrb[0].mxu0
  %6035 = vdwg.mxu0
  %v6037 = vsel %vm78, %v48, 0
  %6039 = vmatprep.subr.mxu0 0.0
  %6040 = vmatpush1.msra.mxu0 %v46
  %6041 = vmatprep.subr.mxu0 0.0
  %6042 = vmatpush1.msra.mxu0 %v47
  %6043 = vmatprep.subr.mxu0 0.0
  %6044 = vmatpush1.msra.mxu0 %v6037
  %6045 = vmatprep.subr.mxu0 0.0
  %6046 = vmatpush1.msra.mxu0 0.0
  %6047 = vmatprep.subr.mxu0 0.0
  %6048 = vmatpush1.msra.mxu0 0.0
  %6049 = vmatprep.subr.mxu0 0.0
  %6050 = vmatpush1.msra.mxu0 0.0
  %6051 = vmatprep.subr.mxu0 0.0
  %6052 = vmatpush1.msra.mxu0 0.0
  %6053 = vmatprep.subr.mxu0 0.0
  %6054 = vmatpush1.msra.mxu0 0.0
  %6055 = vmatprep.subr.mxu0 0.0
  %6056 = vmatpush1.msra.mxu0 0.0
  %6057 = vmatprep.subr.mxu0 0.0
  %6058 = vmatpush1.msra.mxu0 0.0
  %6059 = vmatprep.subr.mxu0 0.0
  %6060 = vmatpush1.msra.mxu0 0.0
  %6061 = vmatprep.subr.mxu0 0.0
  %6062 = vmatpush1.msra.mxu0 0.0
  %6063 = vmatprep.subr.mxu0 0.0
  %6064 = vmatpush1.msra.mxu0 0.0
  %6065 = vmatprep.subr.mxu0 0.0
  %6066 = vmatpush1.msra.mxu0 0.0
  %6067 = vmatprep.subr.mxu0 0.0
  %6068 = vmatpush1.msra.mxu0 0.0
  %6069 = vmatprep.subr.mxu0 0.0
  %6070 = vmatpush1.msra.mxu0 0.0
  %6071 = vmatprep.subr.mxu0 0.0
  %6072 = vmatpush1.msra.mxu0 0.0
  %6073 = vmatprep.subr.mxu0 0.0
  %6074 = vmatpush1.msra.mxu0 0.0
  %6075 = vmatprep.subr.mxu0 0.0
  %6076 = vmatpush1.msra.mxu0 0.0
  %6077 = vmatprep.subr.mxu0 0.0
  %6078 = vmatpush1.msra.mxu0 0.0
  %6079 = vmatprep.subr.mxu0 0.0
  %6080 = vmatpush1.msra.mxu0 0.0
  %6081 = vmatprep.subr.mxu0 0.0
  %6082 = vmatpush1.msra.mxu0 0.0
  %6083 = vmatprep.subr.mxu0 0.0
  %6084 = vmatpush1.msra.mxu0 0.0
  %6085 = vmatprep.subr.mxu0 0.0
  %6086 = vmatpush1.msra.mxu0 0.0
  %6087 = vmatprep.subr.mxu0 0.0
  %6088 = vmatpush1.msra.mxu0 0.0
  %6089 = vmatprep.subr.mxu0 0.0
  %6090 = vmatpush1.msra.mxu0 0.0
  %6091 = vmatprep.subr.mxu0 0.0
  %6092 = vmatpush1.msra.mxu0 0.0
  %6093 = vmatprep.subr.mxu0 0.0
  %6094 = vmatpush1.msra.mxu0 0.0
  %6095 = vmatprep.subr.mxu0 0.0
  %6096 = vmatpush1.msra.mxu0 0.0
  %6097 = vmatprep.subr.mxu0 0.0
  %6098 = vmatpush1.msra.mxu0 0.0
  %6099 = vmatprep.subr.mxu0 0.0
  %6100 = vmatpush1.msra.mxu0 0.0
  %6101 = vmatprep.subr.mxu0 0.0
  %6102 = vmatpush1.msra.mxu0 0.0
  %6103 = vmatprep.mubr.f32.mxu0 0.0
  %6104 = vmatmul.mubr.f32.gmra.mrb[0].mxu0 %v55
  %v6105 = vpop.f32.mrb[0].mxu0
  %v6106 = vadd.f32 %v5998, %v6105
  %v6107 = vpop.f32.mrb[0].mxu0
  %6108 = vmatprep.mubr.f32.mxu0 0.0
  %6109 = vmatmul.mubr.f32.gmra.mrb[0].mxu0 %v58
  %v6110 = vpop.f32.mrb[0].mxu0
  %v6111 = vadd.f32 %v6003, %v6110
  %v6112 = vpop.f32.mrb[0].mxu0
  %6113 = vmatprep.mubr.f32.mxu0 0.0
  %6114 = vmatmul.mubr.f32.gmra.mrb[0].mxu0 %v61
  %v6115 = vpop.f32.mrb[0].mxu0
  %v6116 = vadd.f32 %v6008, %v6115
  %v6117 = vpop.f32.mrb[0].mxu0
  %6118 = vmatprep.mubr.f32.mxu0 0.0
  %6119 = vmatmul.mubr.f32.gmra.mrb[0].mxu0 %v64
  %v6120 = vpop.f32.mrb[0].mxu0
  %v6121 = vadd.f32 %v6013, %v6120
  %v6122 = vpop.f32.mrb[0].mxu0
  %6123 = vmatprep.mubr.f32.mxu0 0.0
  %6124 = vmatmul.mubr.f32.gmra.mrb[0].mxu0 %v67
  %v6125 = vpop.f32.mrb[0].mxu0
  %v6126 = vadd.f32 %v6018, %v6125
  %v6127 = vpop.f32.mrb[0].mxu0
  %6128 = vmatprep.mubr.f32.mxu0 0.0
  %6129 = vmatmul.mubr.f32.gmra.mrb[0].mxu0 %v70
  %v6130 = vpop.f32.mrb[0].mxu0
  %v6131 = vadd.f32 %v6023, %v6130
  %v6132 = vpop.f32.mrb[0].mxu0
  %6133 = vmatprep.mubr.f32.mxu0 0.0
  %6134 = vmatmul.mubr.f32.gmra.mrb[0].mxu0 %v73
  %v6135 = vpop.f32.mrb[0].mxu0
  %v6136 = vadd.f32 %v6028, %v6135
  %v6137 = vpop.f32.mrb[0].mxu0
  %6138 = vmatprep.mubr.f32.mxu0 0.0
  %6139 = vmatmul.mubr.f32.gmra.mrb[0].mxu0 %v76
  %v6140 = vpop.f32.mrb[0].mxu0
  %v6141 = vadd.f32 %v6033, %v6140
  %v6142 = vpop.f32.mrb[0].mxu0
  %6143 = vdwg.mxu0
  %v6144 = vld [vmem:[%s6] sm:$0xff]
  %v6145 = vld [vmem:[%s6 + $0x8] sm:$0xff]
  %v6146 = vld [vmem:[%s6 + $0x10] sm:$0xff]
  %v6147 = vld [vmem:[%s6 + $0x18] sm:$0xff]
  %s6148 = scalar_lea.vmem %s7, 1
  %v6149 = vld [vmem:[%s6148] sm:$0x1]
  %v6151 = vlaneseq
  %v6152 = vshrl.u32 %v6151, 7
  %v6153 = vsub.s32 0, %v6152
  %v6154 = vrot.slane %v6149, %v6153
  %v6157 = vsel %vm5906, %v6106, 0
  %v6160 = vsel %vm5906, %v6111, 0
  %v6163 = vsel %vm5906, %v6116, 0
  %v6166 = vsel %vm5906, %v6121, 0
  %v6169 = vsel %vm5906, %v6126, 0
  %v6172 = vsel %vm5906, %v6131, 0
  %v6175 = vsel %vm5906, %v6136, 0
  %v6178 = vsel %vm5906, %v6141, 0
  %6180 = vmatprep.subr.mxu0 0.0
  %6181 = vmatpush1.msra.mxu0 %v6144
  %6182 = vmatprep.subr.mxu0 0.0
  %6183 = vmatpush1.msra.mxu0 %v6145
  %6184 = vmatprep.subr.mxu0 0.0
  %6185 = vmatpush1.msra.mxu0 %v6146
  %6186 = vmatprep.subr.mxu0 0.0
  %6187 = vmatpush1.msra.mxu0 %v6147
  %6188 = vmatprep.subr.mxu0 0.0
  %6189 = vmatpush1.msra.mxu0 0.0
  %6190 = vmatprep.subr.mxu0 0.0
  %6191 = vmatpush1.msra.mxu0 0.0
  %6192 = vmatprep.subr.mxu0 0.0
  %6193 = vmatpush1.msra.mxu0 0.0
  %6194 = vmatprep.subr.mxu0 0.0
  %6195 = vmatpush1.msra.mxu0 0.0
  %6196 = vmatprep.subr.mxu0 0.0
  %6197 = vmatpush1.msra.mxu0 0.0
  %6198 = vmatprep.subr.mxu0 0.0
  %6199 = vmatpush1.msra.mxu0 0.0
  %6200 = vmatprep.subr.mxu0 0.0
  %6201 = vmatpush1.msra.mxu0 0.0
  %6202 = vmatprep.subr.mxu0 0.0
  %6203 = vmatpush1.msra.mxu0 0.0
  %6204 = vmatprep.subr.mxu0 0.0
  %6205 = vmatpush1.msra.mxu0 0.0
  %6206 = vmatprep.subr.mxu0 0.0
  %6207 = vmatpush1.msra.mxu0 0.0
  %6208 = vmatprep.subr.mxu0 0.0
  %6209 = vmatpush1.msra.mxu0 0.0
  %6210 = vmatprep.subr.mxu0 0.0
  %6211 = vmatpush1.msra.mxu0 0.0
  %6212 = vmatprep.subr.mxu0 0.0
  %6213 = vmatpush1.msra.mxu0 0.0
  %6214 = vmatprep.subr.mxu0 0.0
  %6215 = vmatpush1.msra.mxu0 0.0
  %6216 = vmatprep.subr.mxu0 0.0
  %6217 = vmatpush1.msra.mxu0 0.0
  %6218 = vmatprep.subr.mxu0 0.0
  %6219 = vmatpush1.msra.mxu0 0.0
  %6220 = vmatprep.subr.mxu0 0.0
  %6221 = vmatpush1.msra.mxu0 0.0
  %6222 = vmatprep.subr.mxu0 0.0
  %6223 = vmatpush1.msra.mxu0 0.0
  %6224 = vmatprep.subr.mxu0 0.0
  %6225 = vmatpush1.msra.mxu0 0.0
  %6226 = vmatprep.subr.mxu0 0.0
  %6227 = vmatpush1.msra.mxu0 0.0
  %6228 = vmatprep.subr.mxu0 0.0
  %6229 = vmatpush1.msra.mxu0 0.0
  %6230 = vmatprep.subr.mxu0 0.0
  %6231 = vmatpush1.msra.mxu0 0.0
  %6232 = vmatprep.subr.mxu0 0.0
  %6233 = vmatpush1.msra.mxu0 0.0
  %6234 = vmatprep.subr.mxu0 0.0
  %6235 = vmatpush1.msra.mxu0 0.0
  %6236 = vmatprep.subr.mxu0 0.0
  %6237 = vmatpush1.msra.mxu0 0.0
  %6238 = vmatprep.subr.mxu0 0.0
  %6239 = vmatpush1.msra.mxu0 0.0
  %6240 = vmatprep.subr.mxu0 0.0
  %6241 = vmatpush1.msra.mxu0 0.0
  %6242 = vmatprep.subr.mxu0 0.0
  %6243 = vmatpush1.msra.mxu0 0.0
  %6244 = vmatprep.mubr.f32.mxu0 0.0
  %6245 = vmatmul.mubr.f32.gmra.mrb[0].mxu0 %v6157
  %v6246 = vpop.f32.mrb[0].mxu0
  %v6247 = vadd.f32 %v6154, %v6246
  %v6248 = vpop.f32.mrb[0].mxu0
  %6249 = vmatprep.mubr.f32.mxu0 0.0
  %6250 = vmatmul.mubr.f32.gmra.mrb[0].mxu0 %v6160
  %v6251 = vpop.f32.mrb[0].mxu0
  %v6252 = vadd.f32 %v6154, %v6251
  %v6253 = vpop.f32.mrb[0].mxu0
  %6254 = vmatprep.mubr.f32.mxu0 0.0
  %6255 = vmatmul.mubr.f32.gmra.mrb[0].mxu0 %v6163
  %v6256 = vpop.f32.mrb[0].mxu0
  %v6257 = vadd.f32 %v6154, %v6256
  %v6258 = vpop.f32.mrb[0].mxu0
  %6259 = vmatprep.mubr.f32.mxu0 0.0
  %6260 = vmatmul.mubr.f32.gmra.mrb[0].mxu0 %v6166
  %v6261 = vpop.f32.mrb[0].mxu0
  %v6262 = vadd.f32 %v6154, %v6261
  %v6263 = vpop.f32.mrb[0].mxu0
  %6264 = vmatprep.mubr.f32.mxu0 0.0
  %6265 = vmatmul.mubr.f32.gmra.mrb[0].mxu0 %v6169
  %v6266 = vpop.f32.mrb[0].mxu0
  %v6267 = vadd.f32 %v6154, %v6266
  %v6268 = vpop.f32.mrb[0].mxu0
  %6269 = vmatprep.mubr.f32.mxu0 0.0
  %6270 = vmatmul.mubr.f32.gmra.mrb[0].mxu0 %v6172
  %v6271 = vpop.f32.mrb[0].mxu0
  %v6272 = vadd.f32 %v6154, %v6271
  %v6273 = vpop.f32.mrb[0].mxu0
  %6274 = vmatprep.mubr.f32.mxu0 0.0
  %6275 = vmatmul.mubr.f32.gmra.mrb[0].mxu0 %v6175
  %v6276 = vpop.f32.mrb[0].mxu0
  %v6277 = vadd.f32 %v6154, %v6276
  %v6278 = vpop.f32.mrb[0].mxu0
  %6279 = vmatprep.mubr.f32.mxu0 0.0
  %6280 = vmatmul.mubr.f32.gmra.mrb[0].mxu0 %v6178
  %v6281 = vpop.f32.mrb[0].mxu0
  %v6282 = vadd.f32 %v6154, %v6281
  %v6283 = vpop.f32.mrb[0].mxu0
  %6284 = vdwg.mxu0
  %v6285 = vmax.f32 %v6247, 0.0
  %v6286 = vmax.f32 %v6252, 0.0
  %v6287 = vmax.f32 %v6257, 0.0
  %v6288 = vmax.f32 %v6262, 0.0
  %v6289 = vmax.f32 %v6267, 0.0
  %v6290 = vmax.f32 %v6272, 0.0
  %v6291 = vmax.f32 %v6277, 0.0
  %v6292 = vmax.f32 %v6282, 0.0
  %v6293 = vadd.f32 %v6106, %v6285
  %v6294 = vadd.f32 %v6111, %v6286
  %v6295 = vadd.f32 %v6116, %v6287
  %v6296 = vadd.f32 %v6121, %v6288
  %v6297 = vadd.f32 %v6126, %v6289
  %v6298 = vadd.f32 %v6131, %v6290
  %v6299 = vadd.f32 %v6136, %v6291
  %v6300 = vadd.f32 %v6141, %v6292
  %6301 = vst.msk [vmem:[%s8] sm:$0xff] %vm5906, %v6293
  %6302 = vst.msk [vmem:[%s8 + $0x8] sm:$0xff] %vm5906, %v6294
  %6303 = vst.msk [vmem:[%s8 + $0x10] sm:$0xff] %vm5906, %v6295
  %6304 = vst.msk [vmem:[%s8 + $0x18] sm:$0xff] %vm5906, %v6296
  %6305 = vst.msk [vmem:[%s8 + $0x20] sm:$0xff] %vm5906, %v6297
  %6306 = vst.msk [vmem:[%s8 + $0x28] sm:$0xff] %vm5906, %v6298
  %6307 = vst.msk [vmem:[%s8 + $0x30] sm:$0xff] %vm5906, %v6299
  %6308 = vst.msk [vmem:[%s8 + $0x38] sm:$0xff] %vm5906, %v6300
  // Predicated region
  $region34: #{tpu_custom_call.1} parent=0 // pred_check
    _
  $region35: #{tpu_custom_call.1} parent=0 // pred_check_branch
    %6310 = sbr.rel (0) target = $region37
  $region36: #{tpu_custom_call.1} parent=0 // pred_region
    _
  $region37: #{tpu_custom_call.1} parent=0 // pred_fallthru
    _
  // Predicated region
  $region38: #{tpu_custom_call.1} parent=0 // pred_check
    _
  $region39: #{tpu_custom_call.1} parent=0 // pred_check_branch
    %6312 = sbr.rel (0) target = $region41
  $region40: #{tpu_custom_call.1} parent=0 // pred_region
    _
  $region41: #{tpu_custom_call.1} parent=0 // pred_fallthru
    _

</llo_original>
